<compile_context>
chip_gen: v5e
topology: v5e:2x2
jax: 0.10.0
libtpu: 0.0.40
codegen_flags: <defaults>
</compile_context>

<pallas_src>
import functools

import numpy as np
import jax
import jax.numpy as jnp
from jax import lax
from jax.experimental import pallas as pl
from jax.experimental.pallas import tpu as pltpu

EPS = 1e-5
_VMEM_LIMIT = 32 * 1024 * 1024  # explicit budget; safe on v5e/v6e/v7x


# --------------------------- Pallas kernels --------------------------------

def _conv_bn_act_stats_kernel(x_ref, amask_ref, smask_ref, scale_ref, shift_ref,
                              w_ref, y_ref, sum_ref, sq_ref,
                              *, tap_offsets, m_anchor, apply_act, compute_dtype):
    """Fused per-image kernel.

    x_ref     : (1, P, Cin)    zero-padded, pixel-flattened RAW feature map
    amask_ref : (P, 1)         1.0 on interior pixels, 0.0 on the zero-pad ring
    smask_ref : (M_a, 1)       1.0 on anchors that are valid strided outputs
    scale_ref : (1, Cin)       previous layer's folded BN scale
    shift_ref : (1, Cin)       previous layer's folded BN shift
    w_ref     : (9, Cin, Cout) conv weights, tap-major
    y_ref     : (1, M_a, Cout) raw full-resolution conv output (junk cols incl.)
    sum_ref   : (1, 1, Cout)   per-image sum of valid outputs        (f32)
    sq_ref    : (1, 1, Cout)   per-image sum of squares of valid outs (f32)
    """
    scale = scale_ref[...].astype(jnp.float32)
    shift = shift_ref[...].astype(jnp.float32)

    cout = w_ref.shape[-1]
    acc = jnp.zeros((m_anchor, cout), jnp.float32)

    # Nine shifted contiguous slices of the resident tile -> nine MXU matmuls.
    for t, off in enumerate(tap_offsets):
        xs = x_ref[0, off:off + m_anchor, :].astype(jnp.float32)
        if apply_act:
            # Previous layer's BN + ReLU fused into the load; re-zero the pad
            # ring (relu(shift) would otherwise leak into the border).
            xs = jnp.maximum(xs * scale + shift, 0.0)
            xs = xs * amask_ref[off:off + m_anchor, :]
        acc = acc + jnp.dot(xs.astype(compute_dtype),
                            w_ref[t].astype(compute_dtype),
                            preferred_element_type=jnp.float32)

    y_ref[0] = acc.astype(y_ref.dtype)

    # BN statistics over the *valid, strided* output positions only.
    ym = acc * smask_ref[...]
    sum_ref[0] = jnp.sum(ym, axis=0, keepdims=True)
    sq_ref[0] = jnp.sum(ym * acc, axis=0, keepdims=True)


def _bn_relu_kernel(y_ref, scale_ref, shift_ref, o_ref):
    """Fused batch-norm affine + ReLU on a lane-dense view."""
    o_ref[...] = jnp.maximum(
        y_ref[...].astype(jnp.float32) * scale_ref[...] + shift_ref[...], 0.0
    ).astype(o_ref.dtype)


# ------------------------------ wrappers ------------------------------------

def conv_bn_act_stats(x_raw, scale, shift, w_hwio, stride, *, apply_act,
                      compute_dtype):
    """One conv layer (+ fused previous-layer BN/ReLU) + BN statistics.

    x_raw : (N, H, W, Cin)  raw (pre-BN/ReLU if apply_act) feature map.
    Returns (y_valid (N, OH, OW, Cout) raw conv output, mean (Cout,), var (Cout,)).
    """
    n, h, w_sp, cin = x_raw.shape
    cout = w_hwio.shape[-1]
    wp = w_sp + 2
    p = (h + 2) * wp                      # padded pixels per image
    m_anchor = (h - 1) * wp + w_sp        # full-res output anchors per image
    oh = (h - 1) // stride + 1
    ow = (w_sp - 1) // stride + 1

    # Pad + pixel-flatten (cheap XLA glue, ~1.1x the feature map; NOT im2col).
    xpad = jnp.pad(x_raw, ((0, 0), (1, 1), (1, 1), (0, 0)))
    xflat = xpad.reshape(n, p, cin).astype(compute_dtype)

    # Static host-side masks (avoid integer div/mod inside the kernel).
    ii = np.arange(h + 2).reshape(-1, 1)
    jj = np.arange(wp).reshape(1, -1)
    interior = ((ii >= 1) & (ii <= h) & (jj >= 1) & (jj <= w_sp))
    amask = jnp.asarray(interior.astype(np.float32).reshape(p, 1))

    ia = np.arange(h).reshape(-1, 1)
    ja = np.arange(wp).reshape(1, -1)
    valid = (ja < w_sp) & (ia % stride == 0) & (ja % stride == 0)
    smask = jnp.asarray(valid.astype(np.float32).reshape(h * wp, 1)[:m_anchor])

    w_mat = w_hwio.reshape(9, cin, cout).astype(compute_dtype)
    tap_offsets = tuple(ky * wp + kx for ky in range(3) for kx in range(3))

    kernel = functools.partial(
        _conv_bn_act_stats_kernel,
        tap_offsets=tap_offsets, m_anchor=m_anchor,
        apply_act=apply_act, compute_dtype=compute_dtype)

    y_full, psum, psq = pl.pallas_call(
        kernel,
        out_shape=(
            jax.ShapeDtypeStruct((n, m_anchor, cout), compute_dtype),
            jax.ShapeDtypeStruct((n, 1, cout), jnp.float32),
            jax.ShapeDtypeStruct((n, 1, cout), jnp.float32),
        ),
        grid=(n,),
        in_specs=[
            pl.BlockSpec((1, p, cin), lambda i: (i, 0, 0)),
            pl.BlockSpec((p, 1), lambda i: (0, 0)),
            pl.BlockSpec((m_anchor, 1), lambda i: (0, 0)),
            pl.BlockSpec((1, cin), lambda i: (0, 0)),
            pl.BlockSpec((1, cin), lambda i: (0, 0)),
            pl.BlockSpec((9, cin, cout), lambda i: (0, 0, 0)),
        ],
        out_specs=(
            pl.BlockSpec((1, m_anchor, cout), lambda i: (i, 0, 0)),
            pl.BlockSpec((1, 1, cout), lambda i: (i, 0, 0)),
            pl.BlockSpec((1, 1, cout), lambda i: (i, 0, 0)),
        ),
        compiler_params=pltpu.CompilerParams(
            dimension_semantics=("parallel",),   # per-image partials -> race-free
            vmem_limit_bytes=_VMEM_LIMIT),
    )(xflat, amask, smask,
      scale.reshape(1, cin).astype(jnp.float32),
      shift.reshape(1, cin).astype(jnp.float32),
      w_mat)

    # Extract the valid / strided output positions (pure data movement in XLA).
    y_rows = jnp.pad(y_full, ((0, 0), (0, h * wp - m_anchor), (0, 0)))
    y_grid = y_rows.reshape(n, h, wp, cout)
    y_valid = y_grid[:, ::stride, :w_sp:stride, :]       # (N, OH, OW, Cout)

    count = n * oh * ow
    total = jnp.sum(psum, axis=0).reshape(cout)
    total_sq = jnp.sum(psq, axis=0).reshape(cout)
    mean = total / count
    # E[y^2] - mean^2 with f32 accumulation; fine at these scales (a Welford
    # style per-tile combine would be preferable for very large M).
    var = total_sq / count - mean * mean
    return y_valid, mean, var


def bn_relu(y_raw, gamma, beta, mean, var):
    """Final-layer fused normalize+affine+ReLU, lane-dense when possible."""
    n, oh, ow, c = y_raw.shape
    scale = gamma / jnp.sqrt(var + EPS)
    shift = beta - mean * scale

    m_total = n * oh * ow * c
    if m_total % 128 == 0 and 128 % c == 0:
        # Lane-dense view: full-width 128-lane stores, no vst.msk.
        rep = 128 // c
        y2 = y_raw.reshape(m_total // 128, 128)
        s2 = jnp.tile(scale, rep).reshape(1, 128)
        b2 = jnp.tile(shift, rep).reshape(1, 128)
        lanes = 128
    else:
        y2 = y_raw.reshape(n * oh * ow, c)
        s2 = scale.reshape(1, c)
        b2 = shift.reshape(1, c)
        lanes = c

    m = y2.shape[0]
    tm = m if m <= 1024 else 1024          # big tiles amortize per-step overhead
    pad = (-m) % tm
    if pad:
        y2 = jnp.pad(y2, ((0, pad), (0, 0)))
    mp = y2.shape[0]

    out = pl.pallas_call(
        _bn_relu_kernel,
        out_shape=jax.ShapeDtypeStruct((mp, lanes), jnp.float32),
        grid=(mp // tm,),
        in_specs=[
            pl.BlockSpec((tm, lanes), lambda i: (i, 0)),
            pl.BlockSpec((1, lanes), lambda i: (0, 0)),
            pl.BlockSpec((1, lanes), lambda i: (0, 0)),
        ],
        out_specs=pl.BlockSpec((tm, lanes), lambda i: (i, 0)),
        compiler_params=pltpu.CompilerParams(
            dimension_semantics=("parallel",),
            vmem_limit_bytes=_VMEM_LIMIT),
    )(y2, s2, b2)
    return out[:m].reshape(n, oh, ow, c)


def block_forward(x_nchw, conv_weights, gammas, betas, strides,
                  compute_dtype=jnp.float32):
    """conv_weights[k] has HWIO layout (3, 3, Cin, Cout). Returns NCHW f32."""
    x = jnp.transpose(x_nchw, (0, 2, 3, 1)).astype(jnp.float32)  # NHWC

    cin0 = x.shape[-1]
    scale = jnp.ones((cin0,), jnp.float32)     # layer 0: identity pre-activation
    shift = jnp.zeros((cin0,), jnp.float32)
    apply_act = False

    y_raw = mean = var = None
    for w, gamma, beta, stride in zip(conv_weights, gammas, betas, strides):
        y_raw, mean, var = conv_bn_act_stats(
            x, scale, shift, w, stride,
            apply_act=apply_act, compute_dtype=compute_dtype)
        # Fold this layer's BN+ReLU into the *next* conv's input load.
        scale = gamma / jnp.sqrt(var + EPS)
        shift = beta - mean * scale
        x = y_raw                               # raw conv output; act deferred
        apply_act = True

    # Last layer's BN+ReLU: single fused lane-dense pass.
    out = bn_relu(y_raw, gammas[-1], betas[-1], mean, var)
    return jnp.transpose(out, (0, 3, 1, 2))     # back to NCHW


# ------------------------- pure-JAX reference --------------------------------

def reference_forward(x_nchw, conv_weights, gammas, betas, strides):
    x = jnp.transpose(x_nchw, (0, 2, 3, 1)).astype(jnp.float32)
    for w, gamma, beta, stride in zip(conv_weights, gammas, betas, strides):
        y = lax.conv_general_dilated(
            x, w, window_strides=(stride, stride),
            padding=((1, 1), (1, 1)),
            dimension_numbers=("NHWC", "HWIO", "NHWC"))
        mean = jnp.mean(y, axis=(0, 1, 2))
        var = jnp.mean((y - mean) ** 2, axis=(0, 1, 2))
        y = (y - mean) / jnp.sqrt(var + EPS) * gamma + beta
        x = jnp.maximum(y, 0.0)
    return jnp.transpose(x, (0, 3, 1, 2))


# --------------------------------- main --------------------------------------

if __name__ == "__main__":
    # Block(s_in=1, s=2, l=2, f_in=4, f=8): stride 2 on first conv, 1 after.
    s_in, s, l, f_in, f = 1, 2, 2, 4, 8
    strides = [int(s / s_in) if k == 0 else 1 for k in range(l)]

    key = jax.random.PRNGKey(0)
    conv_weights, gammas, betas = [], [], []
    cin = f_in
    for k in range(l):
        key, kw, kg, kb = jax.random.split(key, 4)
        conv_weights.append(0.1 * jax.random.normal(kw, (3, 3, cin, f),
                                                    dtype=jnp.float32))
        gammas.append(1.0 + 0.1 * jax.random.normal(kg, (f,), dtype=jnp.float32))
        betas.append(0.1 * jax.random.normal(kb, (f,), dtype=jnp.float32))
        cin = f

    key, kx = jax.random.split(key)
    x = jax.random.normal(kx, (2, f_in, 16, 16), dtype=jnp.float32)  # NCHW

    ref = jax.block_until_ready(
        reference_forward(x, conv_weights, gammas, betas, strides))

    # f32 compute path: strict correctness check.
    out = jax.block_until_ready(
        block_forward(x, conv_weights, gammas, betas, strides,
                      compute_dtype=jnp.float32))
    assert out.shape == (2, f, 8, 8), out.shape
    assert jnp.allclose(out, ref, atol=1e-3, rtol=1e-3), (
        float(jnp.max(jnp.abs(out - ref))))

    # bf16 compute path (halved HBM traffic for activations/weights): loose
    # sanity check only — bf16 operand rounding dominates the difference.
    out_bf16 = jax.block_until_ready(
        block_forward(x, conv_weights, gammas, betas, strides,
                      compute_dtype=jnp.bfloat16))
    assert out_bf16.shape == (2, f, 8, 8), out_bf16.shape
    assert bool(jnp.all(jnp.isfinite(out_bf16)))
    assert float(jnp.max(jnp.abs(out_bf16 - ref))) < 0.25

    print("KERNEL_OK")
</pallas_src>

<mosaic_0001>
module attributes {stable_mosaic.version = 11 : i64} {
  func.func @_conv_bn_act_stats_kernel(%arg0: i32, %arg1: memref<1x324x4xf32, #tpu.memory_space<vmem>>, %arg2: memref<324x1xf32, #tpu.memory_space<vmem>>, %arg3: memref<286x1xf32, #tpu.memory_space<vmem>>, %arg4: memref<1x4xf32, #tpu.memory_space<vmem>>, %arg5: memref<1x4xf32, #tpu.memory_space<vmem>>, %arg6: memref<9x4x8xf32, #tpu.memory_space<vmem>>, %arg7: memref<1x286x8xf32, #tpu.memory_space<vmem>>, %arg8: memref<1x1x8xf32, #tpu.memory_space<vmem>>, %arg9: memref<1x1x8xf32, #tpu.memory_space<vmem>>) attributes {dimension_semantics = [#tpu.dimension_semantics<parallel>], iteration_bounds = array<i64: 2>, scalar_prefetch = 0 : i64, scratch_operands = 0 : i64, tpu.core_type = #tpu.core_type<tc>, window_params = [{transform_indices = @transform_0, window_bounds = array<i64: 1, 324, 4>}, {pipeline_mode = #tpu.pipeline_mode<synchronous>, transform_indices = @transform_1, window_bounds = array<i64: 324, 1>}, {pipeline_mode = #tpu.pipeline_mode<synchronous>, transform_indices = @transform_2, window_bounds = array<i64: 286, 1>}, {pipeline_mode = #tpu.pipeline_mode<synchronous>, transform_indices = @transform_3, window_bounds = array<i64: 1, 4>}, {pipeline_mode = #tpu.pipeline_mode<synchronous>, transform_indices = @transform_4, window_bounds = array<i64: 1, 4>}, {pipeline_mode = #tpu.pipeline_mode<synchronous>, transform_indices = @transform_5, window_bounds = array<i64: 9, 4, 8>}, {transform_indices = @transform_6, window_bounds = array<i64: 1, 286, 8>}, {transform_indices = @transform_7, window_bounds = array<i64: 1, 1, 8>}, {transform_indices = @transform_8, window_bounds = array<i64: 1, 1, 8>}]} {
    %cst = arith.constant 0.000000e+00 : f32
    %0 = vector.broadcast %cst : f32 to vector<286x8xf32>
    %c0 = arith.constant 0 : index
    %c0_0 = arith.constant 0 : index
    %c0_1 = arith.constant 0 : index
    %1 = vector.load %arg1[%c0, %c0_0, %c0_1] : memref<1x324x4xf32, #tpu.memory_space<vmem>>, vector<1x286x4xf32>
    %2 = vector.shape_cast %1 : vector<1x286x4xf32> to vector<286x4xf32>
    %c0_2 = arith.constant 0 : index
    %c0_3 = arith.constant 0 : index
    %c0_4 = arith.constant 0 : index
    %3 = vector.load %arg6[%c0_2, %c0_3, %c0_4] : memref<9x4x8xf32, #tpu.memory_space<vmem>>, vector<1x4x8xf32>
    %4 = vector.shape_cast %3 : vector<1x4x8xf32> to vector<4x8xf32>
    %cst_5 = arith.constant dense<0.000000e+00> : vector<286x8xf32>
    %5 = tpu.matmul %2, %4, %cst_5 {dimension_numbers = #tpu.dot_dimension_numbers<[1], [0], [0], [1], [0, 0, 1, 1], [], []>} : vector<286x4xf32>, vector<4x8xf32>, vector<286x8xf32> -> vector<286x8xf32>
    %6 = arith.addf %0, %5 : vector<286x8xf32>
    %c0_6 = arith.constant 0 : index
    %c1 = arith.constant 1 : index
    %c0_7 = arith.constant 0 : index
    %7 = vector.load %arg1[%c0_6, %c1, %c0_7] : memref<1x324x4xf32, #tpu.memory_space<vmem>>, vector<1x286x4xf32>
    %8 = vector.shape_cast %7 : vector<1x286x4xf32> to vector<286x4xf32>
    %c1_8 = arith.constant 1 : index
    %c0_9 = arith.constant 0 : index
    %c0_10 = arith.constant 0 : index
    %9 = vector.load %arg6[%c1_8, %c0_9, %c0_10] : memref<9x4x8xf32, #tpu.memory_space<vmem>>, vector<1x4x8xf32>
    %10 = vector.shape_cast %9 : vector<1x4x8xf32> to vector<4x8xf32>
    %cst_11 = arith.constant dense<0.000000e+00> : vector<286x8xf32>
    %11 = tpu.matmul %8, %10, %cst_11 {dimension_numbers = #tpu.dot_dimension_numbers<[1], [0], [0], [1], [0, 0, 1, 1], [], []>} : vector<286x4xf32>, vector<4x8xf32>, vector<286x8xf32> -> vector<286x8xf32>
    %12 = arith.addf %6, %11 : vector<286x8xf32>
    %c0_12 = arith.constant 0 : index
    %c2 = arith.constant 2 : index
    %c0_13 = arith.constant 0 : index
    %13 = vector.load %arg1[%c0_12, %c2, %c0_13] : memref<1x324x4xf32, #tpu.memory_space<vmem>>, vector<1x286x4xf32>
    %14 = vector.shape_cast %13 : vector<1x286x4xf32> to vector<286x4xf32>
    %c2_14 = arith.constant 2 : index
    %c0_15 = arith.constant 0 : index
    %c0_16 = arith.constant 0 : index
    %15 = vector.load %arg6[%c2_14, %c0_15, %c0_16] : memref<9x4x8xf32, #tpu.memory_space<vmem>>, vector<1x4x8xf32>
    %16 = vector.shape_cast %15 : vector<1x4x8xf32> to vector<4x8xf32>
    %cst_17 = arith.constant dense<0.000000e+00> : vector<286x8xf32>
    %17 = tpu.matmul %14, %16, %cst_17 {dimension_numbers = #tpu.dot_dimension_numbers<[1], [0], [0], [1], [0, 0, 1, 1], [], []>} : vector<286x4xf32>, vector<4x8xf32>, vector<286x8xf32> -> vector<286x8xf32>
    %18 = arith.addf %12, %17 : vector<286x8xf32>
    %c0_18 = arith.constant 0 : index
    %c18 = arith.constant 18 : index
    %c0_19 = arith.constant 0 : index
    %19 = vector.load %arg1[%c0_18, %c18, %c0_19] : memref<1x324x4xf32, #tpu.memory_space<vmem>>, vector<1x286x4xf32>
    %20 = vector.shape_cast %19 : vector<1x286x4xf32> to vector<286x4xf32>
    %c3 = arith.constant 3 : index
    %c0_20 = arith.constant 0 : index
    %c0_21 = arith.constant 0 : index
    %21 = vector.load %arg6[%c3, %c0_20, %c0_21] : memref<9x4x8xf32, #tpu.memory_space<vmem>>, vector<1x4x8xf32>
    %22 = vector.shape_cast %21 : vector<1x4x8xf32> to vector<4x8xf32>
    %cst_22 = arith.constant dense<0.000000e+00> : vector<286x8xf32>
    %23 = tpu.matmul %20, %22, %cst_22 {dimension_numbers = #tpu.dot_dimension_numbers<[1], [0], [0], [1], [0, 0, 1, 1], [], []>} : vector<286x4xf32>, vector<4x8xf32>, vector<286x8xf32> -> vector<286x8xf32>
    %24 = arith.addf %18, %23 : vector<286x8xf32>
    %c0_23 = arith.constant 0 : index
    %c19 = arith.constant 19 : index
    %c0_24 = arith.constant 0 : index
    %25 = vector.load %arg1[%c0_23, %c19, %c0_24] : memref<1x324x4xf32, #tpu.memory_space<vmem>>, vector<1x286x4xf32>
    %26 = vector.shape_cast %25 : vector<1x286x4xf32> to vector<286x4xf32>
    %c4 = arith.constant 4 : index
    %c0_25 = arith.constant 0 : index
    %c0_26 = arith.constant 0 : index
    %27 = vector.load %arg6[%c4, %c0_25, %c0_26] : memref<9x4x8xf32, #tpu.memory_space<vmem>>, vector<1x4x8xf32>
    %28 = vector.shape_cast %27 : vector<1x4x8xf32> to vector<4x8xf32>
    %cst_27 = arith.constant dense<0.000000e+00> : vector<286x8xf32>
    %29 = tpu.matmul %26, %28, %cst_27 {dimension_numbers = #tpu.dot_dimension_numbers<[1], [0], [0], [1], [0, 0, 1, 1], [], []>} : vector<286x4xf32>, vector<4x8xf32>, vector<286x8xf32> -> vector<286x8xf32>
    %30 = arith.addf %24, %29 : vector<286x8xf32>
    %c0_28 = arith.constant 0 : index
    %c20 = arith.constant 20 : index
    %c0_29 = arith.constant 0 : index
    %31 = vector.load %arg1[%c0_28, %c20, %c0_29] : memref<1x324x4xf32, #tpu.memory_space<vmem>>, vector<1x286x4xf32>
    %32 = vector.shape_cast %31 : vector<1x286x4xf32> to vector<286x4xf32>
    %c5 = arith.constant 5 : index
    %c0_30 = arith.constant 0 : index
    %c0_31 = arith.constant 0 : index
    %33 = vector.load %arg6[%c5, %c0_30, %c0_31] : memref<9x4x8xf32, #tpu.memory_space<vmem>>, vector<1x4x8xf32>
    %34 = vector.shape_cast %33 : vector<1x4x8xf32> to vector<4x8xf32>
    %cst_32 = arith.constant dense<0.000000e+00> : vector<286x8xf32>
    %35 = tpu.matmul %32, %34, %cst_32 {dimension_numbers = #tpu.dot_dimension_numbers<[1], [0], [0], [1], [0, 0, 1, 1], [], []>} : vector<286x4xf32>, vector<4x8xf32>, vector<286x8xf32> -> vector<286x8xf32>
    %36 = arith.addf %30, %35 : vector<286x8xf32>
    %c0_33 = arith.constant 0 : index
    %c36 = arith.constant 36 : index
    %c0_34 = arith.constant 0 : index
    %37 = vector.load %arg1[%c0_33, %c36, %c0_34] : memref<1x324x4xf32, #tpu.memory_space<vmem>>, vector<1x286x4xf32>
    %38 = vector.shape_cast %37 : vector<1x286x4xf32> to vector<286x4xf32>
    %c6 = arith.constant 6 : index
    %c0_35 = arith.constant 0 : index
    %c0_36 = arith.constant 0 : index
    %39 = vector.load %arg6[%c6, %c0_35, %c0_36] : memref<9x4x8xf32, #tpu.memory_space<vmem>>, vector<1x4x8xf32>
    %40 = vector.shape_cast %39 : vector<1x4x8xf32> to vector<4x8xf32>
    %cst_37 = arith.constant dense<0.000000e+00> : vector<286x8xf32>
    %41 = tpu.matmul %38, %40, %cst_37 {dimension_numbers = #tpu.dot_dimension_numbers<[1], [0], [0], [1], [0, 0, 1, 1], [], []>} : vector<286x4xf32>, vector<4x8xf32>, vector<286x8xf32> -> vector<286x8xf32>
    %42 = arith.addf %36, %41 : vector<286x8xf32>
    %c0_38 = arith.constant 0 : index
    %c37 = arith.constant 37 : index
    %c0_39 = arith.constant 0 : index
    %43 = vector.load %arg1[%c0_38, %c37, %c0_39] : memref<1x324x4xf32, #tpu.memory_space<vmem>>, vector<1x286x4xf32>
    %44 = vector.shape_cast %43 : vector<1x286x4xf32> to vector<286x4xf32>
    %c7 = arith.constant 7 : index
    %c0_40 = arith.constant 0 : index
    %c0_41 = arith.constant 0 : index
    %45 = vector.load %arg6[%c7, %c0_40, %c0_41] : memref<9x4x8xf32, #tpu.memory_space<vmem>>, vector<1x4x8xf32>
    %46 = vector.shape_cast %45 : vector<1x4x8xf32> to vector<4x8xf32>
    %cst_42 = arith.constant dense<0.000000e+00> : vector<286x8xf32>
    %47 = tpu.matmul %44, %46, %cst_42 {dimension_numbers = #tpu.dot_dimension_numbers<[1], [0], [0], [1], [0, 0, 1, 1], [], []>} : vector<286x4xf32>, vector<4x8xf32>, vector<286x8xf32> -> vector<286x8xf32>
    %48 = arith.addf %42, %47 : vector<286x8xf32>
    %c0_43 = arith.constant 0 : index
    %c38 = arith.constant 38 : index
    %c0_44 = arith.constant 0 : index
    %49 = vector.load %arg1[%c0_43, %c38, %c0_44] : memref<1x324x4xf32, #tpu.memory_space<vmem>>, vector<1x286x4xf32>
    %50 = vector.shape_cast %49 : vector<1x286x4xf32> to vector<286x4xf32>
    %c8 = arith.constant 8 : index
    %c0_45 = arith.constant 0 : index
    %c0_46 = arith.constant 0 : index
    %51 = vector.load %arg6[%c8, %c0_45, %c0_46] : memref<9x4x8xf32, #tpu.memory_space<vmem>>, vector<1x4x8xf32>
    %52 = vector.shape_cast %51 : vector<1x4x8xf32> to vector<4x8xf32>
    %cst_47 = arith.constant dense<0.000000e+00> : vector<286x8xf32>
    %53 = tpu.matmul %50, %52, %cst_47 {dimension_numbers = #tpu.dot_dimension_numbers<[1], [0], [0], [1], [0, 0, 1, 1], [], []>} : vector<286x4xf32>, vector<4x8xf32>, vector<286x8xf32> -> vector<286x8xf32>
    %54 = arith.addf %48, %53 : vector<286x8xf32>
    %c0_48 = arith.constant 0 : index
    %c0_49 = arith.constant 0 : index
    %c0_50 = arith.constant 0 : index
    %55 = vector.load %arg7[%c0_48, %c0_49, %c0_50] : memref<1x286x8xf32, #tpu.memory_space<vmem>>, vector<1x286x8xf32>
    %56 = vector.shape_cast %55 : vector<1x286x8xf32> to vector<286x8xf32>
    %57 = vector.shape_cast %54 : vector<286x8xf32> to vector<1x286x8xf32>
    tpu.vector_store %arg7[%c0_48, %c0_49, %c0_50], %57 {strides = array<i32>} : memref<1x286x8xf32, #tpu.memory_space<vmem>>, vector<1x286x8xf32>,
    %c0_51 = arith.constant 0 : index
    %c0_52 = arith.constant 0 : index
    %58 = vector.load %arg3[%c0_51, %c0_52] : memref<286x1xf32, #tpu.memory_space<vmem>>, vector<286x1xf32>
    %59 = vector.broadcast %58 : vector<286x1xf32> to vector<286x8xf32>
    %60 = arith.mulf %54, %59 : vector<286x8xf32>
    %cst_53 = arith.constant dense<0.000000e+00> : vector<8xf32>
    %61 = vector.multi_reduction <add>, %60, %cst_53 [0] : vector<286x8xf32> to vector<8xf32>
    %62 = vector.shape_cast %61 : vector<8xf32> to vector<1x8xf32>
    %c0_54 = arith.constant 0 : index
    %c0_55 = arith.constant 0 : index
    %c0_56 = arith.constant 0 : index
    %63 = vector.load %arg8[%c0_54, %c0_55, %c0_56] : memref<1x1x8xf32, #tpu.memory_space<vmem>>, vector<1x1x8xf32>
    %64 = vector.shape_cast %63 : vector<1x1x8xf32> to vector<1x8xf32>
    %65 = vector.shape_cast %62 : vector<1x8xf32> to vector<1x1x8xf32>
    tpu.vector_store %arg8[%c0_54, %c0_55, %c0_56], %65 {strides = array<i32>} : memref<1x1x8xf32, #tpu.memory_space<vmem>>, vector<1x1x8xf32>,
    %66 = arith.mulf %60, %54 : vector<286x8xf32>
    %cst_57 = arith.constant dense<0.000000e+00> : vector<8xf32>
    %67 = vector.multi_reduction <add>, %66, %cst_57 [0] : vector<286x8xf32> to vector<8xf32>
    %68 = vector.shape_cast %67 : vector<8xf32> to vector<1x8xf32>
    %c0_58 = arith.constant 0 : index
    %c0_59 = arith.constant 0 : index
    %c0_60 = arith.constant 0 : index
    %69 = vector.load %arg9[%c0_58, %c0_59, %c0_60] : memref<1x1x8xf32, #tpu.memory_space<vmem>>, vector<1x1x8xf32>
    %70 = vector.shape_cast %69 : vector<1x1x8xf32> to vector<1x8xf32>
    %71 = vector.shape_cast %68 : vector<1x8xf32> to vector<1x1x8xf32>
    tpu.vector_store %arg9[%c0_58, %c0_59, %c0_60], %71 {strides = array<i32>} : memref<1x1x8xf32, #tpu.memory_space<vmem>>, vector<1x1x8xf32>,
    return
  }
  func.func @transform_0(%arg0: i32) -> (i32, i32, i32) {
    %c0_i32 = arith.constant 0 : i32
    %c0_i32_0 = arith.constant 0 : i32
    %c0_i32_1 = arith.constant 0 : i32
    return %arg0, %c0_i32, %c0_i32_0 : i32, i32, i32
  }
  func.func @transform_1(%arg0: i32) -> (i32, i32) {
    %c0_i32 = arith.constant 0 : i32
    %c0_i32_0 = arith.constant 0 : i32
    %c0_i32_1 = arith.constant 0 : i32
    return %c0_i32, %c0_i32_0 : i32, i32
  }
  func.func @transform_2(%arg0: i32) -> (i32, i32) {
    %c0_i32 = arith.constant 0 : i32
    %c0_i32_0 = arith.constant 0 : i32
    %c0_i32_1 = arith.constant 0 : i32
    return %c0_i32, %c0_i32_0 : i32, i32
  }
  func.func @transform_3(%arg0: i32) -> (i32, i32) {
    %c0_i32 = arith.constant 0 : i32
    %c0_i32_0 = arith.constant 0 : i32
    %c0_i32_1 = arith.constant 0 : i32
    return %c0_i32, %c0_i32_0 : i32, i32
  }
  func.func @transform_4(%arg0: i32) -> (i32, i32) {
    %c0_i32 = arith.constant 0 : i32
    %c0_i32_0 = arith.constant 0 : i32
    %c0_i32_1 = arith.constant 0 : i32
    return %c0_i32, %c0_i32_0 : i32, i32
  }
  func.func @transform_5(%arg0: i32) -> (i32, i32, i32) {
    %c0_i32 = arith.constant 0 : i32
    %c0_i32_0 = arith.constant 0 : i32
    %c0_i32_1 = arith.constant 0 : i32
    %c0_i32_2 = arith.constant 0 : i32
    return %c0_i32, %c0_i32_0, %c0_i32_1 : i32, i32, i32
  }
  func.func @transform_6(%arg0: i32) -> (i32, i32, i32) {
    %c0_i32 = arith.constant 0 : i32
    %c0_i32_0 = arith.constant 0 : i32
    %c0_i32_1 = arith.constant 0 : i32
    return %arg0, %c0_i32, %c0_i32_0 : i32, i32, i32
  }
  func.func @transform_7(%arg0: i32) -> (i32, i32, i32) {
    %c0_i32 = arith.constant 0 : i32
    %c0_i32_0 = arith.constant 0 : i32
    %c0_i32_1 = arith.constant 0 : i32
    return %arg0, %c0_i32, %c0_i32_0 : i32, i32, i32
  }
  func.func @transform_8(%arg0: i32) -> (i32, i32, i32) {
    %c0_i32 = arith.constant 0 : i32
    %c0_i32_0 = arith.constant 0 : i32
    %c0_i32_1 = arith.constant 0 : i32
    return %arg0, %c0_i32, %c0_i32_0 : i32, i32, i32
  }
}

</mosaic_0001>

<llo_original>
// kernel: tpu_custom_call.1
$region0: #{tpu_custom_call.1}
  #allocation0 [shape = 'u32[]', space=smem, size = 0x4, offset = 0x4, fixed_abs, tag = 'smem constant byte address 0x4 - core index']
  #allocation1 [shape = 'u32[72,128]{1,0:T(1,128)}', space=vmem, size = 0x9000, scoped, tag = 'internal scratch']
  %s0 = inlined_call_operand.vmem [shape: f32[2,324,4], index: 0, kind: input, shape index: {}]
  %s1 = inlined_call_operand.vmem [shape: f32[324,1], index: 1, kind: input, shape index: {}]
  %s2 = inlined_call_operand.vmem [shape: f32[286,1], index: 2, kind: input, shape index: {}]
  %s3 = inlined_call_operand.vmem [shape: f32[1,4], index: 3, kind: input, shape index: {}]
  %s4 = inlined_call_operand.vmem [shape: f32[1,4], index: 4, kind: input, shape index: {}]
  %s5 = inlined_call_operand.vmem [shape: f32[9,4,8], index: 5, kind: input, shape index: {}]
  %s6 = inlined_call_operand.vmem [shape: f32[2,286,8], index: 6, kind: output, shape index: {0}]
  %s7 = inlined_call_operand.hbm [shape: f32[2,1,8], index: 7, kind: output, shape index: {1}]
  %s8 = inlined_call_operand.hbm [shape: f32[2,1,8], index: 8, kind: output, shape index: {2}]
  %9 = xla_tuple %s6, %s7, %s8
  %s10 = sld [smem:[#allocation0]]
  $region73: #{tpu_custom_call.1} parent=0
    _
  %s12 = ssub.s32 1, %s10
  %s13 = scalar_select 0, %s12, %s10
  $region1: #{tpu_custom_call.1} parent=0
    #allocation2 [shape = 'u8[1024]{0}', space=vmem, size = 0x400, scoped, tag = 'output window, operand 1']
    #allocation3 [shape = 's32[2]{0}', space=sflag, size = 0x8, scoped, tag = 'scoped memory for tpu_custom_call.1']
    #allocation4 [shape = 'u8[1024]{0}', space=vmem, size = 0x400, scoped, tag = 'output window, operand 2']
    #allocation5 [shape = 's32[2]{0}', space=sflag, size = 0x8, scoped, tag = 'scoped memory for tpu_custom_call.1']
    %14 = vsyncpa [#allocation3], 0
    %s15 = scalar_lea.sflag [#allocation3], 1
    %16 = vsyncpa %s15, 0
    %17 = vsyncpa [#allocation5], 0
    %s18 = scalar_lea.sflag [#allocation5], 1
    %19 = vsyncpa %s18, 0
    loop: start=0, step=1, limit=4
    $region2: #{tpu_custom_call.1} parent=1 // loop_pre_header
      _
    $region3: #{tpu_custom_call.1} parent=1 // loop_header
      %s21 = sphi 0, %s25
      %p22 = scmp.ge.s32.totalorder %s21, 4
      %s31 = sphi 0, %s33
      %s34 = sphi 0, %s31
      %s35 = sphi 0, %s34
      %s51 = sphi 0, %s35
      %s55 = sphi 0, %s55
      %s57 = sphi 0, %s55
      %s58 = sphi 0, %s57
      %s72 = sphi 0, %s58
      %s76 = sphi 0, %s76
      %s78 = sphi 0, %s76
      %s79 = sphi 0, %s78
      %s93 = sphi 0, %s79
      %s97 = sphi 0, %s97
      %s99 = sphi 0, %s97
      %s100 = sphi 0, %s99
      %s114 = sphi 0, %s100
      %s118 = sphi 0, %s118
      %s120 = sphi 0, %s118
      %s121 = sphi 0, %s120
      %s135 = sphi 0, %s121
      %s139 = sphi 0, %s139
      %s141 = sphi 0, %s139
      %s142 = sphi 0, %s141
      %s156 = sphi 0, %s142
      %s162 = sphi 0, %s164
      %s165 = sphi 0, %s162
      %s166 = sphi 0, %s165
      %s182 = sphi 0, %s166
      %s188 = sphi 0, %s190
      %s191 = sphi 0, %s188
      %s192 = sphi 0, %s191
      %s208 = sphi 0, %s192
      %s214 = sphi 0, %s216
      %s217 = sphi 0, %s214
      %s218 = sphi 0, %s217
      %s234 = sphi 0, %s218
    $region4: #{tpu_custom_call.1} parent=1 // loop_header_branch
      %24 = sbr.rel (%p22) target = $region8
    $region5: #{tpu_custom_call.1} parent=1 // loop_body
      %s26 = ssub.s32 %s21, 1
      %s27 = ssub.s32 %s21, 2
      %s28 = sadd.s32 %s21, 1
      %s29 = ssub.s32 %s21, %s28
      %p30 = scmp.eq.s32.totalorder %s29, 0
      %s32 = sadd.s32 %s31, 1
      %s33 = scalar_select %p30, %s31, %s32
      %p36 = pneg %p30
      %p37 = scmp.eq.s32.totalorder %s21, 1
      %p38 = por %p36, %p37
      %p39 = scmp.ne.s32.totalorder %s31, %s34
      %p40 = scmp.eq.s32.totalorder %s21, 0
      %p41 = por %p39, %p40
      %p42 = scmp.ne.s32.totalorder %s31, %s34
      %p43 = scmp.eq.s32.totalorder %s26, 1
      %p44 = por %p42, %p43
      %p45 = scmp.ne.s32.totalorder %s34, %s35
      %p46 = scmp.eq.s32.totalorder %s26, 0
      %p47 = por %p45, %p46
      %p48 = scmp.ne.s32.totalorder %s34, %s35
      %p49 = scmp.eq.s32.totalorder %s27, 1
      %p50 = por %p48, %p49
      %p52 = scmp.ne.s32.totalorder %s35, %s51
      %p53 = scmp.eq.s32.totalorder %s27, 0
      %p54 = por %p52, %p53
      %s56 = sadd.s32 %s55, 1
      %p59 = scmp.eq.s32.totalorder %s21, 1
      %p60 = scmp.ne.s32.totalorder %s55, %s57
      %p61 = scmp.eq.s32.totalorder %s21, 0
      %p62 = por %p60, %p61
      %p63 = scmp.ne.s32.totalorder %s55, %s57
      %p64 = scmp.eq.s32.totalorder %s26, 1
      %p65 = por %p63, %p64
      %p66 = scmp.ne.s32.totalorder %s57, %s58
      %p67 = scmp.eq.s32.totalorder %s26, 0
      %p68 = por %p66, %p67
      %p69 = scmp.ne.s32.totalorder %s57, %s58
      %p70 = scmp.eq.s32.totalorder %s27, 1
      %p71 = por %p69, %p70
      %p73 = scmp.ne.s32.totalorder %s58, %s72
      %p74 = scmp.eq.s32.totalorder %s27, 0
      %p75 = por %p73, %p74
      %s77 = sadd.s32 %s76, 1
      %p80 = scmp.eq.s32.totalorder %s21, 1
      %p81 = scmp.ne.s32.totalorder %s76, %s78
      %p82 = scmp.eq.s32.totalorder %s21, 0
      %p83 = por %p81, %p82
      %p84 = scmp.ne.s32.totalorder %s76, %s78
      %p85 = scmp.eq.s32.totalorder %s26, 1
      %p86 = por %p84, %p85
      %p87 = scmp.ne.s32.totalorder %s78, %s79
      %p88 = scmp.eq.s32.totalorder %s26, 0
      %p89 = por %p87, %p88
      %p90 = scmp.ne.s32.totalorder %s78, %s79
      %p91 = scmp.eq.s32.totalorder %s27, 1
      %p92 = por %p90, %p91
      %p94 = scmp.ne.s32.totalorder %s79, %s93
      %p95 = scmp.eq.s32.totalorder %s27, 0
      %p96 = por %p94, %p95
      %s98 = sadd.s32 %s97, 1
      %p101 = scmp.eq.s32.totalorder %s21, 1
      %p102 = scmp.ne.s32.totalorder %s97, %s99
      %p103 = scmp.eq.s32.totalorder %s21, 0
      %p104 = por %p102, %p103
      %p105 = scmp.ne.s32.totalorder %s97, %s99
      %p106 = scmp.eq.s32.totalorder %s26, 1
      %p107 = por %p105, %p106
      %p108 = scmp.ne.s32.totalorder %s99, %s100
      %p109 = scmp.eq.s32.totalorder %s26, 0
      %p110 = por %p108, %p109
      %p111 = scmp.ne.s32.totalorder %s99, %s100
      %p112 = scmp.eq.s32.totalorder %s27, 1
      %p113 = por %p111, %p112
      %p115 = scmp.ne.s32.totalorder %s100, %s114
      %p116 = scmp.eq.s32.totalorder %s27, 0
      %p117 = por %p115, %p116
      %s119 = sadd.s32 %s118, 1
      %p122 = scmp.eq.s32.totalorder %s21, 1
      %p123 = scmp.ne.s32.totalorder %s118, %s120
      %p124 = scmp.eq.s32.totalorder %s21, 0
      %p125 = por %p123, %p124
      %p126 = scmp.ne.s32.totalorder %s118, %s120
      %p127 = scmp.eq.s32.totalorder %s26, 1
      %p128 = por %p126, %p127
      %p129 = scmp.ne.s32.totalorder %s120, %s121
      %p130 = scmp.eq.s32.totalorder %s26, 0
      %p131 = por %p129, %p130
      %p132 = scmp.ne.s32.totalorder %s120, %s121
      %p133 = scmp.eq.s32.totalorder %s27, 1
      %p134 = por %p132, %p133
      %p136 = scmp.ne.s32.totalorder %s121, %s135
      %p137 = scmp.eq.s32.totalorder %s27, 0
      %p138 = por %p136, %p137
      %s140 = sadd.s32 %s139, 1
      %p143 = scmp.eq.s32.totalorder %s21, 1
      %p144 = scmp.ne.s32.totalorder %s139, %s141
      %p145 = scmp.eq.s32.totalorder %s21, 0
      %p146 = por %p144, %p145
      %p147 = scmp.ne.s32.totalorder %s139, %s141
      %p148 = scmp.eq.s32.totalorder %s26, 1
      %p149 = por %p147, %p148
      %p150 = scmp.ne.s32.totalorder %s141, %s142
      %p151 = scmp.eq.s32.totalorder %s26, 0
      %p152 = por %p150, %p151
      %p153 = scmp.ne.s32.totalorder %s141, %s142
      %p154 = scmp.eq.s32.totalorder %s27, 1
      %p155 = por %p153, %p154
      %p157 = scmp.ne.s32.totalorder %s142, %s156
      %p158 = scmp.eq.s32.totalorder %s27, 0
      %p159 = por %p157, %p158
      %s160 = ssub.s32 %s21, %s28
      %p161 = scmp.eq.s32.totalorder %s160, 0
      %s163 = sadd.s32 %s162, 1
      %s164 = scalar_select %p161, %s162, %s163
      %p167 = pneg %p161
      %p168 = scmp.eq.s32.totalorder %s21, 1
      %p169 = por %p167, %p168
      %p170 = scmp.ne.s32.totalorder %s162, %s165
      %p171 = scmp.eq.s32.totalorder %s21, 0
      %p172 = por %p170, %p171
      %p173 = scmp.ne.s32.totalorder %s162, %s165
      %p174 = scmp.eq.s32.totalorder %s26, 1
      %p175 = por %p173, %p174
      %p176 = scmp.ne.s32.totalorder %s165, %s166
      %p177 = scmp.eq.s32.totalorder %s26, 0
      %p178 = por %p176, %p177
      %p179 = scmp.ne.s32.totalorder %s165, %s166
      %p180 = scmp.eq.s32.totalorder %s27, 1
      %p181 = por %p179, %p180
      %p183 = scmp.ne.s32.totalorder %s166, %s182
      %p184 = scmp.eq.s32.totalorder %s27, 0
      %p185 = por %p183, %p184
      %s186 = ssub.s32 %s21, %s28
      %p187 = scmp.eq.s32.totalorder %s186, 0
      %s189 = sadd.s32 %s188, 1
      %s190 = scalar_select %p187, %s188, %s189
      %p193 = pneg %p187
      %p194 = scmp.eq.s32.totalorder %s21, 1
      %p195 = por %p193, %p194
      %p196 = scmp.ne.s32.totalorder %s188, %s191
      %p197 = scmp.eq.s32.totalorder %s21, 0
      %p198 = por %p196, %p197
      %p199 = scmp.ne.s32.totalorder %s188, %s191
      %p200 = scmp.eq.s32.totalorder %s26, 1
      %p201 = por %p199, %p200
      %p202 = scmp.ne.s32.totalorder %s191, %s192
      %p203 = scmp.eq.s32.totalorder %s26, 0
      %p204 = por %p202, %p203
      %p205 = scmp.ne.s32.totalorder %s191, %s192
      %p206 = scmp.eq.s32.totalorder %s27, 1
      %p207 = por %p205, %p206
      %p209 = scmp.ne.s32.totalorder %s192, %s208
      %p210 = scmp.eq.s32.totalorder %s27, 0
      %p211 = por %p209, %p210
      %s212 = ssub.s32 %s21, %s28
      %p213 = scmp.eq.s32.totalorder %s212, 0
      %s215 = sadd.s32 %s214, 1
      %s216 = scalar_select %p213, %s214, %s215
      %p219 = pneg %p213
      %p220 = scmp.eq.s32.totalorder %s21, 1
      %p221 = por %p219, %p220
      %p222 = scmp.ne.s32.totalorder %s214, %s217
      %p223 = scmp.eq.s32.totalorder %s21, 0
      %p224 = por %p222, %p223
      %p225 = scmp.ne.s32.totalorder %s214, %s217
      %p226 = scmp.eq.s32.totalorder %s26, 1
      %p227 = por %p225, %p226
      %p228 = scmp.ne.s32.totalorder %s217, %s218
      %p229 = scmp.eq.s32.totalorder %s26, 0
      %p230 = por %p228, %p229
      %p231 = scmp.ne.s32.totalorder %s217, %s218
      %p232 = scmp.eq.s32.totalorder %s27, 1
      %p233 = por %p231, %p232
      %p235 = scmp.ne.s32.totalorder %s218, %s234
      %p236 = scmp.eq.s32.totalorder %s27, 0
      %p237 = por %p235, %p236
      %p238 = scmp.le.s32.totalorder 1, %s21
      %p239 = scmp.lt.s32.totalorder %s21, 3
      %p240 = pnand %p238, %p239
      %p241 = pneg %p240
      // Predicated region
      $region9: #{tpu_custom_call.1} parent=5 // pred_check
        _
      $region10: #{tpu_custom_call.1} parent=5 // pred_check_branch
        %243 = sbr.rel (%p240) target = $region12
      $region11: #{tpu_custom_call.1} parent=5 // pred_region
        %s244 = ssub.s32 %s21, 1
        // Predicated region
        $region13: #{tpu_custom_call.1} parent=11 // pred_check
          %p245 = pneg %p68
        $region14: #{tpu_custom_call.1} parent=11 // pred_check_branch
          %247 = sbr.rel (%p245) target = $region16
        $region15: #{tpu_custom_call.1} parent=11 // pred_region
          _
        $region16: #{tpu_custom_call.1} parent=11 // pred_fallthru
          _
        // Predicated region
        $region17: #{tpu_custom_call.1} parent=11 // pred_check
          %p248 = pneg %p89
        $region18: #{tpu_custom_call.1} parent=11 // pred_check_branch
          %250 = sbr.rel (%p248) target = $region20
        $region19: #{tpu_custom_call.1} parent=11 // pred_region
          _
        $region20: #{tpu_custom_call.1} parent=11 // pred_fallthru
          _
        // Predicated region
        $region21: #{tpu_custom_call.1} parent=11 // pred_check
          %p251 = pneg %p110
        $region22: #{tpu_custom_call.1} parent=11 // pred_check_branch
          %253 = sbr.rel (%p251) target = $region24
        $region23: #{tpu_custom_call.1} parent=11 // pred_region
          _
        $region24: #{tpu_custom_call.1} parent=11 // pred_fallthru
          _
        // Predicated region
        $region25: #{tpu_custom_call.1} parent=11 // pred_check
          %p254 = pneg %p131
        $region26: #{tpu_custom_call.1} parent=11 // pred_check_branch
          %256 = sbr.rel (%p254) target = $region28
        $region27: #{tpu_custom_call.1} parent=11 // pred_region
          _
        $region28: #{tpu_custom_call.1} parent=11 // pred_fallthru
          _
        // Predicated region
        $region29: #{tpu_custom_call.1} parent=11 // pred_check
          %p257 = pneg %p152
        $region30: #{tpu_custom_call.1} parent=11 // pred_check_branch
          %259 = sbr.rel (%p257) target = $region32
        $region31: #{tpu_custom_call.1} parent=11 // pred_region
          _
        $region32: #{tpu_custom_call.1} parent=11 // pred_fallthru
          _
      $region12: #{tpu_custom_call.1} parent=5 // pred_fallthru
        _
      %p260 = scmp.lt.s32.totalorder %s21, 2
      // Predicated region
      $region33: #{tpu_custom_call.1} parent=5 // pred_check
        %p261 = pneg %p260
      $region34: #{tpu_custom_call.1} parent=5 // pred_check_branch
        %263 = sbr.rel (%p261) target = $region36
      $region35: #{tpu_custom_call.1} parent=5 // pred_region
        // Predicated region
        $region37: #{tpu_custom_call.1} parent=35 // pred_check
          %p264 = pneg %p41
        $region38: #{tpu_custom_call.1} parent=35 // pred_check_branch
          %266 = sbr.rel (%p264) target = $region40
        $region39: #{tpu_custom_call.1} parent=35 // pred_region
          %p267 = scmp.lt.s32.totalorder %s21, 1
          %s268 = scalar_select %p267, %s21, 1
          %s269 = smul.addr %s268, 41
          %s270 = smul.addr %s269, 8
          %s271 = scalar_lea.vmem %s0, %s270
        $region40: #{tpu_custom_call.1} parent=35 // pred_fallthru
          _
      $region36: #{tpu_custom_call.1} parent=5 // pred_fallthru
        _
      %p272 = scmp.le.s32.totalorder 1, %s21
      %p273 = scmp.lt.s32.totalorder %s21, 3
      %p274 = pnand %p272, %p273
      %p275 = pneg %p274
      // Predicated region
      $region41: #{tpu_custom_call.1} parent=5 // pred_check
        _
      $region42: #{tpu_custom_call.1} parent=5 // pred_check_branch
        %277 = sbr.rel (%p274) target = $region44
      $region43: #{tpu_custom_call.1} parent=5 // pred_region
        %s278 = ssub.s32 %s21, 1
        %p279 = scmp.lt.s32.totalorder %s26, 1
        %s280 = scalar_select %p279, %s26, 1
        %s281 = smul.addr %s280, 41
        %s282 = smul.addr %s281, 8
        %s283 = scalar_lea.vmem %s0, %s282
        %p284 = pneg %p47
        %p285 = pneg %p44
        %p286 = pneg %p68
        %p287 = pneg %p65
        %p288 = pneg %p89
        %p289 = pneg %p86
        %p290 = pneg %p110
        %p291 = pneg %p107
        %p292 = pneg %p131
        %p293 = pneg %p128
        %p294 = pneg %p152
        %p295 = pneg %p149
        %p296 = pneg %p178
        %p297 = pneg %p175
        %p298 = scmp.lt.s32.totalorder %s26, 1
        %s299 = scalar_select %p298, %s26, 1
        %s300 = smul.addr %s299, 36
        %s301 = smul.addr %s300, 8
        %s302 = scalar_lea.vmem %s6, %s301
        %p303 = pneg %p204
        %p304 = pneg %p201
        %s305 = sand.u32 %s191, 1
        %s306 = scalar_lea.sflag [#allocation3], %s305
        %s307 = sand.u32 %s191, 1
        %s308 = scalar_lea.vmem [#allocation2], %s307
        %p309 = pneg %p230
        %p310 = pneg %p227
        %s311 = sand.u32 %s217, 1
        %s312 = scalar_lea.sflag [#allocation5], %s311
        %s313 = sand.u32 %s217, 1
        %s314 = scalar_lea.vmem [#allocation4], %s313
        %p315 = scmp.lt.s32.totalorder %s26, 1
        %s316 = scalar_select %p315, %s26, 1
        %s317 = smul.addr %s316, 41
        %s318 = smul.addr %s317, 8
        %s319 = scalar_lea.vmem %s0, %s318
        %p320 = scmp.lt.s32.totalorder %s26, 1
        %s321 = scalar_select %p320, %s26, 1
        %s322 = smul.addr %s321, 36
        %s323 = smul.addr %s322, 8
        %s324 = scalar_lea.vmem %s6, %s323
        %v325 = vld [vmem:[%s319] sm:$0xff]
        %v326 = vld [vmem:[%s319 + $0x8] sm:$0xff]
        %v327 = vld [vmem:[%s319 + $0x10] sm:$0xff]
        %v328 = vld [vmem:[%s319 + $0x18] sm:$0xff]
        %v329 = vld [vmem:[%s319 + $0x20] sm:$0xff]
        %v330 = vld [vmem:[%s319 + $0x28] sm:$0xff]
        %v331 = vld [vmem:[%s319 + $0x30] sm:$0xff]
        %v332 = vld [vmem:[%s319 + $0x38] sm:$0xff]
        %v333 = vld [vmem:[%s319 + $0x40] sm:$0xff]
        %v334 = vld [vmem:[%s319 + $0x48] sm:$0xff]
        %v335 = vld [vmem:[%s319 + $0x50] sm:$0xff]
        %v336 = vld [vmem:[%s319 + $0x58] sm:$0xff]
        %v337 = vld [vmem:[%s319 + $0x60] sm:$0xff]
        %v338 = vld [vmem:[%s319 + $0x68] sm:$0xff]
        %v339 = vld [vmem:[%s319 + $0x70] sm:$0xff]
        %v340 = vld [vmem:[%s319 + $0x78] sm:$0xff]
        %v341 = vld [vmem:[%s319 + $0x80] sm:$0xff]
        %v342 = vld [vmem:[%s319 + $0x88] sm:$0xff]
        %v343 = vld [vmem:[%s319 + $0x90] sm:$0xff]
        %v344 = vld [vmem:[%s319 + $0x98] sm:$0xff]
        %v345 = vld [vmem:[%s319 + $0xa0] sm:$0xff]
        %v346 = vld [vmem:[%s319 + $0xa8] sm:$0xff]
        %v347 = vld [vmem:[%s319 + $0xb0] sm:$0xff]
        %v348 = vld [vmem:[%s319 + $0xb8] sm:$0xff]
        %v349 = vld [vmem:[%s319 + $0xc0] sm:$0xff]
        %v350 = vld [vmem:[%s319 + $0xc8] sm:$0xff]
        %v351 = vld [vmem:[%s319 + $0xd0] sm:$0xff]
        %v352 = vld [vmem:[%s319 + $0xd8] sm:$0xff]
        %v353 = vld [vmem:[%s319 + $0xe0] sm:$0xff]
        %v354 = vld [vmem:[%s319 + $0xe8] sm:$0xff]
        %v355 = vld [vmem:[%s319 + $0xf0] sm:$0xff]
        %v356 = vld [vmem:[%s319 + $0xf8] sm:$0xff]
        %v357 = vld [vmem:[%s319 + $0x100] sm:$0xff]
        %v358 = vld [vmem:[%s319 + $0x108] sm:$0xff]
        %v359 = vld [vmem:[%s319 + $0x110] sm:$0xff]
        %v360 = vld [vmem:[%s319 + $0x118] sm:$0x3f]
        %v361 = vld [vmem:[%s5] sm:$0xf]
        %v362 = vld [vmem:[%s319 + $0x1] sm:$0xff]
        %v363 = vld [vmem:[%s319 + $0x9] sm:$0xff]
        %v364 = vld [vmem:[%s319 + $0x11] sm:$0xff]
        %v365 = vld [vmem:[%s319 + $0x19] sm:$0xff]
        %v366 = vld [vmem:[%s319 + $0x21] sm:$0xff]
        %v367 = vld [vmem:[%s319 + $0x29] sm:$0xff]
        %v368 = vld [vmem:[%s319 + $0x31] sm:$0xff]
        %v369 = vld [vmem:[%s319 + $0x39] sm:$0xff]
        %v370 = vld [vmem:[%s319 + $0x41] sm:$0xff]
        %v371 = vld [vmem:[%s319 + $0x49] sm:$0xff]
        %v372 = vld [vmem:[%s319 + $0x51] sm:$0xff]
        %v373 = vld [vmem:[%s319 + $0x59] sm:$0xff]
        %v374 = vld [vmem:[%s319 + $0x61] sm:$0xff]
        %v375 = vld [vmem:[%s319 + $0x69] sm:$0xff]
        %v376 = vld [vmem:[%s319 + $0x71] sm:$0xff]
        %v377 = vld [vmem:[%s319 + $0x79] sm:$0xff]
        %v378 = vld [vmem:[%s319 + $0x81] sm:$0xff]
        %v379 = vld [vmem:[%s319 + $0x89] sm:$0xff]
        %v380 = vld [vmem:[%s319 + $0x91] sm:$0xff]
        %v381 = vld [vmem:[%s319 + $0x99] sm:$0xff]
        %v382 = vld [vmem:[%s319 + $0xa1] sm:$0xff]
        %v383 = vld [vmem:[%s319 + $0xa9] sm:$0xff]
        %v384 = vld [vmem:[%s319 + $0xb1] sm:$0xff]
        %v385 = vld [vmem:[%s319 + $0xb9] sm:$0xff]
        %v386 = vld [vmem:[%s319 + $0xc1] sm:$0xff]
        %v387 = vld [vmem:[%s319 + $0xc9] sm:$0xff]
        %v388 = vld [vmem:[%s319 + $0xd1] sm:$0xff]
        %v389 = vld [vmem:[%s319 + $0xd9] sm:$0xff]
        %v390 = vld [vmem:[%s319 + $0xe1] sm:$0xff]
        %v391 = vld [vmem:[%s319 + $0xe9] sm:$0xff]
        %v392 = vld [vmem:[%s319 + $0xf1] sm:$0xff]
        %v393 = vld [vmem:[%s319 + $0xf9] sm:$0xff]
        %v394 = vld [vmem:[%s319 + $0x101] sm:$0xff]
        %v395 = vld [vmem:[%s319 + $0x109] sm:$0xff]
        %v396 = vld [vmem:[%s319 + $0x111] sm:$0xff]
        %v397 = vld [vmem:[%s319 + $0x119] sm:$0x3f]
        %s398 = scalar_lea.vmem %s5, 4
        %v399 = vld [vmem:[%s398] sm:$0xf]
        %vm400 = vcmask 31744
        %v402 = vsel %vm400, %v362, 0
        %v405 = vsel %vm400, %v363, 0
        %v408 = vsel %vm400, %v364, 0
        %v411 = vsel %vm400, %v365, 0
        %v414 = vsel %vm400, %v366, 0
        %v417 = vsel %vm400, %v367, 0
        %v420 = vsel %vm400, %v368, 0
        %v423 = vsel %vm400, %v369, 0
        %v426 = vsel %vm400, %v370, 0
        %v429 = vsel %vm400, %v371, 0
        %v432 = vsel %vm400, %v372, 0
        %v435 = vsel %vm400, %v373, 0
        %v438 = vsel %vm400, %v374, 0
        %v441 = vsel %vm400, %v375, 0
        %v444 = vsel %vm400, %v376, 0
        %v447 = vsel %vm400, %v377, 0
        %v450 = vsel %vm400, %v378, 0
        %v453 = vsel %vm400, %v379, 0
        %v456 = vsel %vm400, %v380, 0
        %v459 = vsel %vm400, %v381, 0
        %v462 = vsel %vm400, %v382, 0
        %v465 = vsel %vm400, %v383, 0
        %v468 = vsel %vm400, %v384, 0
        %v471 = vsel %vm400, %v385, 0
        %v474 = vsel %vm400, %v386, 0
        %v477 = vsel %vm400, %v387, 0
        %v480 = vsel %vm400, %v388, 0
        %v483 = vsel %vm400, %v389, 0
        %v486 = vsel %vm400, %v390, 0
        %v489 = vsel %vm400, %v391, 0
        %v492 = vsel %vm400, %v392, 0
        %v495 = vsel %vm400, %v393, 0
        %v498 = vsel %vm400, %v394, 0
        %v501 = vsel %vm400, %v395, 0
        %v504 = vsel %vm400, %v396, 0
        %v507 = vsel %vm400, %v397, 0
        %vm509 = vcmask 1043456
        %v511 = vsel %vm509, %v399, 0
        %513 = vmatpush.msra.mxu0 0.0
        %514 = vmatpush.msra.mxu0 0.0
        %515 = vmatpush.msra.mxu0 0.0
        %516 = vmatpush.msra.mxu0 0.0
        %517 = vmatpush.msra.mxu0 0.0
        %518 = vmatpush.msra.mxu0 0.0
        %519 = vmatpush.msra.mxu0 0.0
        %520 = vmatpush.msra.mxu0 0.0
        %521 = vmatpush.msra.mxu0 0.0
        %522 = vmatpush.msra.mxu0 0.0
        %523 = vmatpush.msra.mxu0 0.0
        %524 = vmatpush.msra.mxu0 0.0
        %525 = vmatpush.msra.mxu0 0.0
        %526 = vmatpush.msra.mxu0 0.0
        %527 = vmatpush.msra.mxu0 0.0
        %528 = vmatpush.msra.mxu0 %v511
        %529 = vmatmul.f32.gmra.mxu0 %v402
        %v530 = vpop.f32.mrf.mxu0
        %v531 = vadd.f32 0.0, %v530
        %532 = vmatmul.f32.gmra.mxu0 %v405
        %v533 = vpop.f32.mrf.mxu0
        %v534 = vadd.f32 0.0, %v533
        %535 = vmatmul.f32.gmra.mxu0 %v408
        %v536 = vpop.f32.mrf.mxu0
        %v537 = vadd.f32 0.0, %v536
        %538 = vmatmul.f32.gmra.mxu0 %v411
        %v539 = vpop.f32.mrf.mxu0
        %v540 = vadd.f32 0.0, %v539
        %541 = vmatmul.f32.gmra.mxu0 %v414
        %v542 = vpop.f32.mrf.mxu0
        %v543 = vadd.f32 0.0, %v542
        %544 = vmatmul.f32.gmra.mxu0 %v417
        %v545 = vpop.f32.mrf.mxu0
        %v546 = vadd.f32 0.0, %v545
        %547 = vmatmul.f32.gmra.mxu0 %v420
        %v548 = vpop.f32.mrf.mxu0
        %v549 = vadd.f32 0.0, %v548
        %550 = vmatmul.f32.gmra.mxu0 %v423
        %v551 = vpop.f32.mrf.mxu0
        %v552 = vadd.f32 0.0, %v551
        %553 = vmatmul.f32.gmra.mxu0 %v426
        %v554 = vpop.f32.mrf.mxu0
        %v555 = vadd.f32 0.0, %v554
        %556 = vmatmul.f32.gmra.mxu0 %v429
        %v557 = vpop.f32.mrf.mxu0
        %v558 = vadd.f32 0.0, %v557
        %559 = vmatmul.f32.gmra.mxu0 %v432
        %v560 = vpop.f32.mrf.mxu0
        %v561 = vadd.f32 0.0, %v560
        %562 = vmatmul.f32.gmra.mxu0 %v435
        %v563 = vpop.f32.mrf.mxu0
        %v564 = vadd.f32 0.0, %v563
        %565 = vmatmul.f32.gmra.mxu0 %v438
        %v566 = vpop.f32.mrf.mxu0
        %v567 = vadd.f32 0.0, %v566
        %568 = vmatmul.f32.gmra.mxu0 %v441
        %v569 = vpop.f32.mrf.mxu0
        %v570 = vadd.f32 0.0, %v569
        %571 = vmatmul.f32.gmra.mxu0 %v444
        %v572 = vpop.f32.mrf.mxu0
        %v573 = vadd.f32 0.0, %v572
        %574 = vmatmul.f32.gmra.mxu0 %v447
        %v575 = vpop.f32.mrf.mxu0
        %v576 = vadd.f32 0.0, %v575
        %577 = vmatmul.f32.gmra.mxu0 %v450
        %v578 = vpop.f32.mrf.mxu0
        %v579 = vadd.f32 0.0, %v578
        %580 = vmatmul.f32.gmra.mxu0 %v453
        %v581 = vpop.f32.mrf.mxu0
        %v582 = vadd.f32 0.0, %v581
        %583 = vmatmul.f32.gmra.mxu0 %v456
        %v584 = vpop.f32.mrf.mxu0
        %v585 = vadd.f32 0.0, %v584
        %586 = vmatmul.f32.gmra.mxu0 %v459
        %v587 = vpop.f32.mrf.mxu0
        %v588 = vadd.f32 0.0, %v587
        %589 = vmatmul.f32.gmra.mxu0 %v462
        %v590 = vpop.f32.mrf.mxu0
        %v591 = vadd.f32 0.0, %v590
        %592 = vmatmul.f32.gmra.mxu0 %v465
        %v593 = vpop.f32.mrf.mxu0
        %v594 = vadd.f32 0.0, %v593
        %595 = vmatmul.f32.gmra.mxu0 %v468
        %v596 = vpop.f32.mrf.mxu0
        %v597 = vadd.f32 0.0, %v596
        %598 = vmatmul.f32.gmra.mxu0 %v471
        %v599 = vpop.f32.mrf.mxu0
        %v600 = vadd.f32 0.0, %v599
        %601 = vmatmul.f32.gmra.mxu0 %v474
        %v602 = vpop.f32.mrf.mxu0
        %v603 = vadd.f32 0.0, %v602
        %604 = vmatmul.f32.gmra.mxu0 %v477
        %v605 = vpop.f32.mrf.mxu0
        %v606 = vadd.f32 0.0, %v605
        %607 = vmatmul.f32.gmra.mxu0 %v480
        %v608 = vpop.f32.mrf.mxu0
        %v609 = vadd.f32 0.0, %v608
        %610 = vmatmul.f32.gmra.mxu0 %v483
        %v611 = vpop.f32.mrf.mxu0
        %v612 = vadd.f32 0.0, %v611
        %613 = vmatmul.f32.gmra.mxu0 %v486
        %v614 = vpop.f32.mrf.mxu0
        %v615 = vadd.f32 0.0, %v614
        %616 = vmatmul.f32.gmra.mxu0 %v489
        %v617 = vpop.f32.mrf.mxu0
        %v618 = vadd.f32 0.0, %v617
        %619 = vmatmul.f32.gmra.mxu0 %v492
        %v620 = vpop.f32.mrf.mxu0
        %v621 = vadd.f32 0.0, %v620
        %622 = vmatmul.f32.gmra.mxu0 %v495
        %v623 = vpop.f32.mrf.mxu0
        %v624 = vadd.f32 0.0, %v623
        %625 = vmatmul.f32.gmra.mxu0 %v498
        %v626 = vpop.f32.mrf.mxu0
        %v627 = vadd.f32 0.0, %v626
        %628 = vmatmul.f32.gmra.mxu0 %v501
        %v629 = vpop.f32.mrf.mxu0
        %v630 = vadd.f32 0.0, %v629
        %631 = vmatmul.f32.gmra.mxu0 %v504
        %v632 = vpop.f32.mrf.mxu0
        %v633 = vadd.f32 0.0, %v632
        %634 = vmatmul.f32.gmra.mxu0 %v507
        %v635 = vpop.f32.mrf.mxu0
        %v636 = vadd.f32 0.0, %v635
        %637 = vdwg.mxu0
        %v639 = vsel %vm400, %v325, 0
        %v642 = vsel %vm400, %v326, 0
        %v645 = vsel %vm400, %v327, 0
        %v648 = vsel %vm400, %v328, 0
        %v651 = vsel %vm400, %v329, 0
        %v654 = vsel %vm400, %v330, 0
        %v657 = vsel %vm400, %v331, 0
        %v660 = vsel %vm400, %v332, 0
        %v663 = vsel %vm400, %v333, 0
        %v666 = vsel %vm400, %v334, 0
        %v669 = vsel %vm400, %v335, 0
        %v672 = vsel %vm400, %v336, 0
        %v675 = vsel %vm400, %v337, 0
        %v678 = vsel %vm400, %v338, 0
        %v681 = vsel %vm400, %v339, 0
        %v684 = vsel %vm400, %v340, 0
        %v687 = vsel %vm400, %v341, 0
        %v690 = vsel %vm400, %v342, 0
        %v693 = vsel %vm400, %v343, 0
        %v696 = vsel %vm400, %v344, 0
        %v699 = vsel %vm400, %v345, 0
        %v702 = vsel %vm400, %v346, 0
        %v705 = vsel %vm400, %v347, 0
        %v708 = vsel %vm400, %v348, 0
        %v711 = vsel %vm400, %v349, 0
        %v714 = vsel %vm400, %v350, 0
        %v717 = vsel %vm400, %v351, 0
        %v720 = vsel %vm400, %v352, 0
        %v723 = vsel %vm400, %v353, 0
        %v726 = vsel %vm400, %v354, 0
        %v729 = vsel %vm400, %v355, 0
        %v732 = vsel %vm400, %v356, 0
        %v735 = vsel %vm400, %v357, 0
        %v738 = vsel %vm400, %v358, 0
        %v741 = vsel %vm400, %v359, 0
        %v744 = vsel %vm400, %v360, 0
        %v747 = vsel %vm509, %v361, 0
        %749 = vmatpush.msra.mxu0 0.0
        %750 = vmatpush.msra.mxu0 0.0
        %751 = vmatpush.msra.mxu0 0.0
        %752 = vmatpush.msra.mxu0 0.0
        %753 = vmatpush.msra.mxu0 0.0
        %754 = vmatpush.msra.mxu0 0.0
        %755 = vmatpush.msra.mxu0 0.0
        %756 = vmatpush.msra.mxu0 0.0
        %757 = vmatpush.msra.mxu0 0.0
        %758 = vmatpush.msra.mxu0 0.0
        %759 = vmatpush.msra.mxu0 0.0
        %760 = vmatpush.msra.mxu0 0.0
        %761 = vmatpush.msra.mxu0 0.0
        %762 = vmatpush.msra.mxu0 0.0
        %763 = vmatpush.msra.mxu0 0.0
        %764 = vmatpush.msra.mxu0 %v747
        %765 = vmatmul.f32.gmra.mxu0 %v639
        %v766 = vpop.f32.mrf.mxu0
        %v767 = vadd.f32 %v531, %v766
        %768 = vmatmul.f32.gmra.mxu0 %v642
        %v769 = vpop.f32.mrf.mxu0
        %v770 = vadd.f32 %v534, %v769
        %771 = vmatmul.f32.gmra.mxu0 %v645
        %v772 = vpop.f32.mrf.mxu0
        %v773 = vadd.f32 %v537, %v772
        %774 = vmatmul.f32.gmra.mxu0 %v648
        %v775 = vpop.f32.mrf.mxu0
        %v776 = vadd.f32 %v540, %v775
        %777 = vmatmul.f32.gmra.mxu0 %v651
        %v778 = vpop.f32.mrf.mxu0
        %v779 = vadd.f32 %v543, %v778
        %780 = vmatmul.f32.gmra.mxu0 %v654
        %v781 = vpop.f32.mrf.mxu0
        %v782 = vadd.f32 %v546, %v781
        %783 = vmatmul.f32.gmra.mxu0 %v657
        %v784 = vpop.f32.mrf.mxu0
        %v785 = vadd.f32 %v549, %v784
        %786 = vmatmul.f32.gmra.mxu0 %v660
        %v787 = vpop.f32.mrf.mxu0
        %v788 = vadd.f32 %v552, %v787
        %789 = vmatmul.f32.gmra.mxu0 %v663
        %v790 = vpop.f32.mrf.mxu0
        %v791 = vadd.f32 %v555, %v790
        %792 = vmatmul.f32.gmra.mxu0 %v666
        %v793 = vpop.f32.mrf.mxu0
        %v794 = vadd.f32 %v558, %v793
        %795 = vmatmul.f32.gmra.mxu0 %v669
        %v796 = vpop.f32.mrf.mxu0
        %v797 = vadd.f32 %v561, %v796
        %798 = vmatmul.f32.gmra.mxu0 %v672
        %v799 = vpop.f32.mrf.mxu0
        %v800 = vadd.f32 %v564, %v799
        %801 = vmatmul.f32.gmra.mxu0 %v675
        %v802 = vpop.f32.mrf.mxu0
        %v803 = vadd.f32 %v567, %v802
        %804 = vmatmul.f32.gmra.mxu0 %v678
        %v805 = vpop.f32.mrf.mxu0
        %v806 = vadd.f32 %v570, %v805
        %807 = vmatmul.f32.gmra.mxu0 %v681
        %v808 = vpop.f32.mrf.mxu0
        %v809 = vadd.f32 %v573, %v808
        %810 = vmatmul.f32.gmra.mxu0 %v684
        %v811 = vpop.f32.mrf.mxu0
        %v812 = vadd.f32 %v576, %v811
        %813 = vmatmul.f32.gmra.mxu0 %v687
        %v814 = vpop.f32.mrf.mxu0
        %v815 = vadd.f32 %v579, %v814
        %816 = vmatmul.f32.gmra.mxu0 %v690
        %v817 = vpop.f32.mrf.mxu0
        %v818 = vadd.f32 %v582, %v817
        %819 = vmatmul.f32.gmra.mxu0 %v693
        %v820 = vpop.f32.mrf.mxu0
        %v821 = vadd.f32 %v585, %v820
        %822 = vmatmul.f32.gmra.mxu0 %v696
        %v823 = vpop.f32.mrf.mxu0
        %v824 = vadd.f32 %v588, %v823
        %825 = vmatmul.f32.gmra.mxu0 %v699
        %v826 = vpop.f32.mrf.mxu0
        %v827 = vadd.f32 %v591, %v826
        %828 = vmatmul.f32.gmra.mxu0 %v702
        %v829 = vpop.f32.mrf.mxu0
        %v830 = vadd.f32 %v594, %v829
        %831 = vmatmul.f32.gmra.mxu0 %v705
        %v832 = vpop.f32.mrf.mxu0
        %v833 = vadd.f32 %v597, %v832
        %834 = vmatmul.f32.gmra.mxu0 %v708
        %v835 = vpop.f32.mrf.mxu0
        %v836 = vadd.f32 %v600, %v835
        %837 = vmatmul.f32.gmra.mxu0 %v711
        %v838 = vpop.f32.mrf.mxu0
        %v839 = vadd.f32 %v603, %v838
        %840 = vmatmul.f32.gmra.mxu0 %v714
        %v841 = vpop.f32.mrf.mxu0
        %v842 = vadd.f32 %v606, %v841
        %843 = vmatmul.f32.gmra.mxu0 %v717
        %v844 = vpop.f32.mrf.mxu0
        %v845 = vadd.f32 %v609, %v844
        %846 = vmatmul.f32.gmra.mxu0 %v720
        %v847 = vpop.f32.mrf.mxu0
        %v848 = vadd.f32 %v612, %v847
        %849 = vmatmul.f32.gmra.mxu0 %v723
        %v850 = vpop.f32.mrf.mxu0
        %v851 = vadd.f32 %v615, %v850
        %852 = vmatmul.f32.gmra.mxu0 %v726
        %v853 = vpop.f32.mrf.mxu0
        %v854 = vadd.f32 %v618, %v853
        %855 = vmatmul.f32.gmra.mxu0 %v729
        %v856 = vpop.f32.mrf.mxu0
        %v857 = vadd.f32 %v621, %v856
        %858 = vmatmul.f32.gmra.mxu0 %v732
        %v859 = vpop.f32.mrf.mxu0
        %v860 = vadd.f32 %v624, %v859
        %861 = vmatmul.f32.gmra.mxu0 %v735
        %v862 = vpop.f32.mrf.mxu0
        %v863 = vadd.f32 %v627, %v862
        %864 = vmatmul.f32.gmra.mxu0 %v738
        %v865 = vpop.f32.mrf.mxu0
        %v866 = vadd.f32 %v630, %v865
        %867 = vmatmul.f32.gmra.mxu0 %v741
        %v868 = vpop.f32.mrf.mxu0
        %v869 = vadd.f32 %v633, %v868
        %870 = vmatmul.f32.gmra.mxu0 %v744
        %v871 = vpop.f32.mrf.mxu0
        %v872 = vadd.f32 %v636, %v871
        %873 = vdwg.mxu0
        %v874 = vld [vmem:[%s319 + $0x2] sm:$0xff]
        %v875 = vld [vmem:[%s319 + $0xa] sm:$0xff]
        %v876 = vld [vmem:[%s319 + $0x12] sm:$0xff]
        %v877 = vld [vmem:[%s319 + $0x1a] sm:$0xff]
        %v878 = vld [vmem:[%s319 + $0x22] sm:$0xff]
        %v879 = vld [vmem:[%s319 + $0x2a] sm:$0xff]
        %v880 = vld [vmem:[%s319 + $0x32] sm:$0xff]
        %v881 = vld [vmem:[%s319 + $0x3a] sm:$0xff]
        %v882 = vld [vmem:[%s319 + $0x42] sm:$0xff]
        %v883 = vld [vmem:[%s319 + $0x4a] sm:$0xff]
        %v884 = vld [vmem:[%s319 + $0x52] sm:$0xff]
        %v885 = vld [vmem:[%s319 + $0x5a] sm:$0xff]
        %v886 = vld [vmem:[%s319 + $0x62] sm:$0xff]
        %v887 = vld [vmem:[%s319 + $0x6a] sm:$0xff]
        %v888 = vld [vmem:[%s319 + $0x72] sm:$0xff]
        %v889 = vld [vmem:[%s319 + $0x7a] sm:$0xff]
        %v890 = vld [vmem:[%s319 + $0x82] sm:$0xff]
        %v891 = vld [vmem:[%s319 + $0x8a] sm:$0xff]
        %v892 = vld [vmem:[%s319 + $0x92] sm:$0xff]
        %v893 = vld [vmem:[%s319 + $0x9a] sm:$0xff]
        %v894 = vld [vmem:[%s319 + $0xa2] sm:$0xff]
        %v895 = vld [vmem:[%s319 + $0xaa] sm:$0xff]
        %v896 = vld [vmem:[%s319 + $0xb2] sm:$0xff]
        %v897 = vld [vmem:[%s319 + $0xba] sm:$0xff]
        %v898 = vld [vmem:[%s319 + $0xc2] sm:$0xff]
        %v899 = vld [vmem:[%s319 + $0xca] sm:$0xff]
        %v900 = vld [vmem:[%s319 + $0xd2] sm:$0xff]
        %v901 = vld [vmem:[%s319 + $0xda] sm:$0xff]
        %v902 = vld [vmem:[%s319 + $0xe2] sm:$0xff]
        %v903 = vld [vmem:[%s319 + $0xea] sm:$0xff]
        %v904 = vld [vmem:[%s319 + $0xf2] sm:$0xff]
        %v905 = vld [vmem:[%s319 + $0xfa] sm:$0xff]
        %v906 = vld [vmem:[%s319 + $0x102] sm:$0xff]
        %v907 = vld [vmem:[%s319 + $0x10a] sm:$0xff]
        %v908 = vld [vmem:[%s319 + $0x112] sm:$0xff]
        %v909 = vld [vmem:[%s319 + $0x11a] sm:$0x3f]
        %s910 = scalar_lea.vmem %s5, 8
        %v911 = vld [vmem:[%s910] sm:$0xf]
        %v913 = vsel %vm400, %v874, 0
        %v916 = vsel %vm400, %v875, 0
        %v919 = vsel %vm400, %v876, 0
        %v922 = vsel %vm400, %v877, 0
        %v925 = vsel %vm400, %v878, 0
        %v928 = vsel %vm400, %v879, 0
        %v931 = vsel %vm400, %v880, 0
        %v934 = vsel %vm400, %v881, 0
        %v937 = vsel %vm400, %v882, 0
        %v940 = vsel %vm400, %v883, 0
        %v943 = vsel %vm400, %v884, 0
        %v946 = vsel %vm400, %v885, 0
        %v949 = vsel %vm400, %v886, 0
        %v952 = vsel %vm400, %v887, 0
        %v955 = vsel %vm400, %v888, 0
        %v958 = vsel %vm400, %v889, 0
        %v961 = vsel %vm400, %v890, 0
        %v964 = vsel %vm400, %v891, 0
        %v967 = vsel %vm400, %v892, 0
        %v970 = vsel %vm400, %v893, 0
        %v973 = vsel %vm400, %v894, 0
        %v976 = vsel %vm400, %v895, 0
        %v979 = vsel %vm400, %v896, 0
        %v982 = vsel %vm400, %v897, 0
        %v985 = vsel %vm400, %v898, 0
        %v988 = vsel %vm400, %v899, 0
        %v991 = vsel %vm400, %v900, 0
        %v994 = vsel %vm400, %v901, 0
        %v997 = vsel %vm400, %v902, 0
        %v1000 = vsel %vm400, %v903, 0
        %v1003 = vsel %vm400, %v904, 0
        %v1006 = vsel %vm400, %v905, 0
        %v1009 = vsel %vm400, %v906, 0
        %v1012 = vsel %vm400, %v907, 0
        %v1015 = vsel %vm400, %v908, 0
        %v1018 = vsel %vm400, %v909, 0
        %v1021 = vsel %vm509, %v911, 0
        %1023 = vmatpush.msra.mxu0 0.0
        %1024 = vmatpush.msra.mxu0 0.0
        %1025 = vmatpush.msra.mxu0 0.0
        %1026 = vmatpush.msra.mxu0 0.0
        %1027 = vmatpush.msra.mxu0 0.0
        %1028 = vmatpush.msra.mxu0 0.0
        %1029 = vmatpush.msra.mxu0 0.0
        %1030 = vmatpush.msra.mxu0 0.0
        %1031 = vmatpush.msra.mxu0 0.0
        %1032 = vmatpush.msra.mxu0 0.0
        %1033 = vmatpush.msra.mxu0 0.0
        %1034 = vmatpush.msra.mxu0 0.0
        %1035 = vmatpush.msra.mxu0 0.0
        %1036 = vmatpush.msra.mxu0 0.0
        %1037 = vmatpush.msra.mxu0 0.0
        %1038 = vmatpush.msra.mxu0 %v1021
        %1039 = vmatmul.f32.gmra.mxu0 %v913
        %v1040 = vpop.f32.mrf.mxu0
        %v1041 = vadd.f32 0.0, %v1040
        %1042 = vmatmul.f32.gmra.mxu0 %v916
        %v1043 = vpop.f32.mrf.mxu0
        %v1044 = vadd.f32 0.0, %v1043
        %1045 = vmatmul.f32.gmra.mxu0 %v919
        %v1046 = vpop.f32.mrf.mxu0
        %v1047 = vadd.f32 0.0, %v1046
        %1048 = vmatmul.f32.gmra.mxu0 %v922
        %v1049 = vpop.f32.mrf.mxu0
        %v1050 = vadd.f32 0.0, %v1049
        %1051 = vmatmul.f32.gmra.mxu0 %v925
        %v1052 = vpop.f32.mrf.mxu0
        %v1053 = vadd.f32 0.0, %v1052
        %1054 = vmatmul.f32.gmra.mxu0 %v928
        %v1055 = vpop.f32.mrf.mxu0
        %v1056 = vadd.f32 0.0, %v1055
        %1057 = vmatmul.f32.gmra.mxu0 %v931
        %v1058 = vpop.f32.mrf.mxu0
        %v1059 = vadd.f32 0.0, %v1058
        %1060 = vmatmul.f32.gmra.mxu0 %v934
        %v1061 = vpop.f32.mrf.mxu0
        %v1062 = vadd.f32 0.0, %v1061
        %1063 = vmatmul.f32.gmra.mxu0 %v937
        %v1064 = vpop.f32.mrf.mxu0
        %v1065 = vadd.f32 0.0, %v1064
        %1066 = vmatmul.f32.gmra.mxu0 %v940
        %v1067 = vpop.f32.mrf.mxu0
        %v1068 = vadd.f32 0.0, %v1067
        %1069 = vmatmul.f32.gmra.mxu0 %v943
        %v1070 = vpop.f32.mrf.mxu0
        %v1071 = vadd.f32 0.0, %v1070
        %1072 = vmatmul.f32.gmra.mxu0 %v946
        %v1073 = vpop.f32.mrf.mxu0
        %v1074 = vadd.f32 0.0, %v1073
        %1075 = vmatmul.f32.gmra.mxu0 %v949
        %v1076 = vpop.f32.mrf.mxu0
        %v1077 = vadd.f32 0.0, %v1076
        %1078 = vmatmul.f32.gmra.mxu0 %v952
        %v1079 = vpop.f32.mrf.mxu0
        %v1080 = vadd.f32 0.0, %v1079
        %1081 = vmatmul.f32.gmra.mxu0 %v955
        %v1082 = vpop.f32.mrf.mxu0
        %v1083 = vadd.f32 0.0, %v1082
        %1084 = vmatmul.f32.gmra.mxu0 %v958
        %v1085 = vpop.f32.mrf.mxu0
        %v1086 = vadd.f32 0.0, %v1085
        %1087 = vmatmul.f32.gmra.mxu0 %v961
        %v1088 = vpop.f32.mrf.mxu0
        %v1089 = vadd.f32 0.0, %v1088
        %1090 = vmatmul.f32.gmra.mxu0 %v964
        %v1091 = vpop.f32.mrf.mxu0
        %v1092 = vadd.f32 0.0, %v1091
        %1093 = vmatmul.f32.gmra.mxu0 %v967
        %v1094 = vpop.f32.mrf.mxu0
        %v1095 = vadd.f32 0.0, %v1094
        %1096 = vmatmul.f32.gmra.mxu0 %v970
        %v1097 = vpop.f32.mrf.mxu0
        %v1098 = vadd.f32 0.0, %v1097
        %1099 = vmatmul.f32.gmra.mxu0 %v973
        %v1100 = vpop.f32.mrf.mxu0
        %v1101 = vadd.f32 0.0, %v1100
        %1102 = vmatmul.f32.gmra.mxu0 %v976
        %v1103 = vpop.f32.mrf.mxu0
        %v1104 = vadd.f32 0.0, %v1103
        %1105 = vmatmul.f32.gmra.mxu0 %v979
        %v1106 = vpop.f32.mrf.mxu0
        %v1107 = vadd.f32 0.0, %v1106
        %1108 = vmatmul.f32.gmra.mxu0 %v982
        %v1109 = vpop.f32.mrf.mxu0
        %v1110 = vadd.f32 0.0, %v1109
        %1111 = vmatmul.f32.gmra.mxu0 %v985
        %v1112 = vpop.f32.mrf.mxu0
        %v1113 = vadd.f32 0.0, %v1112
        %1114 = vmatmul.f32.gmra.mxu0 %v988
        %v1115 = vpop.f32.mrf.mxu0
        %v1116 = vadd.f32 0.0, %v1115
        %1117 = vmatmul.f32.gmra.mxu0 %v991
        %v1118 = vpop.f32.mrf.mxu0
        %v1119 = vadd.f32 0.0, %v1118
        %1120 = vmatmul.f32.gmra.mxu0 %v994
        %v1121 = vpop.f32.mrf.mxu0
        %v1122 = vadd.f32 0.0, %v1121
        %1123 = vmatmul.f32.gmra.mxu0 %v997
        %v1124 = vpop.f32.mrf.mxu0
        %v1125 = vadd.f32 0.0, %v1124
        %1126 = vmatmul.f32.gmra.mxu0 %v1000
        %v1127 = vpop.f32.mrf.mxu0
        %v1128 = vadd.f32 0.0, %v1127
        %1129 = vmatmul.f32.gmra.mxu0 %v1003
        %v1130 = vpop.f32.mrf.mxu0
        %v1131 = vadd.f32 0.0, %v1130
        %1132 = vmatmul.f32.gmra.mxu0 %v1006
        %v1133 = vpop.f32.mrf.mxu0
        %v1134 = vadd.f32 0.0, %v1133
        %1135 = vmatmul.f32.gmra.mxu0 %v1009
        %v1136 = vpop.f32.mrf.mxu0
        %v1137 = vadd.f32 0.0, %v1136
        %1138 = vmatmul.f32.gmra.mxu0 %v1012
        %v1139 = vpop.f32.mrf.mxu0
        %v1140 = vadd.f32 0.0, %v1139
        %1141 = vmatmul.f32.gmra.mxu0 %v1015
        %v1142 = vpop.f32.mrf.mxu0
        %v1143 = vadd.f32 0.0, %v1142
        %1144 = vmatmul.f32.gmra.mxu0 %v1018
        %v1145 = vpop.f32.mrf.mxu0
        %v1146 = vadd.f32 0.0, %v1145
        %1147 = vdwg.mxu0
        %v1148 = vadd.f32 %v767, %v1041
        %v1149 = vadd.f32 %v770, %v1044
        %v1150 = vadd.f32 %v773, %v1047
        %v1151 = vadd.f32 %v776, %v1050
        %v1152 = vadd.f32 %v779, %v1053
        %v1153 = vadd.f32 %v782, %v1056
        %v1154 = vadd.f32 %v785, %v1059
        %v1155 = vadd.f32 %v788, %v1062
        %v1156 = vadd.f32 %v791, %v1065
        %v1157 = vadd.f32 %v794, %v1068
        %v1158 = vadd.f32 %v797, %v1071
        %v1159 = vadd.f32 %v800, %v1074
        %v1160 = vadd.f32 %v803, %v1077
        %v1161 = vadd.f32 %v806, %v1080
        %v1162 = vadd.f32 %v809, %v1083
        %v1163 = vadd.f32 %v812, %v1086
        %v1164 = vadd.f32 %v815, %v1089
        %v1165 = vadd.f32 %v818, %v1092
        %v1166 = vadd.f32 %v821, %v1095
        %v1167 = vadd.f32 %v824, %v1098
        %v1168 = vadd.f32 %v827, %v1101
        %v1169 = vadd.f32 %v830, %v1104
        %v1170 = vadd.f32 %v833, %v1107
        %v1171 = vadd.f32 %v836, %v1110
        %v1172 = vadd.f32 %v839, %v1113
        %v1173 = vadd.f32 %v842, %v1116
        %v1174 = vadd.f32 %v845, %v1119
        %v1175 = vadd.f32 %v848, %v1122
        %v1176 = vadd.f32 %v851, %v1125
        %v1177 = vadd.f32 %v854, %v1128
        %v1178 = vadd.f32 %v857, %v1131
        %v1179 = vadd.f32 %v860, %v1134
        %v1180 = vadd.f32 %v863, %v1137
        %v1181 = vadd.f32 %v866, %v1140
        %v1182 = vadd.f32 %v869, %v1143
        %v1183 = vadd.f32 %v872, %v1146
        %v1184 = vld [vmem:[%s319 + $0x12] sm:$0xff]
        %v1185 = vld [vmem:[%s319 + $0x1a] sm:$0xff]
        %v1186 = vld [vmem:[%s319 + $0x22] sm:$0xff]
        %v1187 = vld [vmem:[%s319 + $0x2a] sm:$0xff]
        %v1188 = vld [vmem:[%s319 + $0x32] sm:$0xff]
        %v1189 = vld [vmem:[%s319 + $0x3a] sm:$0xff]
        %v1190 = vld [vmem:[%s319 + $0x42] sm:$0xff]
        %v1191 = vld [vmem:[%s319 + $0x4a] sm:$0xff]
        %v1192 = vld [vmem:[%s319 + $0x52] sm:$0xff]
        %v1193 = vld [vmem:[%s319 + $0x5a] sm:$0xff]
        %v1194 = vld [vmem:[%s319 + $0x62] sm:$0xff]
        %v1195 = vld [vmem:[%s319 + $0x6a] sm:$0xff]
        %v1196 = vld [vmem:[%s319 + $0x72] sm:$0xff]
        %v1197 = vld [vmem:[%s319 + $0x7a] sm:$0xff]
        %v1198 = vld [vmem:[%s319 + $0x82] sm:$0xff]
        %v1199 = vld [vmem:[%s319 + $0x8a] sm:$0xff]
        %v1200 = vld [vmem:[%s319 + $0x92] sm:$0xff]
        %v1201 = vld [vmem:[%s319 + $0x9a] sm:$0xff]
        %v1202 = vld [vmem:[%s319 + $0xa2] sm:$0xff]
        %v1203 = vld [vmem:[%s319 + $0xaa] sm:$0xff]
        %v1204 = vld [vmem:[%s319 + $0xb2] sm:$0xff]
        %v1205 = vld [vmem:[%s319 + $0xba] sm:$0xff]
        %v1206 = vld [vmem:[%s319 + $0xc2] sm:$0xff]
        %v1207 = vld [vmem:[%s319 + $0xca] sm:$0xff]
        %v1208 = vld [vmem:[%s319 + $0xd2] sm:$0xff]
        %v1209 = vld [vmem:[%s319 + $0xda] sm:$0xff]
        %v1210 = vld [vmem:[%s319 + $0xe2] sm:$0xff]
        %v1211 = vld [vmem:[%s319 + $0xea] sm:$0xff]
        %v1212 = vld [vmem:[%s319 + $0xf2] sm:$0xff]
        %v1213 = vld [vmem:[%s319 + $0xfa] sm:$0xff]
        %v1214 = vld [vmem:[%s319 + $0x102] sm:$0xff]
        %v1215 = vld [vmem:[%s319 + $0x10a] sm:$0xff]
        %v1216 = vld [vmem:[%s319 + $0x112] sm:$0xff]
        %v1217 = vld [vmem:[%s319 + $0x11a] sm:$0xff]
        %v1218 = vld [vmem:[%s319 + $0x122] sm:$0xff]
        %v1219 = vld [vmem:[%s319 + $0x12a] sm:$0x3f]
        %s1220 = scalar_lea.vmem %s5, 12
        %v1221 = vld [vmem:[%s1220] sm:$0xf]
        %v1223 = vsel %vm400, %v1184, 0
        %v1226 = vsel %vm400, %v1185, 0
        %v1229 = vsel %vm400, %v1186, 0
        %v1232 = vsel %vm400, %v1187, 0
        %v1235 = vsel %vm400, %v1188, 0
        %v1238 = vsel %vm400, %v1189, 0
        %v1241 = vsel %vm400, %v1190, 0
        %v1244 = vsel %vm400, %v1191, 0
        %v1247 = vsel %vm400, %v1192, 0
        %v1250 = vsel %vm400, %v1193, 0
        %v1253 = vsel %vm400, %v1194, 0
        %v1256 = vsel %vm400, %v1195, 0
        %v1259 = vsel %vm400, %v1196, 0
        %v1262 = vsel %vm400, %v1197, 0
        %v1265 = vsel %vm400, %v1198, 0
        %v1268 = vsel %vm400, %v1199, 0
        %v1271 = vsel %vm400, %v1200, 0
        %v1274 = vsel %vm400, %v1201, 0
        %v1277 = vsel %vm400, %v1202, 0
        %v1280 = vsel %vm400, %v1203, 0
        %v1283 = vsel %vm400, %v1204, 0
        %v1286 = vsel %vm400, %v1205, 0
        %v1289 = vsel %vm400, %v1206, 0
        %v1292 = vsel %vm400, %v1207, 0
        %v1295 = vsel %vm400, %v1208, 0
        %v1298 = vsel %vm400, %v1209, 0
        %v1301 = vsel %vm400, %v1210, 0
        %v1304 = vsel %vm400, %v1211, 0
        %v1307 = vsel %vm400, %v1212, 0
        %v1310 = vsel %vm400, %v1213, 0
        %v1313 = vsel %vm400, %v1214, 0
        %v1316 = vsel %vm400, %v1215, 0
        %v1319 = vsel %vm400, %v1216, 0
        %v1322 = vsel %vm400, %v1217, 0
        %v1325 = vsel %vm400, %v1218, 0
        %v1328 = vsel %vm400, %v1219, 0
        %v1331 = vsel %vm509, %v1221, 0
        %1333 = vmatpush.msra.mxu0 0.0
        %1334 = vmatpush.msra.mxu0 0.0
        %1335 = vmatpush.msra.mxu0 0.0
        %1336 = vmatpush.msra.mxu0 0.0
        %1337 = vmatpush.msra.mxu0 0.0
        %1338 = vmatpush.msra.mxu0 0.0
        %1339 = vmatpush.msra.mxu0 0.0
        %1340 = vmatpush.msra.mxu0 0.0
        %1341 = vmatpush.msra.mxu0 0.0
        %1342 = vmatpush.msra.mxu0 0.0
        %1343 = vmatpush.msra.mxu0 0.0
        %1344 = vmatpush.msra.mxu0 0.0
        %1345 = vmatpush.msra.mxu0 0.0
        %1346 = vmatpush.msra.mxu0 0.0
        %1347 = vmatpush.msra.mxu0 0.0
        %1348 = vmatpush.msra.mxu0 %v1331
        %1349 = vmatmul.f32.gmra.mxu0 %v1223
        %v1350 = vpop.f32.mrf.mxu0
        %v1351 = vadd.f32 0.0, %v1350
        %1352 = vmatmul.f32.gmra.mxu0 %v1226
        %v1353 = vpop.f32.mrf.mxu0
        %v1354 = vadd.f32 0.0, %v1353
        %1355 = vmatmul.f32.gmra.mxu0 %v1229
        %v1356 = vpop.f32.mrf.mxu0
        %v1357 = vadd.f32 0.0, %v1356
        %1358 = vmatmul.f32.gmra.mxu0 %v1232
        %v1359 = vpop.f32.mrf.mxu0
        %v1360 = vadd.f32 0.0, %v1359
        %1361 = vmatmul.f32.gmra.mxu0 %v1235
        %v1362 = vpop.f32.mrf.mxu0
        %v1363 = vadd.f32 0.0, %v1362
        %1364 = vmatmul.f32.gmra.mxu0 %v1238
        %v1365 = vpop.f32.mrf.mxu0
        %v1366 = vadd.f32 0.0, %v1365
        %1367 = vmatmul.f32.gmra.mxu0 %v1241
        %v1368 = vpop.f32.mrf.mxu0
        %v1369 = vadd.f32 0.0, %v1368
        %1370 = vmatmul.f32.gmra.mxu0 %v1244
        %v1371 = vpop.f32.mrf.mxu0
        %v1372 = vadd.f32 0.0, %v1371
        %1373 = vmatmul.f32.gmra.mxu0 %v1247
        %v1374 = vpop.f32.mrf.mxu0
        %v1375 = vadd.f32 0.0, %v1374
        %1376 = vmatmul.f32.gmra.mxu0 %v1250
        %v1377 = vpop.f32.mrf.mxu0
        %v1378 = vadd.f32 0.0, %v1377
        %1379 = vmatmul.f32.gmra.mxu0 %v1253
        %v1380 = vpop.f32.mrf.mxu0
        %v1381 = vadd.f32 0.0, %v1380
        %1382 = vmatmul.f32.gmra.mxu0 %v1256
        %v1383 = vpop.f32.mrf.mxu0
        %v1384 = vadd.f32 0.0, %v1383
        %1385 = vmatmul.f32.gmra.mxu0 %v1259
        %v1386 = vpop.f32.mrf.mxu0
        %v1387 = vadd.f32 0.0, %v1386
        %1388 = vmatmul.f32.gmra.mxu0 %v1262
        %v1389 = vpop.f32.mrf.mxu0
        %v1390 = vadd.f32 0.0, %v1389
        %1391 = vmatmul.f32.gmra.mxu0 %v1265
        %v1392 = vpop.f32.mrf.mxu0
        %v1393 = vadd.f32 0.0, %v1392
        %1394 = vmatmul.f32.gmra.mxu0 %v1268
        %v1395 = vpop.f32.mrf.mxu0
        %v1396 = vadd.f32 0.0, %v1395
        %1397 = vmatmul.f32.gmra.mxu0 %v1271
        %v1398 = vpop.f32.mrf.mxu0
        %v1399 = vadd.f32 0.0, %v1398
        %1400 = vmatmul.f32.gmra.mxu0 %v1274
        %v1401 = vpop.f32.mrf.mxu0
        %v1402 = vadd.f32 0.0, %v1401
        %1403 = vmatmul.f32.gmra.mxu0 %v1277
        %v1404 = vpop.f32.mrf.mxu0
        %v1405 = vadd.f32 0.0, %v1404
        %1406 = vmatmul.f32.gmra.mxu0 %v1280
        %v1407 = vpop.f32.mrf.mxu0
        %v1408 = vadd.f32 0.0, %v1407
        %1409 = vmatmul.f32.gmra.mxu0 %v1283
        %v1410 = vpop.f32.mrf.mxu0
        %v1411 = vadd.f32 0.0, %v1410
        %1412 = vmatmul.f32.gmra.mxu0 %v1286
        %v1413 = vpop.f32.mrf.mxu0
        %v1414 = vadd.f32 0.0, %v1413
        %1415 = vmatmul.f32.gmra.mxu0 %v1289
        %v1416 = vpop.f32.mrf.mxu0
        %v1417 = vadd.f32 0.0, %v1416
        %1418 = vmatmul.f32.gmra.mxu0 %v1292
        %v1419 = vpop.f32.mrf.mxu0
        %v1420 = vadd.f32 0.0, %v1419
        %1421 = vmatmul.f32.gmra.mxu0 %v1295
        %v1422 = vpop.f32.mrf.mxu0
        %v1423 = vadd.f32 0.0, %v1422
        %1424 = vmatmul.f32.gmra.mxu0 %v1298
        %v1425 = vpop.f32.mrf.mxu0
        %v1426 = vadd.f32 0.0, %v1425
        %1427 = vmatmul.f32.gmra.mxu0 %v1301
        %v1428 = vpop.f32.mrf.mxu0
        %v1429 = vadd.f32 0.0, %v1428
        %1430 = vmatmul.f32.gmra.mxu0 %v1304
        %v1431 = vpop.f32.mrf.mxu0
        %v1432 = vadd.f32 0.0, %v1431
        %1433 = vmatmul.f32.gmra.mxu0 %v1307
        %v1434 = vpop.f32.mrf.mxu0
        %v1435 = vadd.f32 0.0, %v1434
        %1436 = vmatmul.f32.gmra.mxu0 %v1310
        %v1437 = vpop.f32.mrf.mxu0
        %v1438 = vadd.f32 0.0, %v1437
        %1439 = vmatmul.f32.gmra.mxu0 %v1313
        %v1440 = vpop.f32.mrf.mxu0
        %v1441 = vadd.f32 0.0, %v1440
        %1442 = vmatmul.f32.gmra.mxu0 %v1316
        %v1443 = vpop.f32.mrf.mxu0
        %v1444 = vadd.f32 0.0, %v1443
        %1445 = vmatmul.f32.gmra.mxu0 %v1319
        %v1446 = vpop.f32.mrf.mxu0
        %v1447 = vadd.f32 0.0, %v1446
        %1448 = vmatmul.f32.gmra.mxu0 %v1322
        %v1449 = vpop.f32.mrf.mxu0
        %v1450 = vadd.f32 0.0, %v1449
        %1451 = vmatmul.f32.gmra.mxu0 %v1325
        %v1452 = vpop.f32.mrf.mxu0
        %v1453 = vadd.f32 0.0, %v1452
        %1454 = vmatmul.f32.gmra.mxu0 %v1328
        %v1455 = vpop.f32.mrf.mxu0
        %v1456 = vadd.f32 0.0, %v1455
        %1457 = vdwg.mxu0
        %v1458 = vadd.f32 %v1148, %v1351
        %v1459 = vadd.f32 %v1149, %v1354
        %v1460 = vadd.f32 %v1150, %v1357
        %v1461 = vadd.f32 %v1151, %v1360
        %v1462 = vadd.f32 %v1152, %v1363
        %v1463 = vadd.f32 %v1153, %v1366
        %v1464 = vadd.f32 %v1154, %v1369
        %v1465 = vadd.f32 %v1155, %v1372
        %v1466 = vadd.f32 %v1156, %v1375
        %v1467 = vadd.f32 %v1157, %v1378
        %v1468 = vadd.f32 %v1158, %v1381
        %v1469 = vadd.f32 %v1159, %v1384
        %v1470 = vadd.f32 %v1160, %v1387
        %v1471 = vadd.f32 %v1161, %v1390
        %v1472 = vadd.f32 %v1162, %v1393
        %v1473 = vadd.f32 %v1163, %v1396
        %v1474 = vadd.f32 %v1164, %v1399
        %v1475 = vadd.f32 %v1165, %v1402
        %v1476 = vadd.f32 %v1166, %v1405
        %v1477 = vadd.f32 %v1167, %v1408
        %v1478 = vadd.f32 %v1168, %v1411
        %v1479 = vadd.f32 %v1169, %v1414
        %v1480 = vadd.f32 %v1170, %v1417
        %v1481 = vadd.f32 %v1171, %v1420
        %v1482 = vadd.f32 %v1172, %v1423
        %v1483 = vadd.f32 %v1173, %v1426
        %v1484 = vadd.f32 %v1174, %v1429
        %v1485 = vadd.f32 %v1175, %v1432
        %v1486 = vadd.f32 %v1176, %v1435
        %v1487 = vadd.f32 %v1177, %v1438
        %v1488 = vadd.f32 %v1178, %v1441
        %v1489 = vadd.f32 %v1179, %v1444
        %v1490 = vadd.f32 %v1180, %v1447
        %v1491 = vadd.f32 %v1181, %v1450
        %v1492 = vadd.f32 %v1182, %v1453
        %v1493 = vadd.f32 %v1183, %v1456
        %v1494 = vld [vmem:[%s319 + $0x13] sm:$0xff]
        %v1495 = vld [vmem:[%s319 + $0x1b] sm:$0xff]
        %v1496 = vld [vmem:[%s319 + $0x23] sm:$0xff]
        %v1497 = vld [vmem:[%s319 + $0x2b] sm:$0xff]
        %v1498 = vld [vmem:[%s319 + $0x33] sm:$0xff]
        %v1499 = vld [vmem:[%s319 + $0x3b] sm:$0xff]
        %v1500 = vld [vmem:[%s319 + $0x43] sm:$0xff]
        %v1501 = vld [vmem:[%s319 + $0x4b] sm:$0xff]
        %v1502 = vld [vmem:[%s319 + $0x53] sm:$0xff]
        %v1503 = vld [vmem:[%s319 + $0x5b] sm:$0xff]
        %v1504 = vld [vmem:[%s319 + $0x63] sm:$0xff]
        %v1505 = vld [vmem:[%s319 + $0x6b] sm:$0xff]
        %v1506 = vld [vmem:[%s319 + $0x73] sm:$0xff]
        %v1507 = vld [vmem:[%s319 + $0x7b] sm:$0xff]
        %v1508 = vld [vmem:[%s319 + $0x83] sm:$0xff]
        %v1509 = vld [vmem:[%s319 + $0x8b] sm:$0xff]
        %v1510 = vld [vmem:[%s319 + $0x93] sm:$0xff]
        %v1511 = vld [vmem:[%s319 + $0x9b] sm:$0xff]
        %v1512 = vld [vmem:[%s319 + $0xa3] sm:$0xff]
        %v1513 = vld [vmem:[%s319 + $0xab] sm:$0xff]
        %v1514 = vld [vmem:[%s319 + $0xb3] sm:$0xff]
        %v1515 = vld [vmem:[%s319 + $0xbb] sm:$0xff]
        %v1516 = vld [vmem:[%s319 + $0xc3] sm:$0xff]
        %v1517 = vld [vmem:[%s319 + $0xcb] sm:$0xff]
        %v1518 = vld [vmem:[%s319 + $0xd3] sm:$0xff]
        %v1519 = vld [vmem:[%s319 + $0xdb] sm:$0xff]
        %v1520 = vld [vmem:[%s319 + $0xe3] sm:$0xff]
        %v1521 = vld [vmem:[%s319 + $0xeb] sm:$0xff]
        %v1522 = vld [vmem:[%s319 + $0xf3] sm:$0xff]
        %v1523 = vld [vmem:[%s319 + $0xfb] sm:$0xff]
        %v1524 = vld [vmem:[%s319 + $0x103] sm:$0xff]
        %v1525 = vld [vmem:[%s319 + $0x10b] sm:$0xff]
        %v1526 = vld [vmem:[%s319 + $0x113] sm:$0xff]
        %v1527 = vld [vmem:[%s319 + $0x11b] sm:$0xff]
        %v1528 = vld [vmem:[%s319 + $0x123] sm:$0xff]
        %v1529 = vld [vmem:[%s319 + $0x12b] sm:$0x3f]
        %s1530 = scalar_lea.vmem %s5, 16
        %v1531 = vld [vmem:[%s1530] sm:$0xf]
        %v1533 = vsel %vm400, %v1494, 0
        %v1536 = vsel %vm400, %v1495, 0
        %v1539 = vsel %vm400, %v1496, 0
        %v1542 = vsel %vm400, %v1497, 0
        %v1545 = vsel %vm400, %v1498, 0
        %v1548 = vsel %vm400, %v1499, 0
        %v1551 = vsel %vm400, %v1500, 0
        %v1554 = vsel %vm400, %v1501, 0
        %v1557 = vsel %vm400, %v1502, 0
        %v1560 = vsel %vm400, %v1503, 0
        %v1563 = vsel %vm400, %v1504, 0
        %v1566 = vsel %vm400, %v1505, 0
        %v1569 = vsel %vm400, %v1506, 0
        %v1572 = vsel %vm400, %v1507, 0
        %v1575 = vsel %vm400, %v1508, 0
        %v1578 = vsel %vm400, %v1509, 0
        %v1581 = vsel %vm400, %v1510, 0
        %v1584 = vsel %vm400, %v1511, 0
        %v1587 = vsel %vm400, %v1512, 0
        %v1590 = vsel %vm400, %v1513, 0
        %v1593 = vsel %vm400, %v1514, 0
        %v1596 = vsel %vm400, %v1515, 0
        %v1599 = vsel %vm400, %v1516, 0
        %v1602 = vsel %vm400, %v1517, 0
        %v1605 = vsel %vm400, %v1518, 0
        %v1608 = vsel %vm400, %v1519, 0
        %v1611 = vsel %vm400, %v1520, 0
        %v1614 = vsel %vm400, %v1521, 0
        %v1617 = vsel %vm400, %v1522, 0
        %v1620 = vsel %vm400, %v1523, 0
        %v1623 = vsel %vm400, %v1524, 0
        %v1626 = vsel %vm400, %v1525, 0
        %v1629 = vsel %vm400, %v1526, 0
        %v1632 = vsel %vm400, %v1527, 0
        %v1635 = vsel %vm400, %v1528, 0
        %v1638 = vsel %vm400, %v1529, 0
        %v1641 = vsel %vm509, %v1531, 0
        %1643 = vmatpush.msra.mxu0 0.0
        %1644 = vmatpush.msra.mxu0 0.0
        %1645 = vmatpush.msra.mxu0 0.0
        %1646 = vmatpush.msra.mxu0 0.0
        %1647 = vmatpush.msra.mxu0 0.0
        %1648 = vmatpush.msra.mxu0 0.0
        %1649 = vmatpush.msra.mxu0 0.0
        %1650 = vmatpush.msra.mxu0 0.0
        %1651 = vmatpush.msra.mxu0 0.0
        %1652 = vmatpush.msra.mxu0 0.0
        %1653 = vmatpush.msra.mxu0 0.0
        %1654 = vmatpush.msra.mxu0 0.0
        %1655 = vmatpush.msra.mxu0 0.0
        %1656 = vmatpush.msra.mxu0 0.0
        %1657 = vmatpush.msra.mxu0 0.0
        %1658 = vmatpush.msra.mxu0 %v1641
        %1659 = vmatmul.f32.gmra.mxu0 %v1533
        %v1660 = vpop.f32.mrf.mxu0
        %v1661 = vadd.f32 0.0, %v1660
        %1662 = vmatmul.f32.gmra.mxu0 %v1536
        %v1663 = vpop.f32.mrf.mxu0
        %v1664 = vadd.f32 0.0, %v1663
        %1665 = vmatmul.f32.gmra.mxu0 %v1539
        %v1666 = vpop.f32.mrf.mxu0
        %v1667 = vadd.f32 0.0, %v1666
        %1668 = vmatmul.f32.gmra.mxu0 %v1542
        %v1669 = vpop.f32.mrf.mxu0
        %v1670 = vadd.f32 0.0, %v1669
        %1671 = vmatmul.f32.gmra.mxu0 %v1545
        %v1672 = vpop.f32.mrf.mxu0
        %v1673 = vadd.f32 0.0, %v1672
        %1674 = vmatmul.f32.gmra.mxu0 %v1548
        %v1675 = vpop.f32.mrf.mxu0
        %v1676 = vadd.f32 0.0, %v1675
        %1677 = vmatmul.f32.gmra.mxu0 %v1551
        %v1678 = vpop.f32.mrf.mxu0
        %v1679 = vadd.f32 0.0, %v1678
        %1680 = vmatmul.f32.gmra.mxu0 %v1554
        %v1681 = vpop.f32.mrf.mxu0
        %v1682 = vadd.f32 0.0, %v1681
        %1683 = vmatmul.f32.gmra.mxu0 %v1557
        %v1684 = vpop.f32.mrf.mxu0
        %v1685 = vadd.f32 0.0, %v1684
        %1686 = vmatmul.f32.gmra.mxu0 %v1560
        %v1687 = vpop.f32.mrf.mxu0
        %v1688 = vadd.f32 0.0, %v1687
        %1689 = vmatmul.f32.gmra.mxu0 %v1563
        %v1690 = vpop.f32.mrf.mxu0
        %v1691 = vadd.f32 0.0, %v1690
        %1692 = vmatmul.f32.gmra.mxu0 %v1566
        %v1693 = vpop.f32.mrf.mxu0
        %v1694 = vadd.f32 0.0, %v1693
        %1695 = vmatmul.f32.gmra.mxu0 %v1569
        %v1696 = vpop.f32.mrf.mxu0
        %v1697 = vadd.f32 0.0, %v1696
        %1698 = vmatmul.f32.gmra.mxu0 %v1572
        %v1699 = vpop.f32.mrf.mxu0
        %v1700 = vadd.f32 0.0, %v1699
        %1701 = vmatmul.f32.gmra.mxu0 %v1575
        %v1702 = vpop.f32.mrf.mxu0
        %v1703 = vadd.f32 0.0, %v1702
        %1704 = vmatmul.f32.gmra.mxu0 %v1578
        %v1705 = vpop.f32.mrf.mxu0
        %v1706 = vadd.f32 0.0, %v1705
        %1707 = vmatmul.f32.gmra.mxu0 %v1581
        %v1708 = vpop.f32.mrf.mxu0
        %v1709 = vadd.f32 0.0, %v1708
        %1710 = vmatmul.f32.gmra.mxu0 %v1584
        %v1711 = vpop.f32.mrf.mxu0
        %v1712 = vadd.f32 0.0, %v1711
        %1713 = vmatmul.f32.gmra.mxu0 %v1587
        %v1714 = vpop.f32.mrf.mxu0
        %v1715 = vadd.f32 0.0, %v1714
        %1716 = vmatmul.f32.gmra.mxu0 %v1590
        %v1717 = vpop.f32.mrf.mxu0
        %v1718 = vadd.f32 0.0, %v1717
        %1719 = vmatmul.f32.gmra.mxu0 %v1593
        %v1720 = vpop.f32.mrf.mxu0
        %v1721 = vadd.f32 0.0, %v1720
        %1722 = vmatmul.f32.gmra.mxu0 %v1596
        %v1723 = vpop.f32.mrf.mxu0
        %v1724 = vadd.f32 0.0, %v1723
        %1725 = vmatmul.f32.gmra.mxu0 %v1599
        %v1726 = vpop.f32.mrf.mxu0
        %v1727 = vadd.f32 0.0, %v1726
        %1728 = vmatmul.f32.gmra.mxu0 %v1602
        %v1729 = vpop.f32.mrf.mxu0
        %v1730 = vadd.f32 0.0, %v1729
        %1731 = vmatmul.f32.gmra.mxu0 %v1605
        %v1732 = vpop.f32.mrf.mxu0
        %v1733 = vadd.f32 0.0, %v1732
        %1734 = vmatmul.f32.gmra.mxu0 %v1608
        %v1735 = vpop.f32.mrf.mxu0
        %v1736 = vadd.f32 0.0, %v1735
        %1737 = vmatmul.f32.gmra.mxu0 %v1611
        %v1738 = vpop.f32.mrf.mxu0
        %v1739 = vadd.f32 0.0, %v1738
        %1740 = vmatmul.f32.gmra.mxu0 %v1614
        %v1741 = vpop.f32.mrf.mxu0
        %v1742 = vadd.f32 0.0, %v1741
        %1743 = vmatmul.f32.gmra.mxu0 %v1617
        %v1744 = vpop.f32.mrf.mxu0
        %v1745 = vadd.f32 0.0, %v1744
        %1746 = vmatmul.f32.gmra.mxu0 %v1620
        %v1747 = vpop.f32.mrf.mxu0
        %v1748 = vadd.f32 0.0, %v1747
        %1749 = vmatmul.f32.gmra.mxu0 %v1623
        %v1750 = vpop.f32.mrf.mxu0
        %v1751 = vadd.f32 0.0, %v1750
        %1752 = vmatmul.f32.gmra.mxu0 %v1626
        %v1753 = vpop.f32.mrf.mxu0
        %v1754 = vadd.f32 0.0, %v1753
        %1755 = vmatmul.f32.gmra.mxu0 %v1629
        %v1756 = vpop.f32.mrf.mxu0
        %v1757 = vadd.f32 0.0, %v1756
        %1758 = vmatmul.f32.gmra.mxu0 %v1632
        %v1759 = vpop.f32.mrf.mxu0
        %v1760 = vadd.f32 0.0, %v1759
        %1761 = vmatmul.f32.gmra.mxu0 %v1635
        %v1762 = vpop.f32.mrf.mxu0
        %v1763 = vadd.f32 0.0, %v1762
        %1764 = vmatmul.f32.gmra.mxu0 %v1638
        %v1765 = vpop.f32.mrf.mxu0
        %v1766 = vadd.f32 0.0, %v1765
        %1767 = vdwg.mxu0
        %v1768 = vadd.f32 %v1458, %v1661
        %v1769 = vadd.f32 %v1459, %v1664
        %v1770 = vadd.f32 %v1460, %v1667
        %v1771 = vadd.f32 %v1461, %v1670
        %v1772 = vadd.f32 %v1462, %v1673
        %v1773 = vadd.f32 %v1463, %v1676
        %v1774 = vadd.f32 %v1464, %v1679
        %v1775 = vadd.f32 %v1465, %v1682
        %v1776 = vadd.f32 %v1466, %v1685
        %v1777 = vadd.f32 %v1467, %v1688
        %v1778 = vadd.f32 %v1468, %v1691
        %v1779 = vadd.f32 %v1469, %v1694
        %v1780 = vadd.f32 %v1470, %v1697
        %v1781 = vadd.f32 %v1471, %v1700
        %v1782 = vadd.f32 %v1472, %v1703
        %v1783 = vadd.f32 %v1473, %v1706
        %v1784 = vadd.f32 %v1474, %v1709
        %v1785 = vadd.f32 %v1475, %v1712
        %v1786 = vadd.f32 %v1476, %v1715
        %v1787 = vadd.f32 %v1477, %v1718
        %v1788 = vadd.f32 %v1478, %v1721
        %v1789 = vadd.f32 %v1479, %v1724
        %v1790 = vadd.f32 %v1480, %v1727
        %v1791 = vadd.f32 %v1481, %v1730
        %v1792 = vadd.f32 %v1482, %v1733
        %v1793 = vadd.f32 %v1483, %v1736
        %v1794 = vadd.f32 %v1484, %v1739
        %v1795 = vadd.f32 %v1485, %v1742
        %v1796 = vadd.f32 %v1486, %v1745
        %v1797 = vadd.f32 %v1487, %v1748
        %v1798 = vadd.f32 %v1488, %v1751
        %v1799 = vadd.f32 %v1489, %v1754
        %v1800 = vadd.f32 %v1490, %v1757
        %v1801 = vadd.f32 %v1491, %v1760
        %v1802 = vadd.f32 %v1492, %v1763
        %v1803 = vadd.f32 %v1493, %v1766
        %v1804 = vld [vmem:[%s319 + $0x14] sm:$0xff]
        %v1805 = vld [vmem:[%s319 + $0x1c] sm:$0xff]
        %v1806 = vld [vmem:[%s319 + $0x24] sm:$0xff]
        %v1807 = vld [vmem:[%s319 + $0x2c] sm:$0xff]
        %v1808 = vld [vmem:[%s319 + $0x34] sm:$0xff]
        %v1809 = vld [vmem:[%s319 + $0x3c] sm:$0xff]
        %v1810 = vld [vmem:[%s319 + $0x44] sm:$0xff]
        %v1811 = vld [vmem:[%s319 + $0x4c] sm:$0xff]
        %v1812 = vld [vmem:[%s319 + $0x54] sm:$0xff]
        %v1813 = vld [vmem:[%s319 + $0x5c] sm:$0xff]
        %v1814 = vld [vmem:[%s319 + $0x64] sm:$0xff]
        %v1815 = vld [vmem:[%s319 + $0x6c] sm:$0xff]
        %v1816 = vld [vmem:[%s319 + $0x74] sm:$0xff]
        %v1817 = vld [vmem:[%s319 + $0x7c] sm:$0xff]
        %v1818 = vld [vmem:[%s319 + $0x84] sm:$0xff]
        %v1819 = vld [vmem:[%s319 + $0x8c] sm:$0xff]
        %v1820 = vld [vmem:[%s319 + $0x94] sm:$0xff]
        %v1821 = vld [vmem:[%s319 + $0x9c] sm:$0xff]
        %v1822 = vld [vmem:[%s319 + $0xa4] sm:$0xff]
        %v1823 = vld [vmem:[%s319 + $0xac] sm:$0xff]
        %v1824 = vld [vmem:[%s319 + $0xb4] sm:$0xff]
        %v1825 = vld [vmem:[%s319 + $0xbc] sm:$0xff]
        %v1826 = vld [vmem:[%s319 + $0xc4] sm:$0xff]
        %v1827 = vld [vmem:[%s319 + $0xcc] sm:$0xff]
        %v1828 = vld [vmem:[%s319 + $0xd4] sm:$0xff]
        %v1829 = vld [vmem:[%s319 + $0xdc] sm:$0xff]
        %v1830 = vld [vmem:[%s319 + $0xe4] sm:$0xff]
        %v1831 = vld [vmem:[%s319 + $0xec] sm:$0xff]
        %v1832 = vld [vmem:[%s319 + $0xf4] sm:$0xff]
        %v1833 = vld [vmem:[%s319 + $0xfc] sm:$0xff]
        %v1834 = vld [vmem:[%s319 + $0x104] sm:$0xff]
        %v1835 = vld [vmem:[%s319 + $0x10c] sm:$0xff]
        %v1836 = vld [vmem:[%s319 + $0x114] sm:$0xff]
        %v1837 = vld [vmem:[%s319 + $0x11c] sm:$0xff]
        %v1838 = vld [vmem:[%s319 + $0x124] sm:$0xff]
        %v1839 = vld [vmem:[%s319 + $0x12c] sm:$0x3f]
        %s1840 = scalar_lea.vmem %s5, 20
        %v1841 = vld [vmem:[%s1840] sm:$0xf]
        %v1843 = vsel %vm400, %v1804, 0
        %v1846 = vsel %vm400, %v1805, 0
        %v1849 = vsel %vm400, %v1806, 0
        %v1852 = vsel %vm400, %v1807, 0
        %v1855 = vsel %vm400, %v1808, 0
        %v1858 = vsel %vm400, %v1809, 0
        %v1861 = vsel %vm400, %v1810, 0
        %v1864 = vsel %vm400, %v1811, 0
        %v1867 = vsel %vm400, %v1812, 0
        %v1870 = vsel %vm400, %v1813, 0
        %v1873 = vsel %vm400, %v1814, 0
        %v1876 = vsel %vm400, %v1815, 0
        %v1879 = vsel %vm400, %v1816, 0
        %v1882 = vsel %vm400, %v1817, 0
        %v1885 = vsel %vm400, %v1818, 0
        %v1888 = vsel %vm400, %v1819, 0
        %v1891 = vsel %vm400, %v1820, 0
        %v1894 = vsel %vm400, %v1821, 0
        %v1897 = vsel %vm400, %v1822, 0
        %v1900 = vsel %vm400, %v1823, 0
        %v1903 = vsel %vm400, %v1824, 0
        %v1906 = vsel %vm400, %v1825, 0
        %v1909 = vsel %vm400, %v1826, 0
        %v1912 = vsel %vm400, %v1827, 0
        %v1915 = vsel %vm400, %v1828, 0
        %v1918 = vsel %vm400, %v1829, 0
        %v1921 = vsel %vm400, %v1830, 0
        %v1924 = vsel %vm400, %v1831, 0
        %v1927 = vsel %vm400, %v1832, 0
        %v1930 = vsel %vm400, %v1833, 0
        %v1933 = vsel %vm400, %v1834, 0
        %v1936 = vsel %vm400, %v1835, 0
        %v1939 = vsel %vm400, %v1836, 0
        %v1942 = vsel %vm400, %v1837, 0
        %v1945 = vsel %vm400, %v1838, 0
        %v1948 = vsel %vm400, %v1839, 0
        %v1951 = vsel %vm509, %v1841, 0
        %1953 = vmatpush.msra.mxu0 0.0
        %1954 = vmatpush.msra.mxu0 0.0
        %1955 = vmatpush.msra.mxu0 0.0
        %1956 = vmatpush.msra.mxu0 0.0
        %1957 = vmatpush.msra.mxu0 0.0
        %1958 = vmatpush.msra.mxu0 0.0
        %1959 = vmatpush.msra.mxu0 0.0
        %1960 = vmatpush.msra.mxu0 0.0
        %1961 = vmatpush.msra.mxu0 0.0
        %1962 = vmatpush.msra.mxu0 0.0
        %1963 = vmatpush.msra.mxu0 0.0
        %1964 = vmatpush.msra.mxu0 0.0
        %1965 = vmatpush.msra.mxu0 0.0
        %1966 = vmatpush.msra.mxu0 0.0
        %1967 = vmatpush.msra.mxu0 0.0
        %1968 = vmatpush.msra.mxu0 %v1951
        %1969 = vmatmul.f32.gmra.mxu0 %v1843
        %v1970 = vpop.f32.mrf.mxu0
        %v1971 = vadd.f32 0.0, %v1970
        %1972 = vmatmul.f32.gmra.mxu0 %v1846
        %v1973 = vpop.f32.mrf.mxu0
        %v1974 = vadd.f32 0.0, %v1973
        %1975 = vmatmul.f32.gmra.mxu0 %v1849
        %v1976 = vpop.f32.mrf.mxu0
        %v1977 = vadd.f32 0.0, %v1976
        %1978 = vmatmul.f32.gmra.mxu0 %v1852
        %v1979 = vpop.f32.mrf.mxu0
        %v1980 = vadd.f32 0.0, %v1979
        %1981 = vmatmul.f32.gmra.mxu0 %v1855
        %v1982 = vpop.f32.mrf.mxu0
        %v1983 = vadd.f32 0.0, %v1982
        %1984 = vmatmul.f32.gmra.mxu0 %v1858
        %v1985 = vpop.f32.mrf.mxu0
        %v1986 = vadd.f32 0.0, %v1985
        %1987 = vmatmul.f32.gmra.mxu0 %v1861
        %v1988 = vpop.f32.mrf.mxu0
        %v1989 = vadd.f32 0.0, %v1988
        %1990 = vmatmul.f32.gmra.mxu0 %v1864
        %v1991 = vpop.f32.mrf.mxu0
        %v1992 = vadd.f32 0.0, %v1991
        %1993 = vmatmul.f32.gmra.mxu0 %v1867
        %v1994 = vpop.f32.mrf.mxu0
        %v1995 = vadd.f32 0.0, %v1994
        %1996 = vmatmul.f32.gmra.mxu0 %v1870
        %v1997 = vpop.f32.mrf.mxu0
        %v1998 = vadd.f32 0.0, %v1997
        %1999 = vmatmul.f32.gmra.mxu0 %v1873
        %v2000 = vpop.f32.mrf.mxu0
        %v2001 = vadd.f32 0.0, %v2000
        %2002 = vmatmul.f32.gmra.mxu0 %v1876
        %v2003 = vpop.f32.mrf.mxu0
        %v2004 = vadd.f32 0.0, %v2003
        %2005 = vmatmul.f32.gmra.mxu0 %v1879
        %v2006 = vpop.f32.mrf.mxu0
        %v2007 = vadd.f32 0.0, %v2006
        %2008 = vmatmul.f32.gmra.mxu0 %v1882
        %v2009 = vpop.f32.mrf.mxu0
        %v2010 = vadd.f32 0.0, %v2009
        %2011 = vmatmul.f32.gmra.mxu0 %v1885
        %v2012 = vpop.f32.mrf.mxu0
        %v2013 = vadd.f32 0.0, %v2012
        %2014 = vmatmul.f32.gmra.mxu0 %v1888
        %v2015 = vpop.f32.mrf.mxu0
        %v2016 = vadd.f32 0.0, %v2015
        %2017 = vmatmul.f32.gmra.mxu0 %v1891
        %v2018 = vpop.f32.mrf.mxu0
        %v2019 = vadd.f32 0.0, %v2018
        %2020 = vmatmul.f32.gmra.mxu0 %v1894
        %v2021 = vpop.f32.mrf.mxu0
        %v2022 = vadd.f32 0.0, %v2021
        %2023 = vmatmul.f32.gmra.mxu0 %v1897
        %v2024 = vpop.f32.mrf.mxu0
        %v2025 = vadd.f32 0.0, %v2024
        %2026 = vmatmul.f32.gmra.mxu0 %v1900
        %v2027 = vpop.f32.mrf.mxu0
        %v2028 = vadd.f32 0.0, %v2027
        %2029 = vmatmul.f32.gmra.mxu0 %v1903
        %v2030 = vpop.f32.mrf.mxu0
        %v2031 = vadd.f32 0.0, %v2030
        %2032 = vmatmul.f32.gmra.mxu0 %v1906
        %v2033 = vpop.f32.mrf.mxu0
        %v2034 = vadd.f32 0.0, %v2033
        %2035 = vmatmul.f32.gmra.mxu0 %v1909
        %v2036 = vpop.f32.mrf.mxu0
        %v2037 = vadd.f32 0.0, %v2036
        %2038 = vmatmul.f32.gmra.mxu0 %v1912
        %v2039 = vpop.f32.mrf.mxu0
        %v2040 = vadd.f32 0.0, %v2039
        %2041 = vmatmul.f32.gmra.mxu0 %v1915
        %v2042 = vpop.f32.mrf.mxu0
        %v2043 = vadd.f32 0.0, %v2042
        %2044 = vmatmul.f32.gmra.mxu0 %v1918
        %v2045 = vpop.f32.mrf.mxu0
        %v2046 = vadd.f32 0.0, %v2045
        %2047 = vmatmul.f32.gmra.mxu0 %v1921
        %v2048 = vpop.f32.mrf.mxu0
        %v2049 = vadd.f32 0.0, %v2048
        %2050 = vmatmul.f32.gmra.mxu0 %v1924
        %v2051 = vpop.f32.mrf.mxu0
        %v2052 = vadd.f32 0.0, %v2051
        %2053 = vmatmul.f32.gmra.mxu0 %v1927
        %v2054 = vpop.f32.mrf.mxu0
        %v2055 = vadd.f32 0.0, %v2054
        %2056 = vmatmul.f32.gmra.mxu0 %v1930
        %v2057 = vpop.f32.mrf.mxu0
        %v2058 = vadd.f32 0.0, %v2057
        %2059 = vmatmul.f32.gmra.mxu0 %v1933
        %v2060 = vpop.f32.mrf.mxu0
        %v2061 = vadd.f32 0.0, %v2060
        %2062 = vmatmul.f32.gmra.mxu0 %v1936
        %v2063 = vpop.f32.mrf.mxu0
        %v2064 = vadd.f32 0.0, %v2063
        %2065 = vmatmul.f32.gmra.mxu0 %v1939
        %v2066 = vpop.f32.mrf.mxu0
        %v2067 = vadd.f32 0.0, %v2066
        %2068 = vmatmul.f32.gmra.mxu0 %v1942
        %v2069 = vpop.f32.mrf.mxu0
        %v2070 = vadd.f32 0.0, %v2069
        %2071 = vmatmul.f32.gmra.mxu0 %v1945
        %v2072 = vpop.f32.mrf.mxu0
        %v2073 = vadd.f32 0.0, %v2072
        %2074 = vmatmul.f32.gmra.mxu0 %v1948
        %v2075 = vpop.f32.mrf.mxu0
        %v2076 = vadd.f32 0.0, %v2075
        %2077 = vdwg.mxu0
        %v2078 = vadd.f32 %v1768, %v1971
        %v2079 = vadd.f32 %v1769, %v1974
        %v2080 = vadd.f32 %v1770, %v1977
        %v2081 = vadd.f32 %v1771, %v1980
        %v2082 = vadd.f32 %v1772, %v1983
        %v2083 = vadd.f32 %v1773, %v1986
        %v2084 = vadd.f32 %v1774, %v1989
        %v2085 = vadd.f32 %v1775, %v1992
        %v2086 = vadd.f32 %v1776, %v1995
        %v2087 = vadd.f32 %v1777, %v1998
        %v2088 = vadd.f32 %v1778, %v2001
        %v2089 = vadd.f32 %v1779, %v2004
        %v2090 = vadd.f32 %v1780, %v2007
        %v2091 = vadd.f32 %v1781, %v2010
        %v2092 = vadd.f32 %v1782, %v2013
        %v2093 = vadd.f32 %v1783, %v2016
        %v2094 = vadd.f32 %v1784, %v2019
        %v2095 = vadd.f32 %v1785, %v2022
        %v2096 = vadd.f32 %v1786, %v2025
        %v2097 = vadd.f32 %v1787, %v2028
        %v2098 = vadd.f32 %v1788, %v2031
        %v2099 = vadd.f32 %v1789, %v2034
        %v2100 = vadd.f32 %v1790, %v2037
        %v2101 = vadd.f32 %v1791, %v2040
        %v2102 = vadd.f32 %v1792, %v2043
        %v2103 = vadd.f32 %v1793, %v2046
        %v2104 = vadd.f32 %v1794, %v2049
        %v2105 = vadd.f32 %v1795, %v2052
        %v2106 = vadd.f32 %v1796, %v2055
        %v2107 = vadd.f32 %v1797, %v2058
        %v2108 = vadd.f32 %v1798, %v2061
        %v2109 = vadd.f32 %v1799, %v2064
        %v2110 = vadd.f32 %v1800, %v2067
        %v2111 = vadd.f32 %v1801, %v2070
        %v2112 = vadd.f32 %v1802, %v2073
        %v2113 = vadd.f32 %v1803, %v2076
        %v2114 = vld [vmem:[%s319 + $0x24] sm:$0xff]
        %v2115 = vld [vmem:[%s319 + $0x2c] sm:$0xff]
        %v2116 = vld [vmem:[%s319 + $0x34] sm:$0xff]
        %v2117 = vld [vmem:[%s319 + $0x3c] sm:$0xff]
        %v2118 = vld [vmem:[%s319 + $0x44] sm:$0xff]
        %v2119 = vld [vmem:[%s319 + $0x4c] sm:$0xff]
        %v2120 = vld [vmem:[%s319 + $0x54] sm:$0xff]
        %v2121 = vld [vmem:[%s319 + $0x5c] sm:$0xff]
        %v2122 = vld [vmem:[%s319 + $0x64] sm:$0xff]
        %v2123 = vld [vmem:[%s319 + $0x6c] sm:$0xff]
        %v2124 = vld [vmem:[%s319 + $0x74] sm:$0xff]
        %v2125 = vld [vmem:[%s319 + $0x7c] sm:$0xff]
        %v2126 = vld [vmem:[%s319 + $0x84] sm:$0xff]
        %v2127 = vld [vmem:[%s319 + $0x8c] sm:$0xff]
        %v2128 = vld [vmem:[%s319 + $0x94] sm:$0xff]
        %v2129 = vld [vmem:[%s319 + $0x9c] sm:$0xff]
        %v2130 = vld [vmem:[%s319 + $0xa4] sm:$0xff]
        %v2131 = vld [vmem:[%s319 + $0xac] sm:$0xff]
        %v2132 = vld [vmem:[%s319 + $0xb4] sm:$0xff]
        %v2133 = vld [vmem:[%s319 + $0xbc] sm:$0xff]
        %v2134 = vld [vmem:[%s319 + $0xc4] sm:$0xff]
        %v2135 = vld [vmem:[%s319 + $0xcc] sm:$0xff]
        %v2136 = vld [vmem:[%s319 + $0xd4] sm:$0xff]
        %v2137 = vld [vmem:[%s319 + $0xdc] sm:$0xff]
        %v2138 = vld [vmem:[%s319 + $0xe4] sm:$0xff]
        %v2139 = vld [vmem:[%s319 + $0xec] sm:$0xff]
        %v2140 = vld [vmem:[%s319 + $0xf4] sm:$0xff]
        %v2141 = vld [vmem:[%s319 + $0xfc] sm:$0xff]
        %v2142 = vld [vmem:[%s319 + $0x104] sm:$0xff]
        %v2143 = vld [vmem:[%s319 + $0x10c] sm:$0xff]
        %v2144 = vld [vmem:[%s319 + $0x114] sm:$0xff]
        %v2145 = vld [vmem:[%s319 + $0x11c] sm:$0xff]
        %v2146 = vld [vmem:[%s319 + $0x124] sm:$0xff]
        %v2147 = vld [vmem:[%s319 + $0x12c] sm:$0xff]
        %v2148 = vld [vmem:[%s319 + $0x134] sm:$0xff]
        %v2149 = vld [vmem:[%s319 + $0x13c] sm:$0x3f]
        %s2150 = scalar_lea.vmem %s5, 24
        %v2151 = vld [vmem:[%s2150] sm:$0xf]
        %v2153 = vsel %vm400, %v2114, 0
        %v2156 = vsel %vm400, %v2115, 0
        %v2159 = vsel %vm400, %v2116, 0
        %v2162 = vsel %vm400, %v2117, 0
        %v2165 = vsel %vm400, %v2118, 0
        %v2168 = vsel %vm400, %v2119, 0
        %v2171 = vsel %vm400, %v2120, 0
        %v2174 = vsel %vm400, %v2121, 0
        %v2177 = vsel %vm400, %v2122, 0
        %v2180 = vsel %vm400, %v2123, 0
        %v2183 = vsel %vm400, %v2124, 0
        %v2186 = vsel %vm400, %v2125, 0
        %v2189 = vsel %vm400, %v2126, 0
        %v2192 = vsel %vm400, %v2127, 0
        %v2195 = vsel %vm400, %v2128, 0
        %v2198 = vsel %vm400, %v2129, 0
        %v2201 = vsel %vm400, %v2130, 0
        %v2204 = vsel %vm400, %v2131, 0
        %v2207 = vsel %vm400, %v2132, 0
        %v2210 = vsel %vm400, %v2133, 0
        %v2213 = vsel %vm400, %v2134, 0
        %v2216 = vsel %vm400, %v2135, 0
        %v2219 = vsel %vm400, %v2136, 0
        %v2222 = vsel %vm400, %v2137, 0
        %v2225 = vsel %vm400, %v2138, 0
        %v2228 = vsel %vm400, %v2139, 0
        %v2231 = vsel %vm400, %v2140, 0
        %v2234 = vsel %vm400, %v2141, 0
        %v2237 = vsel %vm400, %v2142, 0
        %v2240 = vsel %vm400, %v2143, 0
        %v2243 = vsel %vm400, %v2144, 0
        %v2246 = vsel %vm400, %v2145, 0
        %v2249 = vsel %vm400, %v2146, 0
        %v2252 = vsel %vm400, %v2147, 0
        %v2255 = vsel %vm400, %v2148, 0
        %v2258 = vsel %vm400, %v2149, 0
        %v2261 = vsel %vm509, %v2151, 0
        %2263 = vmatpush.msra.mxu0 0.0
        %2264 = vmatpush.msra.mxu0 0.0
        %2265 = vmatpush.msra.mxu0 0.0
        %2266 = vmatpush.msra.mxu0 0.0
        %2267 = vmatpush.msra.mxu0 0.0
        %2268 = vmatpush.msra.mxu0 0.0
        %2269 = vmatpush.msra.mxu0 0.0
        %2270 = vmatpush.msra.mxu0 0.0
        %2271 = vmatpush.msra.mxu0 0.0
        %2272 = vmatpush.msra.mxu0 0.0
        %2273 = vmatpush.msra.mxu0 0.0
        %2274 = vmatpush.msra.mxu0 0.0
        %2275 = vmatpush.msra.mxu0 0.0
        %2276 = vmatpush.msra.mxu0 0.0
        %2277 = vmatpush.msra.mxu0 0.0
        %2278 = vmatpush.msra.mxu0 %v2261
        %2279 = vmatmul.f32.gmra.mxu0 %v2153
        %v2280 = vpop.f32.mrf.mxu0
        %v2281 = vadd.f32 0.0, %v2280
        %2282 = vmatmul.f32.gmra.mxu0 %v2156
        %v2283 = vpop.f32.mrf.mxu0
        %v2284 = vadd.f32 0.0, %v2283
        %2285 = vmatmul.f32.gmra.mxu0 %v2159
        %v2286 = vpop.f32.mrf.mxu0
        %v2287 = vadd.f32 0.0, %v2286
        %2288 = vmatmul.f32.gmra.mxu0 %v2162
        %v2289 = vpop.f32.mrf.mxu0
        %v2290 = vadd.f32 0.0, %v2289
        %2291 = vmatmul.f32.gmra.mxu0 %v2165
        %v2292 = vpop.f32.mrf.mxu0
        %v2293 = vadd.f32 0.0, %v2292
        %2294 = vmatmul.f32.gmra.mxu0 %v2168
        %v2295 = vpop.f32.mrf.mxu0
        %v2296 = vadd.f32 0.0, %v2295
        %2297 = vmatmul.f32.gmra.mxu0 %v2171
        %v2298 = vpop.f32.mrf.mxu0
        %v2299 = vadd.f32 0.0, %v2298
        %2300 = vmatmul.f32.gmra.mxu0 %v2174
        %v2301 = vpop.f32.mrf.mxu0
        %v2302 = vadd.f32 0.0, %v2301
        %2303 = vmatmul.f32.gmra.mxu0 %v2177
        %v2304 = vpop.f32.mrf.mxu0
        %v2305 = vadd.f32 0.0, %v2304
        %2306 = vmatmul.f32.gmra.mxu0 %v2180
        %v2307 = vpop.f32.mrf.mxu0
        %v2308 = vadd.f32 0.0, %v2307
        %2309 = vmatmul.f32.gmra.mxu0 %v2183
        %v2310 = vpop.f32.mrf.mxu0
        %v2311 = vadd.f32 0.0, %v2310
        %2312 = vmatmul.f32.gmra.mxu0 %v2186
        %v2313 = vpop.f32.mrf.mxu0
        %v2314 = vadd.f32 0.0, %v2313
        %2315 = vmatmul.f32.gmra.mxu0 %v2189
        %v2316 = vpop.f32.mrf.mxu0
        %v2317 = vadd.f32 0.0, %v2316
        %2318 = vmatmul.f32.gmra.mxu0 %v2192
        %v2319 = vpop.f32.mrf.mxu0
        %v2320 = vadd.f32 0.0, %v2319
        %2321 = vmatmul.f32.gmra.mxu0 %v2195
        %v2322 = vpop.f32.mrf.mxu0
        %v2323 = vadd.f32 0.0, %v2322
        %2324 = vmatmul.f32.gmra.mxu0 %v2198
        %v2325 = vpop.f32.mrf.mxu0
        %v2326 = vadd.f32 0.0, %v2325
        %2327 = vmatmul.f32.gmra.mxu0 %v2201
        %v2328 = vpop.f32.mrf.mxu0
        %v2329 = vadd.f32 0.0, %v2328
        %2330 = vmatmul.f32.gmra.mxu0 %v2204
        %v2331 = vpop.f32.mrf.mxu0
        %v2332 = vadd.f32 0.0, %v2331
        %2333 = vmatmul.f32.gmra.mxu0 %v2207
        %v2334 = vpop.f32.mrf.mxu0
        %v2335 = vadd.f32 0.0, %v2334
        %2336 = vmatmul.f32.gmra.mxu0 %v2210
        %v2337 = vpop.f32.mrf.mxu0
        %v2338 = vadd.f32 0.0, %v2337
        %2339 = vmatmul.f32.gmra.mxu0 %v2213
        %v2340 = vpop.f32.mrf.mxu0
        %v2341 = vadd.f32 0.0, %v2340
        %2342 = vmatmul.f32.gmra.mxu0 %v2216
        %v2343 = vpop.f32.mrf.mxu0
        %v2344 = vadd.f32 0.0, %v2343
        %2345 = vmatmul.f32.gmra.mxu0 %v2219
        %v2346 = vpop.f32.mrf.mxu0
        %v2347 = vadd.f32 0.0, %v2346
        %2348 = vmatmul.f32.gmra.mxu0 %v2222
        %v2349 = vpop.f32.mrf.mxu0
        %v2350 = vadd.f32 0.0, %v2349
        %2351 = vmatmul.f32.gmra.mxu0 %v2225
        %v2352 = vpop.f32.mrf.mxu0
        %v2353 = vadd.f32 0.0, %v2352
        %2354 = vmatmul.f32.gmra.mxu0 %v2228
        %v2355 = vpop.f32.mrf.mxu0
        %v2356 = vadd.f32 0.0, %v2355
        %2357 = vmatmul.f32.gmra.mxu0 %v2231
        %v2358 = vpop.f32.mrf.mxu0
        %v2359 = vadd.f32 0.0, %v2358
        %2360 = vmatmul.f32.gmra.mxu0 %v2234
        %v2361 = vpop.f32.mrf.mxu0
        %v2362 = vadd.f32 0.0, %v2361
        %2363 = vmatmul.f32.gmra.mxu0 %v2237
        %v2364 = vpop.f32.mrf.mxu0
        %v2365 = vadd.f32 0.0, %v2364
        %2366 = vmatmul.f32.gmra.mxu0 %v2240
        %v2367 = vpop.f32.mrf.mxu0
        %v2368 = vadd.f32 0.0, %v2367
        %2369 = vmatmul.f32.gmra.mxu0 %v2243
        %v2370 = vpop.f32.mrf.mxu0
        %v2371 = vadd.f32 0.0, %v2370
        %2372 = vmatmul.f32.gmra.mxu0 %v2246
        %v2373 = vpop.f32.mrf.mxu0
        %v2374 = vadd.f32 0.0, %v2373
        %2375 = vmatmul.f32.gmra.mxu0 %v2249
        %v2376 = vpop.f32.mrf.mxu0
        %v2377 = vadd.f32 0.0, %v2376
        %2378 = vmatmul.f32.gmra.mxu0 %v2252
        %v2379 = vpop.f32.mrf.mxu0
        %v2380 = vadd.f32 0.0, %v2379
        %2381 = vmatmul.f32.gmra.mxu0 %v2255
        %v2382 = vpop.f32.mrf.mxu0
        %v2383 = vadd.f32 0.0, %v2382
        %2384 = vmatmul.f32.gmra.mxu0 %v2258
        %v2385 = vpop.f32.mrf.mxu0
        %v2386 = vadd.f32 0.0, %v2385
        %2387 = vdwg.mxu0
        %v2388 = vadd.f32 %v2078, %v2281
        %v2389 = vadd.f32 %v2079, %v2284
        %v2390 = vadd.f32 %v2080, %v2287
        %v2391 = vadd.f32 %v2081, %v2290
        %v2392 = vadd.f32 %v2082, %v2293
        %v2393 = vadd.f32 %v2083, %v2296
        %v2394 = vadd.f32 %v2084, %v2299
        %v2395 = vadd.f32 %v2085, %v2302
        %v2396 = vadd.f32 %v2086, %v2305
        %v2397 = vadd.f32 %v2087, %v2308
        %v2398 = vadd.f32 %v2088, %v2311
        %v2399 = vadd.f32 %v2089, %v2314
        %v2400 = vadd.f32 %v2090, %v2317
        %v2401 = vadd.f32 %v2091, %v2320
        %v2402 = vadd.f32 %v2092, %v2323
        %v2403 = vadd.f32 %v2093, %v2326
        %v2404 = vadd.f32 %v2094, %v2329
        %v2405 = vadd.f32 %v2095, %v2332
        %v2406 = vadd.f32 %v2096, %v2335
        %v2407 = vadd.f32 %v2097, %v2338
        %v2408 = vadd.f32 %v2098, %v2341
        %v2409 = vadd.f32 %v2099, %v2344
        %v2410 = vadd.f32 %v2100, %v2347
        %v2411 = vadd.f32 %v2101, %v2350
        %v2412 = vadd.f32 %v2102, %v2353
        %v2413 = vadd.f32 %v2103, %v2356
        %v2414 = vadd.f32 %v2104, %v2359
        %v2415 = vadd.f32 %v2105, %v2362
        %v2416 = vadd.f32 %v2106, %v2365
        %v2417 = vadd.f32 %v2107, %v2368
        %v2418 = vadd.f32 %v2108, %v2371
        %v2419 = vadd.f32 %v2109, %v2374
        %v2420 = vadd.f32 %v2110, %v2377
        %v2421 = vadd.f32 %v2111, %v2380
        %v2422 = vadd.f32 %v2112, %v2383
        %v2423 = vadd.f32 %v2113, %v2386
        %v2424 = vld [vmem:[%s319 + $0x25] sm:$0xff]
        %v2425 = vld [vmem:[%s319 + $0x2d] sm:$0xff]
        %v2426 = vld [vmem:[%s319 + $0x35] sm:$0xff]
        %v2427 = vld [vmem:[%s319 + $0x3d] sm:$0xff]
        %v2428 = vld [vmem:[%s319 + $0x45] sm:$0xff]
        %v2429 = vld [vmem:[%s319 + $0x4d] sm:$0xff]
        %v2430 = vld [vmem:[%s319 + $0x55] sm:$0xff]
        %v2431 = vld [vmem:[%s319 + $0x5d] sm:$0xff]
        %v2432 = vld [vmem:[%s319 + $0x65] sm:$0xff]
        %v2433 = vld [vmem:[%s319 + $0x6d] sm:$0xff]
        %v2434 = vld [vmem:[%s319 + $0x75] sm:$0xff]
        %v2435 = vld [vmem:[%s319 + $0x7d] sm:$0xff]
        %v2436 = vld [vmem:[%s319 + $0x85] sm:$0xff]
        %v2437 = vld [vmem:[%s319 + $0x8d] sm:$0xff]
        %v2438 = vld [vmem:[%s319 + $0x95] sm:$0xff]
        %v2439 = vld [vmem:[%s319 + $0x9d] sm:$0xff]
        %v2440 = vld [vmem:[%s319 + $0xa5] sm:$0xff]
        %v2441 = vld [vmem:[%s319 + $0xad] sm:$0xff]
        %v2442 = vld [vmem:[%s319 + $0xb5] sm:$0xff]
        %v2443 = vld [vmem:[%s319 + $0xbd] sm:$0xff]
        %v2444 = vld [vmem:[%s319 + $0xc5] sm:$0xff]
        %v2445 = vld [vmem:[%s319 + $0xcd] sm:$0xff]
        %v2446 = vld [vmem:[%s319 + $0xd5] sm:$0xff]
        %v2447 = vld [vmem:[%s319 + $0xdd] sm:$0xff]
        %v2448 = vld [vmem:[%s319 + $0xe5] sm:$0xff]
        %v2449 = vld [vmem:[%s319 + $0xed] sm:$0xff]
        %v2450 = vld [vmem:[%s319 + $0xf5] sm:$0xff]
        %v2451 = vld [vmem:[%s319 + $0xfd] sm:$0xff]
        %v2452 = vld [vmem:[%s319 + $0x105] sm:$0xff]
        %v2453 = vld [vmem:[%s319 + $0x10d] sm:$0xff]
        %v2454 = vld [vmem:[%s319 + $0x115] sm:$0xff]
        %v2455 = vld [vmem:[%s319 + $0x11d] sm:$0xff]
        %v2456 = vld [vmem:[%s319 + $0x125] sm:$0xff]
        %v2457 = vld [vmem:[%s319 + $0x12d] sm:$0xff]
        %v2458 = vld [vmem:[%s319 + $0x135] sm:$0xff]
        %v2459 = vld [vmem:[%s319 + $0x13d] sm:$0x3f]
        %s2460 = scalar_lea.vmem %s5, 28
        %v2461 = vld [vmem:[%s2460] sm:$0xf]
        %v2463 = vsel %vm400, %v2424, 0
        %v2466 = vsel %vm400, %v2425, 0
        %v2469 = vsel %vm400, %v2426, 0
        %v2472 = vsel %vm400, %v2427, 0
        %v2475 = vsel %vm400, %v2428, 0
        %v2478 = vsel %vm400, %v2429, 0
        %v2481 = vsel %vm400, %v2430, 0
        %v2484 = vsel %vm400, %v2431, 0
        %v2487 = vsel %vm400, %v2432, 0
        %v2490 = vsel %vm400, %v2433, 0
        %v2493 = vsel %vm400, %v2434, 0
        %v2496 = vsel %vm400, %v2435, 0
        %v2499 = vsel %vm400, %v2436, 0
        %v2502 = vsel %vm400, %v2437, 0
        %v2505 = vsel %vm400, %v2438, 0
        %v2508 = vsel %vm400, %v2439, 0
        %v2511 = vsel %vm400, %v2440, 0
        %v2514 = vsel %vm400, %v2441, 0
        %v2517 = vsel %vm400, %v2442, 0
        %v2520 = vsel %vm400, %v2443, 0
        %v2523 = vsel %vm400, %v2444, 0
        %v2526 = vsel %vm400, %v2445, 0
        %v2529 = vsel %vm400, %v2446, 0
        %v2532 = vsel %vm400, %v2447, 0
        %v2535 = vsel %vm400, %v2448, 0
        %v2538 = vsel %vm400, %v2449, 0
        %v2541 = vsel %vm400, %v2450, 0
        %v2544 = vsel %vm400, %v2451, 0
        %v2547 = vsel %vm400, %v2452, 0
        %v2550 = vsel %vm400, %v2453, 0
        %v2553 = vsel %vm400, %v2454, 0
        %v2556 = vsel %vm400, %v2455, 0
        %v2559 = vsel %vm400, %v2456, 0
        %v2562 = vsel %vm400, %v2457, 0
        %v2565 = vsel %vm400, %v2458, 0
        %v2568 = vsel %vm400, %v2459, 0
        %v2571 = vsel %vm509, %v2461, 0
        %2573 = vmatpush.msra.mxu0 0.0
        %2574 = vmatpush.msra.mxu0 0.0
        %2575 = vmatpush.msra.mxu0 0.0
        %2576 = vmatpush.msra.mxu0 0.0
        %2577 = vmatpush.msra.mxu0 0.0
        %2578 = vmatpush.msra.mxu0 0.0
        %2579 = vmatpush.msra.mxu0 0.0
        %2580 = vmatpush.msra.mxu0 0.0
        %2581 = vmatpush.msra.mxu0 0.0
        %2582 = vmatpush.msra.mxu0 0.0
        %2583 = vmatpush.msra.mxu0 0.0
        %2584 = vmatpush.msra.mxu0 0.0
        %2585 = vmatpush.msra.mxu0 0.0
        %2586 = vmatpush.msra.mxu0 0.0
        %2587 = vmatpush.msra.mxu0 0.0
        %2588 = vmatpush.msra.mxu0 %v2571
        %2589 = vmatmul.f32.gmra.mxu0 %v2463
        %v2590 = vpop.f32.mrf.mxu0
        %v2591 = vadd.f32 0.0, %v2590
        %2592 = vmatmul.f32.gmra.mxu0 %v2466
        %v2593 = vpop.f32.mrf.mxu0
        %v2594 = vadd.f32 0.0, %v2593
        %2595 = vmatmul.f32.gmra.mxu0 %v2469
        %v2596 = vpop.f32.mrf.mxu0
        %v2597 = vadd.f32 0.0, %v2596
        %2598 = vmatmul.f32.gmra.mxu0 %v2472
        %v2599 = vpop.f32.mrf.mxu0
        %v2600 = vadd.f32 0.0, %v2599
        %2601 = vmatmul.f32.gmra.mxu0 %v2475
        %v2602 = vpop.f32.mrf.mxu0
        %v2603 = vadd.f32 0.0, %v2602
        %2604 = vmatmul.f32.gmra.mxu0 %v2478
        %v2605 = vpop.f32.mrf.mxu0
        %v2606 = vadd.f32 0.0, %v2605
        %2607 = vmatmul.f32.gmra.mxu0 %v2481
        %v2608 = vpop.f32.mrf.mxu0
        %v2609 = vadd.f32 0.0, %v2608
        %2610 = vmatmul.f32.gmra.mxu0 %v2484
        %v2611 = vpop.f32.mrf.mxu0
        %v2612 = vadd.f32 0.0, %v2611
        %2613 = vmatmul.f32.gmra.mxu0 %v2487
        %v2614 = vpop.f32.mrf.mxu0
        %v2615 = vadd.f32 0.0, %v2614
        %2616 = vmatmul.f32.gmra.mxu0 %v2490
        %v2617 = vpop.f32.mrf.mxu0
        %v2618 = vadd.f32 0.0, %v2617
        %2619 = vmatmul.f32.gmra.mxu0 %v2493
        %v2620 = vpop.f32.mrf.mxu0
        %v2621 = vadd.f32 0.0, %v2620
        %2622 = vmatmul.f32.gmra.mxu0 %v2496
        %v2623 = vpop.f32.mrf.mxu0
        %v2624 = vadd.f32 0.0, %v2623
        %2625 = vmatmul.f32.gmra.mxu0 %v2499
        %v2626 = vpop.f32.mrf.mxu0
        %v2627 = vadd.f32 0.0, %v2626
        %2628 = vmatmul.f32.gmra.mxu0 %v2502
        %v2629 = vpop.f32.mrf.mxu0
        %v2630 = vadd.f32 0.0, %v2629
        %2631 = vmatmul.f32.gmra.mxu0 %v2505
        %v2632 = vpop.f32.mrf.mxu0
        %v2633 = vadd.f32 0.0, %v2632
        %2634 = vmatmul.f32.gmra.mxu0 %v2508
        %v2635 = vpop.f32.mrf.mxu0
        %v2636 = vadd.f32 0.0, %v2635
        %2637 = vmatmul.f32.gmra.mxu0 %v2511
        %v2638 = vpop.f32.mrf.mxu0
        %v2639 = vadd.f32 0.0, %v2638
        %2640 = vmatmul.f32.gmra.mxu0 %v2514
        %v2641 = vpop.f32.mrf.mxu0
        %v2642 = vadd.f32 0.0, %v2641
        %2643 = vmatmul.f32.gmra.mxu0 %v2517
        %v2644 = vpop.f32.mrf.mxu0
        %v2645 = vadd.f32 0.0, %v2644
        %2646 = vmatmul.f32.gmra.mxu0 %v2520
        %v2647 = vpop.f32.mrf.mxu0
        %v2648 = vadd.f32 0.0, %v2647
        %2649 = vmatmul.f32.gmra.mxu0 %v2523
        %v2650 = vpop.f32.mrf.mxu0
        %v2651 = vadd.f32 0.0, %v2650
        %2652 = vmatmul.f32.gmra.mxu0 %v2526
        %v2653 = vpop.f32.mrf.mxu0
        %v2654 = vadd.f32 0.0, %v2653
        %2655 = vmatmul.f32.gmra.mxu0 %v2529
        %v2656 = vpop.f32.mrf.mxu0
        %v2657 = vadd.f32 0.0, %v2656
        %2658 = vmatmul.f32.gmra.mxu0 %v2532
        %v2659 = vpop.f32.mrf.mxu0
        %v2660 = vadd.f32 0.0, %v2659
        %2661 = vmatmul.f32.gmra.mxu0 %v2535
        %v2662 = vpop.f32.mrf.mxu0
        %v2663 = vadd.f32 0.0, %v2662
        %2664 = vmatmul.f32.gmra.mxu0 %v2538
        %v2665 = vpop.f32.mrf.mxu0
        %v2666 = vadd.f32 0.0, %v2665
        %2667 = vmatmul.f32.gmra.mxu0 %v2541
        %v2668 = vpop.f32.mrf.mxu0
        %v2669 = vadd.f32 0.0, %v2668
        %2670 = vmatmul.f32.gmra.mxu0 %v2544
        %v2671 = vpop.f32.mrf.mxu0
        %v2672 = vadd.f32 0.0, %v2671
        %2673 = vmatmul.f32.gmra.mxu0 %v2547
        %v2674 = vpop.f32.mrf.mxu0
        %v2675 = vadd.f32 0.0, %v2674
        %2676 = vmatmul.f32.gmra.mxu0 %v2550
        %v2677 = vpop.f32.mrf.mxu0
        %v2678 = vadd.f32 0.0, %v2677
        %2679 = vmatmul.f32.gmra.mxu0 %v2553
        %v2680 = vpop.f32.mrf.mxu0
        %v2681 = vadd.f32 0.0, %v2680
        %2682 = vmatmul.f32.gmra.mxu0 %v2556
        %v2683 = vpop.f32.mrf.mxu0
        %v2684 = vadd.f32 0.0, %v2683
        %2685 = vmatmul.f32.gmra.mxu0 %v2559
        %v2686 = vpop.f32.mrf.mxu0
        %v2687 = vadd.f32 0.0, %v2686
        %2688 = vmatmul.f32.gmra.mxu0 %v2562
        %v2689 = vpop.f32.mrf.mxu0
        %v2690 = vadd.f32 0.0, %v2689
        %2691 = vmatmul.f32.gmra.mxu0 %v2565
        %v2692 = vpop.f32.mrf.mxu0
        %v2693 = vadd.f32 0.0, %v2692
        %2694 = vmatmul.f32.gmra.mxu0 %v2568
        %v2695 = vpop.f32.mrf.mxu0
        %v2696 = vadd.f32 0.0, %v2695
        %2697 = vdwg.mxu0
        %v2698 = vadd.f32 %v2388, %v2591
        %v2699 = vadd.f32 %v2389, %v2594
        %v2700 = vadd.f32 %v2390, %v2597
        %v2701 = vadd.f32 %v2391, %v2600
        %v2702 = vadd.f32 %v2392, %v2603
        %v2703 = vadd.f32 %v2393, %v2606
        %v2704 = vadd.f32 %v2394, %v2609
        %v2705 = vadd.f32 %v2395, %v2612
        %v2706 = vadd.f32 %v2396, %v2615
        %v2707 = vadd.f32 %v2397, %v2618
        %v2708 = vadd.f32 %v2398, %v2621
        %v2709 = vadd.f32 %v2399, %v2624
        %v2710 = vadd.f32 %v2400, %v2627
        %v2711 = vadd.f32 %v2401, %v2630
        %v2712 = vadd.f32 %v2402, %v2633
        %v2713 = vadd.f32 %v2403, %v2636
        %v2714 = vadd.f32 %v2404, %v2639
        %v2715 = vadd.f32 %v2405, %v2642
        %v2716 = vadd.f32 %v2406, %v2645
        %v2717 = vadd.f32 %v2407, %v2648
        %v2718 = vadd.f32 %v2408, %v2651
        %v2719 = vadd.f32 %v2409, %v2654
        %v2720 = vadd.f32 %v2410, %v2657
        %v2721 = vadd.f32 %v2411, %v2660
        %v2722 = vadd.f32 %v2412, %v2663
        %v2723 = vadd.f32 %v2413, %v2666
        %v2724 = vadd.f32 %v2414, %v2669
        %v2725 = vadd.f32 %v2415, %v2672
        %v2726 = vadd.f32 %v2416, %v2675
        %v2727 = vadd.f32 %v2417, %v2678
        %v2728 = vadd.f32 %v2418, %v2681
        %v2729 = vadd.f32 %v2419, %v2684
        %v2730 = vadd.f32 %v2420, %v2687
        %v2731 = vadd.f32 %v2421, %v2690
        %v2732 = vadd.f32 %v2422, %v2693
        %v2733 = vadd.f32 %v2423, %v2696
        %v2734 = vld [vmem:[%s319 + $0x26] sm:$0xff]
        %v2735 = vld [vmem:[%s319 + $0x2e] sm:$0xff]
        %v2736 = vld [vmem:[%s319 + $0x36] sm:$0xff]
        %v2737 = vld [vmem:[%s319 + $0x3e] sm:$0xff]
        %v2738 = vld [vmem:[%s319 + $0x46] sm:$0xff]
        %v2739 = vld [vmem:[%s319 + $0x4e] sm:$0xff]
        %v2740 = vld [vmem:[%s319 + $0x56] sm:$0xff]
        %v2741 = vld [vmem:[%s319 + $0x5e] sm:$0xff]
        %v2742 = vld [vmem:[%s319 + $0x66] sm:$0xff]
        %v2743 = vld [vmem:[%s319 + $0x6e] sm:$0xff]
        %v2744 = vld [vmem:[%s319 + $0x76] sm:$0xff]
        %v2745 = vld [vmem:[%s319 + $0x7e] sm:$0xff]
        %v2746 = vld [vmem:[%s319 + $0x86] sm:$0xff]
        %v2747 = vld [vmem:[%s319 + $0x8e] sm:$0xff]
        %v2748 = vld [vmem:[%s319 + $0x96] sm:$0xff]
        %v2749 = vld [vmem:[%s319 + $0x9e] sm:$0xff]
        %v2750 = vld [vmem:[%s319 + $0xa6] sm:$0xff]
        %v2751 = vld [vmem:[%s319 + $0xae] sm:$0xff]
        %v2752 = vld [vmem:[%s319 + $0xb6] sm:$0xff]
        %v2753 = vld [vmem:[%s319 + $0xbe] sm:$0xff]
        %v2754 = vld [vmem:[%s319 + $0xc6] sm:$0xff]
        %v2755 = vld [vmem:[%s319 + $0xce] sm:$0xff]
        %v2756 = vld [vmem:[%s319 + $0xd6] sm:$0xff]
        %v2757 = vld [vmem:[%s319 + $0xde] sm:$0xff]
        %v2758 = vld [vmem:[%s319 + $0xe6] sm:$0xff]
        %v2759 = vld [vmem:[%s319 + $0xee] sm:$0xff]
        %v2760 = vld [vmem:[%s319 + $0xf6] sm:$0xff]
        %v2761 = vld [vmem:[%s319 + $0xfe] sm:$0xff]
        %v2762 = vld [vmem:[%s319 + $0x106] sm:$0xff]
        %v2763 = vld [vmem:[%s319 + $0x10e] sm:$0xff]
        %v2764 = vld [vmem:[%s319 + $0x116] sm:$0xff]
        %v2765 = vld [vmem:[%s319 + $0x11e] sm:$0xff]
        %v2766 = vld [vmem:[%s319 + $0x126] sm:$0xff]
        %v2767 = vld [vmem:[%s319 + $0x12e] sm:$0xff]
        %v2768 = vld [vmem:[%s319 + $0x136] sm:$0xff]
        %v2769 = vld [vmem:[%s319 + $0x13e] sm:$0x3f]
        %s2770 = scalar_lea.vmem %s5, 32
        %v2771 = vld [vmem:[%s2770] sm:$0xf]
        %v2773 = vsel %vm400, %v2734, 0
        %v2776 = vsel %vm400, %v2735, 0
        %v2779 = vsel %vm400, %v2736, 0
        %v2782 = vsel %vm400, %v2737, 0
        %v2785 = vsel %vm400, %v2738, 0
        %v2788 = vsel %vm400, %v2739, 0
        %v2791 = vsel %vm400, %v2740, 0
        %v2794 = vsel %vm400, %v2741, 0
        %v2797 = vsel %vm400, %v2742, 0
        %v2800 = vsel %vm400, %v2743, 0
        %v2803 = vsel %vm400, %v2744, 0
        %v2806 = vsel %vm400, %v2745, 0
        %v2809 = vsel %vm400, %v2746, 0
        %v2812 = vsel %vm400, %v2747, 0
        %v2815 = vsel %vm400, %v2748, 0
        %v2818 = vsel %vm400, %v2749, 0
        %v2821 = vsel %vm400, %v2750, 0
        %v2824 = vsel %vm400, %v2751, 0
        %v2827 = vsel %vm400, %v2752, 0
        %v2830 = vsel %vm400, %v2753, 0
        %v2833 = vsel %vm400, %v2754, 0
        %v2836 = vsel %vm400, %v2755, 0
        %v2839 = vsel %vm400, %v2756, 0
        %v2842 = vsel %vm400, %v2757, 0
        %v2845 = vsel %vm400, %v2758, 0
        %v2848 = vsel %vm400, %v2759, 0
        %v2851 = vsel %vm400, %v2760, 0
        %v2854 = vsel %vm400, %v2761, 0
        %v2857 = vsel %vm400, %v2762, 0
        %v2860 = vsel %vm400, %v2763, 0
        %v2863 = vsel %vm400, %v2764, 0
        %v2866 = vsel %vm400, %v2765, 0
        %v2869 = vsel %vm400, %v2766, 0
        %v2872 = vsel %vm400, %v2767, 0
        %v2875 = vsel %vm400, %v2768, 0
        %v2878 = vsel %vm400, %v2769, 0
        %v2881 = vsel %vm509, %v2771, 0
        %2883 = vmatpush.msra.mxu0 0.0
        %2884 = vmatpush.msra.mxu0 0.0
        %2885 = vmatpush.msra.mxu0 0.0
        %2886 = vmatpush.msra.mxu0 0.0
        %2887 = vmatpush.msra.mxu0 0.0
        %2888 = vmatpush.msra.mxu0 0.0
        %2889 = vmatpush.msra.mxu0 0.0
        %2890 = vmatpush.msra.mxu0 0.0
        %2891 = vmatpush.msra.mxu0 0.0
        %2892 = vmatpush.msra.mxu0 0.0
        %2893 = vmatpush.msra.mxu0 0.0
        %2894 = vmatpush.msra.mxu0 0.0
        %2895 = vmatpush.msra.mxu0 0.0
        %2896 = vmatpush.msra.mxu0 0.0
        %2897 = vmatpush.msra.mxu0 0.0
        %2898 = vmatpush.msra.mxu0 %v2881
        %2899 = vmatmul.f32.gmra.mxu0 %v2773
        %v2900 = vpop.f32.mrf.mxu0
        %v2901 = vadd.f32 0.0, %v2900
        %2902 = vmatmul.f32.gmra.mxu0 %v2776
        %v2903 = vpop.f32.mrf.mxu0
        %v2904 = vadd.f32 0.0, %v2903
        %2905 = vmatmul.f32.gmra.mxu0 %v2779
        %v2906 = vpop.f32.mrf.mxu0
        %v2907 = vadd.f32 0.0, %v2906
        %2908 = vmatmul.f32.gmra.mxu0 %v2782
        %v2909 = vpop.f32.mrf.mxu0
        %v2910 = vadd.f32 0.0, %v2909
        %2911 = vmatmul.f32.gmra.mxu0 %v2785
        %v2912 = vpop.f32.mrf.mxu0
        %v2913 = vadd.f32 0.0, %v2912
        %2914 = vmatmul.f32.gmra.mxu0 %v2788
        %v2915 = vpop.f32.mrf.mxu0
        %v2916 = vadd.f32 0.0, %v2915
        %2917 = vmatmul.f32.gmra.mxu0 %v2791
        %v2918 = vpop.f32.mrf.mxu0
        %v2919 = vadd.f32 0.0, %v2918
        %2920 = vmatmul.f32.gmra.mxu0 %v2794
        %v2921 = vpop.f32.mrf.mxu0
        %v2922 = vadd.f32 0.0, %v2921
        %2923 = vmatmul.f32.gmra.mxu0 %v2797
        %v2924 = vpop.f32.mrf.mxu0
        %v2925 = vadd.f32 0.0, %v2924
        %2926 = vmatmul.f32.gmra.mxu0 %v2800
        %v2927 = vpop.f32.mrf.mxu0
        %v2928 = vadd.f32 0.0, %v2927
        %2929 = vmatmul.f32.gmra.mxu0 %v2803
        %v2930 = vpop.f32.mrf.mxu0
        %v2931 = vadd.f32 0.0, %v2930
        %2932 = vmatmul.f32.gmra.mxu0 %v2806
        %v2933 = vpop.f32.mrf.mxu0
        %v2934 = vadd.f32 0.0, %v2933
        %2935 = vmatmul.f32.gmra.mxu0 %v2809
        %v2936 = vpop.f32.mrf.mxu0
        %v2937 = vadd.f32 0.0, %v2936
        %2938 = vmatmul.f32.gmra.mxu0 %v2812
        %v2939 = vpop.f32.mrf.mxu0
        %v2940 = vadd.f32 0.0, %v2939
        %2941 = vmatmul.f32.gmra.mxu0 %v2815
        %v2942 = vpop.f32.mrf.mxu0
        %v2943 = vadd.f32 0.0, %v2942
        %2944 = vmatmul.f32.gmra.mxu0 %v2818
        %v2945 = vpop.f32.mrf.mxu0
        %v2946 = vadd.f32 0.0, %v2945
        %2947 = vmatmul.f32.gmra.mxu0 %v2821
        %v2948 = vpop.f32.mrf.mxu0
        %v2949 = vadd.f32 0.0, %v2948
        %2950 = vmatmul.f32.gmra.mxu0 %v2824
        %v2951 = vpop.f32.mrf.mxu0
        %v2952 = vadd.f32 0.0, %v2951
        %2953 = vmatmul.f32.gmra.mxu0 %v2827
        %v2954 = vpop.f32.mrf.mxu0
        %v2955 = vadd.f32 0.0, %v2954
        %2956 = vmatmul.f32.gmra.mxu0 %v2830
        %v2957 = vpop.f32.mrf.mxu0
        %v2958 = vadd.f32 0.0, %v2957
        %2959 = vmatmul.f32.gmra.mxu0 %v2833
        %v2960 = vpop.f32.mrf.mxu0
        %v2961 = vadd.f32 0.0, %v2960
        %2962 = vmatmul.f32.gmra.mxu0 %v2836
        %v2963 = vpop.f32.mrf.mxu0
        %v2964 = vadd.f32 0.0, %v2963
        %2965 = vmatmul.f32.gmra.mxu0 %v2839
        %v2966 = vpop.f32.mrf.mxu0
        %v2967 = vadd.f32 0.0, %v2966
        %2968 = vmatmul.f32.gmra.mxu0 %v2842
        %v2969 = vpop.f32.mrf.mxu0
        %v2970 = vadd.f32 0.0, %v2969
        %2971 = vmatmul.f32.gmra.mxu0 %v2845
        %v2972 = vpop.f32.mrf.mxu0
        %v2973 = vadd.f32 0.0, %v2972
        %2974 = vmatmul.f32.gmra.mxu0 %v2848
        %v2975 = vpop.f32.mrf.mxu0
        %v2976 = vadd.f32 0.0, %v2975
        %2977 = vmatmul.f32.gmra.mxu0 %v2851
        %v2978 = vpop.f32.mrf.mxu0
        %v2979 = vadd.f32 0.0, %v2978
        %2980 = vmatmul.f32.gmra.mxu0 %v2854
        %v2981 = vpop.f32.mrf.mxu0
        %v2982 = vadd.f32 0.0, %v2981
        %2983 = vmatmul.f32.gmra.mxu0 %v2857
        %v2984 = vpop.f32.mrf.mxu0
        %v2985 = vadd.f32 0.0, %v2984
        %2986 = vmatmul.f32.gmra.mxu0 %v2860
        %v2987 = vpop.f32.mrf.mxu0
        %v2988 = vadd.f32 0.0, %v2987
        %2989 = vmatmul.f32.gmra.mxu0 %v2863
        %v2990 = vpop.f32.mrf.mxu0
        %v2991 = vadd.f32 0.0, %v2990
        %2992 = vmatmul.f32.gmra.mxu0 %v2866
        %v2993 = vpop.f32.mrf.mxu0
        %v2994 = vadd.f32 0.0, %v2993
        %2995 = vmatmul.f32.gmra.mxu0 %v2869
        %v2996 = vpop.f32.mrf.mxu0
        %v2997 = vadd.f32 0.0, %v2996
        %2998 = vmatmul.f32.gmra.mxu0 %v2872
        %v2999 = vpop.f32.mrf.mxu0
        %v3000 = vadd.f32 0.0, %v2999
        %3001 = vmatmul.f32.gmra.mxu0 %v2875
        %v3002 = vpop.f32.mrf.mxu0
        %v3003 = vadd.f32 0.0, %v3002
        %3004 = vmatmul.f32.gmra.mxu0 %v2878
        %v3005 = vpop.f32.mrf.mxu0
        %v3006 = vadd.f32 0.0, %v3005
        %3007 = vdwg.mxu0
        %v3008 = vadd.f32 %v2698, %v2901
        %v3009 = vadd.f32 %v2699, %v2904
        %v3010 = vadd.f32 %v2700, %v2907
        %v3011 = vadd.f32 %v2701, %v2910
        %v3012 = vadd.f32 %v2702, %v2913
        %v3013 = vadd.f32 %v2703, %v2916
        %v3014 = vadd.f32 %v2704, %v2919
        %v3015 = vadd.f32 %v2705, %v2922
        %v3016 = vadd.f32 %v2706, %v2925
        %v3017 = vadd.f32 %v2707, %v2928
        %v3018 = vadd.f32 %v2708, %v2931
        %v3019 = vadd.f32 %v2709, %v2934
        %v3020 = vadd.f32 %v2710, %v2937
        %v3021 = vadd.f32 %v2711, %v2940
        %v3022 = vadd.f32 %v2712, %v2943
        %v3023 = vadd.f32 %v2713, %v2946
        %v3024 = vadd.f32 %v2714, %v2949
        %v3025 = vadd.f32 %v2715, %v2952
        %v3026 = vadd.f32 %v2716, %v2955
        %v3027 = vadd.f32 %v2717, %v2958
        %v3028 = vadd.f32 %v2718, %v2961
        %v3029 = vadd.f32 %v2719, %v2964
        %v3030 = vadd.f32 %v2720, %v2967
        %v3031 = vadd.f32 %v2721, %v2970
        %v3032 = vadd.f32 %v2722, %v2973
        %v3033 = vadd.f32 %v2723, %v2976
        %v3034 = vadd.f32 %v2724, %v2979
        %v3035 = vadd.f32 %v2725, %v2982
        %v3036 = vadd.f32 %v2726, %v2985
        %v3037 = vadd.f32 %v2727, %v2988
        %v3038 = vadd.f32 %v2728, %v2991
        %v3039 = vadd.f32 %v2729, %v2994
        %v3040 = vadd.f32 %v2730, %v2997
        %v3041 = vadd.f32 %v2731, %v3000
        %v3042 = vadd.f32 %v2732, %v3003
        %v3043 = vadd.f32 %v2733, %v3006
        %vm3044 = vcmask 64512
        %3045 = vst.msk [vmem:[%s324] sm:$0xff] %vm3044, %v3008
        %3046 = vst.msk [vmem:[%s324 + $0x8] sm:$0xff] %vm3044, %v3009
        %3047 = vst.msk [vmem:[%s324 + $0x10] sm:$0xff] %vm3044, %v3010
        %3048 = vst.msk [vmem:[%s324 + $0x18] sm:$0xff] %vm3044, %v3011
        %3049 = vst.msk [vmem:[%s324 + $0x20] sm:$0xff] %vm3044, %v3012
        %3050 = vst.msk [vmem:[%s324 + $0x28] sm:$0xff] %vm3044, %v3013
        %3051 = vst.msk [vmem:[%s324 + $0x30] sm:$0xff] %vm3044, %v3014
        %3052 = vst.msk [vmem:[%s324 + $0x38] sm:$0xff] %vm3044, %v3015
        %3053 = vst.msk [vmem:[%s324 + $0x40] sm:$0xff] %vm3044, %v3016
        %3054 = vst.msk [vmem:[%s324 + $0x48] sm:$0xff] %vm3044, %v3017
        %3055 = vst.msk [vmem:[%s324 + $0x50] sm:$0xff] %vm3044, %v3018
        %3056 = vst.msk [vmem:[%s324 + $0x58] sm:$0xff] %vm3044, %v3019
        %3057 = vst.msk [vmem:[%s324 + $0x60] sm:$0xff] %vm3044, %v3020
        %3058 = vst.msk [vmem:[%s324 + $0x68] sm:$0xff] %vm3044, %v3021
        %3059 = vst.msk [vmem:[%s324 + $0x70] sm:$0xff] %vm3044, %v3022
        %3060 = vst.msk [vmem:[%s324 + $0x78] sm:$0xff] %vm3044, %v3023
        %3061 = vst.msk [vmem:[%s324 + $0x80] sm:$0xff] %vm3044, %v3024
        %3062 = vst.msk [vmem:[%s324 + $0x88] sm:$0xff] %vm3044, %v3025
        %3063 = vst.msk [vmem:[%s324 + $0x90] sm:$0xff] %vm3044, %v3026
        %3064 = vst.msk [vmem:[%s324 + $0x98] sm:$0xff] %vm3044, %v3027
        %3065 = vst.msk [vmem:[%s324 + $0xa0] sm:$0xff] %vm3044, %v3028
        %3066 = vst.msk [vmem:[%s324 + $0xa8] sm:$0xff] %vm3044, %v3029
        %3067 = vst.msk [vmem:[%s324 + $0xb0] sm:$0xff] %vm3044, %v3030
        %3068 = vst.msk [vmem:[%s324 + $0xb8] sm:$0xff] %vm3044, %v3031
        %3069 = vst.msk [vmem:[%s324 + $0xc0] sm:$0xff] %vm3044, %v3032
        %3070 = vst.msk [vmem:[%s324 + $0xc8] sm:$0xff] %vm3044, %v3033
        %3071 = vst.msk [vmem:[%s324 + $0xd0] sm:$0xff] %vm3044, %v3034
        %3072 = vst.msk [vmem:[%s324 + $0xd8] sm:$0xff] %vm3044, %v3035
        %3073 = vst.msk [vmem:[%s324 + $0xe0] sm:$0xff] %vm3044, %v3036
        %3074 = vst.msk [vmem:[%s324 + $0xe8] sm:$0xff] %vm3044, %v3037
        %3075 = vst.msk [vmem:[%s324 + $0xf0] sm:$0xff] %vm3044, %v3038
        %3076 = vst.msk [vmem:[%s324 + $0xf8] sm:$0xff] %vm3044, %v3039
        %3077 = vst.msk [vmem:[%s324 + $0x100] sm:$0xff] %vm3044, %v3040
        %3078 = vst.msk [vmem:[%s324 + $0x108] sm:$0xff] %vm3044, %v3041
        %3079 = vst.msk [vmem:[%s324 + $0x110] sm:$0xff] %vm3044, %v3042
        %vm3080 = vcmask 62464
        %3081 = vst.msk [vmem:[%s324 + $0x118] sm:$0x3f] %vm3080, %v3043
        %v3082 = vld [vmem:[%s2] sm:$0xff]
        %v3083 = vld [vmem:[%s2 + $0x8] sm:$0xff]
        %v3084 = vld [vmem:[%s2 + $0x10] sm:$0xff]
        %v3085 = vld [vmem:[%s2 + $0x18] sm:$0xff]
        %v3086 = vld [vmem:[%s2 + $0x20] sm:$0xff]
        %v3087 = vld [vmem:[%s2 + $0x28] sm:$0xff]
        %v3088 = vld [vmem:[%s2 + $0x30] sm:$0xff]
        %v3089 = vld [vmem:[%s2 + $0x38] sm:$0xff]
        %v3090 = vld [vmem:[%s2 + $0x40] sm:$0xff]
        %v3091 = vld [vmem:[%s2 + $0x48] sm:$0xff]
        %v3092 = vld [vmem:[%s2 + $0x50] sm:$0xff]
        %v3093 = vld [vmem:[%s2 + $0x58] sm:$0xff]
        %v3094 = vld [vmem:[%s2 + $0x60] sm:$0xff]
        %v3095 = vld [vmem:[%s2 + $0x68] sm:$0xff]
        %v3096 = vld [vmem:[%s2 + $0x70] sm:$0xff]
        %v3097 = vld [vmem:[%s2 + $0x78] sm:$0xff]
        %v3098 = vld [vmem:[%s2 + $0x80] sm:$0xff]
        %v3099 = vld [vmem:[%s2 + $0x88] sm:$0xff]
        %v3100 = vld [vmem:[%s2 + $0x90] sm:$0xff]
        %v3101 = vld [vmem:[%s2 + $0x98] sm:$0xff]
        %v3102 = vld [vmem:[%s2 + $0xa0] sm:$0xff]
        %v3103 = vld [vmem:[%s2 + $0xa8] sm:$0xff]
        %v3104 = vld [vmem:[%s2 + $0xb0] sm:$0xff]
        %v3105 = vld [vmem:[%s2 + $0xb8] sm:$0xff]
        %v3106 = vld [vmem:[%s2 + $0xc0] sm:$0xff]
        %v3107 = vld [vmem:[%s2 + $0xc8] sm:$0xff]
        %v3108 = vld [vmem:[%s2 + $0xd0] sm:$0xff]
        %v3109 = vld [vmem:[%s2 + $0xd8] sm:$0xff]
        %v3110 = vld [vmem:[%s2 + $0xe0] sm:$0xff]
        %v3111 = vld [vmem:[%s2 + $0xe8] sm:$0xff]
        %v3112 = vld [vmem:[%s2 + $0xf0] sm:$0xff]
        %v3113 = vld [vmem:[%s2 + $0xf8] sm:$0xff]
        %v3114 = vld [vmem:[%s2 + $0x100] sm:$0xff]
        %v3115 = vld [vmem:[%s2 + $0x108] sm:$0xff]
        %v3116 = vld [vmem:[%s2 + $0x110] sm:$0xff]
        %v3117 = vld [vmem:[%s2 + $0x118] sm:$0x3f]
        %3119 = vset.pattern.permute.xlu0 0
        %3120 = vperm.xlu0 %3119, %v3082
        %v3121 = vpop.permute.xlu0 %3120
        %3124 = vset.pattern.permute.xlu0 0
        %3125 = vperm.xlu0 %3124, %v3083
        %v3126 = vpop.permute.xlu0 %3125
        %3129 = vset.pattern.permute.xlu0 0
        %3130 = vperm.xlu0 %3129, %v3084
        %v3131 = vpop.permute.xlu0 %3130
        %3134 = vset.pattern.permute.xlu0 0
        %3135 = vperm.xlu0 %3134, %v3085
        %v3136 = vpop.permute.xlu0 %3135
        %3139 = vset.pattern.permute.xlu0 0
        %3140 = vperm.xlu0 %3139, %v3086
        %v3141 = vpop.permute.xlu0 %3140
        %3144 = vset.pattern.permute.xlu0 0
        %3145 = vperm.xlu0 %3144, %v3087
        %v3146 = vpop.permute.xlu0 %3145
        %3149 = vset.pattern.permute.xlu0 0
        %3150 = vperm.xlu0 %3149, %v3088
        %v3151 = vpop.permute.xlu0 %3150
        %3154 = vset.pattern.permute.xlu0 0
        %3155 = vperm.xlu0 %3154, %v3089
        %v3156 = vpop.permute.xlu0 %3155
        %3159 = vset.pattern.permute.xlu0 0
        %3160 = vperm.xlu0 %3159, %v3090
        %v3161 = vpop.permute.xlu0 %3160
        %3164 = vset.pattern.permute.xlu0 0
        %3165 = vperm.xlu0 %3164, %v3091
        %v3166 = vpop.permute.xlu0 %3165
        %3169 = vset.pattern.permute.xlu0 0
        %3170 = vperm.xlu0 %3169, %v3092
        %v3171 = vpop.permute.xlu0 %3170
        %3174 = vset.pattern.permute.xlu0 0
        %3175 = vperm.xlu0 %3174, %v3093
        %v3176 = vpop.permute.xlu0 %3175
        %3179 = vset.pattern.permute.xlu0 0
        %3180 = vperm.xlu0 %3179, %v3094
        %v3181 = vpop.permute.xlu0 %3180
        %3184 = vset.pattern.permute.xlu0 0
        %3185 = vperm.xlu0 %3184, %v3095
        %v3186 = vpop.permute.xlu0 %3185
        %3189 = vset.pattern.permute.xlu0 0
        %3190 = vperm.xlu0 %3189, %v3096
        %v3191 = vpop.permute.xlu0 %3190
        %3194 = vset.pattern.permute.xlu0 0
        %3195 = vperm.xlu0 %3194, %v3097
        %v3196 = vpop.permute.xlu0 %3195
        %3199 = vset.pattern.permute.xlu0 0
        %3200 = vperm.xlu0 %3199, %v3098
        %v3201 = vpop.permute.xlu0 %3200
        %3204 = vset.pattern.permute.xlu0 0
        %3205 = vperm.xlu0 %3204, %v3099
        %v3206 = vpop.permute.xlu0 %3205
        %3209 = vset.pattern.permute.xlu0 0
        %3210 = vperm.xlu0 %3209, %v3100
        %v3211 = vpop.permute.xlu0 %3210
        %3214 = vset.pattern.permute.xlu0 0
        %3215 = vperm.xlu0 %3214, %v3101
        %v3216 = vpop.permute.xlu0 %3215
        %3219 = vset.pattern.permute.xlu0 0
        %3220 = vperm.xlu0 %3219, %v3102
        %v3221 = vpop.permute.xlu0 %3220
        %3224 = vset.pattern.permute.xlu0 0
        %3225 = vperm.xlu0 %3224, %v3103
        %v3226 = vpop.permute.xlu0 %3225
        %3229 = vset.pattern.permute.xlu0 0
        %3230 = vperm.xlu0 %3229, %v3104
        %v3231 = vpop.permute.xlu0 %3230
        %3234 = vset.pattern.permute.xlu0 0
        %3235 = vperm.xlu0 %3234, %v3105
        %v3236 = vpop.permute.xlu0 %3235
        %3239 = vset.pattern.permute.xlu0 0
        %3240 = vperm.xlu0 %3239, %v3106
        %v3241 = vpop.permute.xlu0 %3240
        %3244 = vset.pattern.permute.xlu0 0
        %3245 = vperm.xlu0 %3244, %v3107
        %v3246 = vpop.permute.xlu0 %3245
        %3249 = vset.pattern.permute.xlu0 0
        %3250 = vperm.xlu0 %3249, %v3108
        %v3251 = vpop.permute.xlu0 %3250
        %3254 = vset.pattern.permute.xlu0 0
        %3255 = vperm.xlu0 %3254, %v3109
        %v3256 = vpop.permute.xlu0 %3255
        %3259 = vset.pattern.permute.xlu0 0
        %3260 = vperm.xlu0 %3259, %v3110
        %v3261 = vpop.permute.xlu0 %3260
        %3264 = vset.pattern.permute.xlu0 0
        %3265 = vperm.xlu0 %3264, %v3111
        %v3266 = vpop.permute.xlu0 %3265
        %3269 = vset.pattern.permute.xlu0 0
        %3270 = vperm.xlu0 %3269, %v3112
        %v3271 = vpop.permute.xlu0 %3270
        %3274 = vset.pattern.permute.xlu0 0
        %3275 = vperm.xlu0 %3274, %v3113
        %v3276 = vpop.permute.xlu0 %3275
        %3279 = vset.pattern.permute.xlu0 0
        %3280 = vperm.xlu0 %3279, %v3114
        %v3281 = vpop.permute.xlu0 %3280
        %3284 = vset.pattern.permute.xlu0 0
        %3285 = vperm.xlu0 %3284, %v3115
        %v3286 = vpop.permute.xlu0 %3285
        %3289 = vset.pattern.permute.xlu0 0
        %3290 = vperm.xlu0 %3289, %v3116
        %v3291 = vpop.permute.xlu0 %3290
        %3294 = vset.pattern.permute.xlu0 0
        %3295 = vperm.xlu0 %3294, %v3117
        %v3296 = vpop.permute.xlu0 %3295
        %v3298 = vmul.f32 %v3008, %v3121
        %v3299 = vmul.f32 %v3009, %v3126
        %v3300 = vmul.f32 %v3010, %v3131
        %v3301 = vmul.f32 %v3011, %v3136
        %v3302 = vmul.f32 %v3012, %v3141
        %v3303 = vmul.f32 %v3013, %v3146
        %v3304 = vmul.f32 %v3014, %v3151
        %v3305 = vmul.f32 %v3015, %v3156
        %v3306 = vmul.f32 %v3016, %v3161
        %v3307 = vmul.f32 %v3017, %v3166
        %v3308 = vmul.f32 %v3018, %v3171
        %v3309 = vmul.f32 %v3019, %v3176
        %v3310 = vmul.f32 %v3020, %v3181
        %v3311 = vmul.f32 %v3021, %v3186
        %v3312 = vmul.f32 %v3022, %v3191
        %v3313 = vmul.f32 %v3023, %v3196
        %v3314 = vmul.f32 %v3024, %v3201
        %v3315 = vmul.f32 %v3025, %v3206
        %v3316 = vmul.f32 %v3026, %v3211
        %v3317 = vmul.f32 %v3027, %v3216
        %v3318 = vmul.f32 %v3028, %v3221
        %v3319 = vmul.f32 %v3029, %v3226
        %v3320 = vmul.f32 %v3030, %v3231
        %v3321 = vmul.f32 %v3031, %v3236
        %v3322 = vmul.f32 %v3032, %v3241
        %v3323 = vmul.f32 %v3033, %v3246
        %v3324 = vmul.f32 %v3034, %v3251
        %v3325 = vmul.f32 %v3035, %v3256
        %v3326 = vmul.f32 %v3036, %v3261
        %v3327 = vmul.f32 %v3037, %v3266
        %v3328 = vmul.f32 %v3038, %v3271
        %v3329 = vmul.f32 %v3039, %v3276
        %v3330 = vmul.f32 %v3040, %v3281
        %v3331 = vmul.f32 %v3041, %v3286
        %v3332 = vmul.f32 %v3042, %v3291
        %v3333 = vmul.f32 %v3043, %v3296
        %v3334 = vsel %vm3044, %v3298, 0.0
        %v3335 = vsel %vm3044, %v3299, 0.0
        %v3336 = vadd.f32 %v3334, %v3335
        %v3337 = vsel %vm3044, %v3300, 0.0
        %v3338 = vadd.f32 %v3336, %v3337
        %v3339 = vsel %vm3044, %v3301, 0.0
        %v3340 = vadd.f32 %v3338, %v3339
        %v3341 = vsel %vm3044, %v3302, 0.0
        %v3342 = vadd.f32 %v3340, %v3341
        %v3343 = vsel %vm3044, %v3303, 0.0
        %v3344 = vadd.f32 %v3342, %v3343
        %v3345 = vsel %vm3044, %v3304, 0.0
        %v3346 = vadd.f32 %v3344, %v3345
        %v3347 = vsel %vm3044, %v3305, 0.0
        %v3348 = vadd.f32 %v3346, %v3347
        %v3349 = vsel %vm3044, %v3306, 0.0
        %v3350 = vadd.f32 %v3348, %v3349
        %v3351 = vsel %vm3044, %v3307, 0.0
        %v3352 = vadd.f32 %v3350, %v3351
        %v3353 = vsel %vm3044, %v3308, 0.0
        %v3354 = vadd.f32 %v3352, %v3353
        %v3355 = vsel %vm3044, %v3309, 0.0
        %v3356 = vadd.f32 %v3354, %v3355
        %v3357 = vsel %vm3044, %v3310, 0.0
        %v3358 = vadd.f32 %v3356, %v3357
        %v3359 = vsel %vm3044, %v3311, 0.0
        %v3360 = vadd.f32 %v3358, %v3359
        %v3361 = vsel %vm3044, %v3312, 0.0
        %v3362 = vadd.f32 %v3360, %v3361
        %v3363 = vsel %vm3044, %v3313, 0.0
        %v3364 = vadd.f32 %v3362, %v3363
        %v3365 = vsel %vm3044, %v3314, 0.0
        %v3366 = vadd.f32 %v3364, %v3365
        %v3367 = vsel %vm3044, %v3315, 0.0
        %v3368 = vadd.f32 %v3366, %v3367
        %v3369 = vsel %vm3044, %v3316, 0.0
        %v3370 = vadd.f32 %v3368, %v3369
        %v3371 = vsel %vm3044, %v3317, 0.0
        %v3372 = vadd.f32 %v3370, %v3371
        %v3373 = vsel %vm3044, %v3318, 0.0
        %v3374 = vadd.f32 %v3372, %v3373
        %v3375 = vsel %vm3044, %v3319, 0.0
        %v3376 = vadd.f32 %v3374, %v3375
        %v3377 = vsel %vm3044, %v3320, 0.0
        %v3378 = vadd.f32 %v3376, %v3377
        %v3379 = vsel %vm3044, %v3321, 0.0
        %v3380 = vadd.f32 %v3378, %v3379
        %v3381 = vsel %vm3044, %v3322, 0.0
        %v3382 = vadd.f32 %v3380, %v3381
        %v3383 = vsel %vm3044, %v3323, 0.0
        %v3384 = vadd.f32 %v3382, %v3383
        %v3385 = vsel %vm3044, %v3324, 0.0
        %v3386 = vadd.f32 %v3384, %v3385
        %v3387 = vsel %vm3044, %v3325, 0.0
        %v3388 = vadd.f32 %v3386, %v3387
        %v3389 = vsel %vm3044, %v3326, 0.0
        %v3390 = vadd.f32 %v3388, %v3389
        %v3391 = vsel %vm3044, %v3327, 0.0
        %v3392 = vadd.f32 %v3390, %v3391
        %v3393 = vsel %vm3044, %v3328, 0.0
        %v3394 = vadd.f32 %v3392, %v3393
        %v3395 = vsel %vm3044, %v3329, 0.0
        %v3396 = vadd.f32 %v3394, %v3395
        %v3397 = vsel %vm3044, %v3330, 0.0
        %v3398 = vadd.f32 %v3396, %v3397
        %v3399 = vsel %vm3044, %v3331, 0.0
        %v3400 = vadd.f32 %v3398, %v3399
        %v3401 = vsel %vm3044, %v3332, 0.0
        %v3402 = vadd.f32 %v3400, %v3401
        %v3403 = vsel %vm3080, %v3333, 0.0
        %v3404 = vadd.f32 %v3402, %v3403
        %v3405 = vrot.slane %v3404, 4
        %v3406 = vadd.f32 %v3404, %v3405
        %v3407 = vrot.slane %v3406, 2
        %v3408 = vadd.f32 %v3406, %v3407
        %v3409 = vrot.slane %v3408, 1
        %v3410 = vadd.f32 %v3408, %v3409
        %vm3411 = vcmask 57344
        %3412 = vst.msk [vmem:[%s308] sm:$0x1] %vm3411, %v3410
        %v3413 = vmul.f32 %v3298, %v3008
        %v3414 = vmul.f32 %v3299, %v3009
        %v3415 = vmul.f32 %v3300, %v3010
        %v3416 = vmul.f32 %v3301, %v3011
        %v3417 = vmul.f32 %v3302, %v3012
        %v3418 = vmul.f32 %v3303, %v3013
        %v3419 = vmul.f32 %v3304, %v3014
        %v3420 = vmul.f32 %v3305, %v3015
        %v3421 = vmul.f32 %v3306, %v3016
        %v3422 = vmul.f32 %v3307, %v3017
        %v3423 = vmul.f32 %v3308, %v3018
        %v3424 = vmul.f32 %v3309, %v3019
        %v3425 = vmul.f32 %v3310, %v3020
        %v3426 = vmul.f32 %v3311, %v3021
        %v3427 = vmul.f32 %v3312, %v3022
        %v3428 = vmul.f32 %v3313, %v3023
        %v3429 = vmul.f32 %v3314, %v3024
        %v3430 = vmul.f32 %v3315, %v3025
        %v3431 = vmul.f32 %v3316, %v3026
        %v3432 = vmul.f32 %v3317, %v3027
        %v3433 = vmul.f32 %v3318, %v3028
        %v3434 = vmul.f32 %v3319, %v3029
        %v3435 = vmul.f32 %v3320, %v3030
        %v3436 = vmul.f32 %v3321, %v3031
        %v3437 = vmul.f32 %v3322, %v3032
        %v3438 = vmul.f32 %v3323, %v3033
        %v3439 = vmul.f32 %v3324, %v3034
        %v3440 = vmul.f32 %v3325, %v3035
        %v3441 = vmul.f32 %v3326, %v3036
        %v3442 = vmul.f32 %v3327, %v3037
        %v3443 = vmul.f32 %v3328, %v3038
        %v3444 = vmul.f32 %v3329, %v3039
        %v3445 = vmul.f32 %v3330, %v3040
        %v3446 = vmul.f32 %v3331, %v3041
        %v3447 = vmul.f32 %v3332, %v3042
        %v3448 = vmul.f32 %v3333, %v3043
        %v3449 = vsel %vm3044, %v3413, 0.0
        %v3450 = vsel %vm3044, %v3414, 0.0
        %v3451 = vadd.f32 %v3449, %v3450
        %v3452 = vsel %vm3044, %v3415, 0.0
        %v3453 = vadd.f32 %v3451, %v3452
        %v3454 = vsel %vm3044, %v3416, 0.0
        %v3455 = vadd.f32 %v3453, %v3454
        %v3456 = vsel %vm3044, %v3417, 0.0
        %v3457 = vadd.f32 %v3455, %v3456
        %v3458 = vsel %vm3044, %v3418, 0.0
        %v3459 = vadd.f32 %v3457, %v3458
        %v3460 = vsel %vm3044, %v3419, 0.0
        %v3461 = vadd.f32 %v3459, %v3460
        %v3462 = vsel %vm3044, %v3420, 0.0
        %v3463 = vadd.f32 %v3461, %v3462
        %v3464 = vsel %vm3044, %v3421, 0.0
        %v3465 = vadd.f32 %v3463, %v3464
        %v3466 = vsel %vm3044, %v3422, 0.0
        %v3467 = vadd.f32 %v3465, %v3466
        %v3468 = vsel %vm3044, %v3423, 0.0
        %v3469 = vadd.f32 %v3467, %v3468
        %v3470 = vsel %vm3044, %v3424, 0.0
        %v3471 = vadd.f32 %v3469, %v3470
        %v3472 = vsel %vm3044, %v3425, 0.0
        %v3473 = vadd.f32 %v3471, %v3472
        %v3474 = vsel %vm3044, %v3426, 0.0
        %v3475 = vadd.f32 %v3473, %v3474
        %v3476 = vsel %vm3044, %v3427, 0.0
        %v3477 = vadd.f32 %v3475, %v3476
        %v3478 = vsel %vm3044, %v3428, 0.0
        %v3479 = vadd.f32 %v3477, %v3478
        %v3480 = vsel %vm3044, %v3429, 0.0
        %v3481 = vadd.f32 %v3479, %v3480
        %v3482 = vsel %vm3044, %v3430, 0.0
        %v3483 = vadd.f32 %v3481, %v3482
        %v3484 = vsel %vm3044, %v3431, 0.0
        %v3485 = vadd.f32 %v3483, %v3484
        %v3486 = vsel %vm3044, %v3432, 0.0
        %v3487 = vadd.f32 %v3485, %v3486
        %v3488 = vsel %vm3044, %v3433, 0.0
        %v3489 = vadd.f32 %v3487, %v3488
        %v3490 = vsel %vm3044, %v3434, 0.0
        %v3491 = vadd.f32 %v3489, %v3490
        %v3492 = vsel %vm3044, %v3435, 0.0
        %v3493 = vadd.f32 %v3491, %v3492
        %v3494 = vsel %vm3044, %v3436, 0.0
        %v3495 = vadd.f32 %v3493, %v3494
        %v3496 = vsel %vm3044, %v3437, 0.0
        %v3497 = vadd.f32 %v3495, %v3496
        %v3498 = vsel %vm3044, %v3438, 0.0
        %v3499 = vadd.f32 %v3497, %v3498
        %v3500 = vsel %vm3044, %v3439, 0.0
        %v3501 = vadd.f32 %v3499, %v3500
        %v3502 = vsel %vm3044, %v3440, 0.0
        %v3503 = vadd.f32 %v3501, %v3502
        %v3504 = vsel %vm3044, %v3441, 0.0
        %v3505 = vadd.f32 %v3503, %v3504
        %v3506 = vsel %vm3044, %v3442, 0.0
        %v3507 = vadd.f32 %v3505, %v3506
        %v3508 = vsel %vm3044, %v3443, 0.0
        %v3509 = vadd.f32 %v3507, %v3508
        %v3510 = vsel %vm3044, %v3444, 0.0
        %v3511 = vadd.f32 %v3509, %v3510
        %v3512 = vsel %vm3044, %v3445, 0.0
        %v3513 = vadd.f32 %v3511, %v3512
        %v3514 = vsel %vm3044, %v3446, 0.0
        %v3515 = vadd.f32 %v3513, %v3514
        %v3516 = vsel %vm3044, %v3447, 0.0
        %v3517 = vadd.f32 %v3515, %v3516
        %v3518 = vsel %vm3080, %v3448, 0.0
        %v3519 = vadd.f32 %v3517, %v3518
        %v3520 = vrot.slane %v3519, 4
        %v3521 = vadd.f32 %v3519, %v3520
        %v3522 = vrot.slane %v3521, 2
        %v3523 = vadd.f32 %v3521, %v3522
        %v3524 = vrot.slane %v3523, 1
        %v3525 = vadd.f32 %v3523, %v3524
        %3526 = vst.msk [vmem:[%s314] sm:$0x1] %vm3411, %v3525
        %p3527 = scmp.lt.s32.totalorder %s26, 1
        %s3528 = scalar_select %p3527, %s26, 1
        %s3529 = smul.addr %s3528, 36
        %s3530 = smul.addr %s3529, 8
        %s3531 = scalar_lea.vmem %s6, %s3530
        %s3532 = sand.u32 %s191, 1
        %s3533 = scalar_lea.sflag [#allocation3], %s3532
        %s3534 = sand.u32 %s191, 1
        %s3535 = scalar_lea.vmem [#allocation2], %s3534
        %s3536 = sand.u32 %s217, 1
        %s3537 = scalar_lea.sflag [#allocation5], %s3536
        %s3538 = sand.u32 %s217, 1
        %s3539 = scalar_lea.vmem [#allocation4], %s3538
        // Predicated region
        $region45: #{tpu_custom_call.1} parent=43 // pred_check
          %p3540 = pneg %p175
        $region46: #{tpu_custom_call.1} parent=43 // pred_check_branch
          %3542 = sbr.rel (%p3540) target = $region48
        $region47: #{tpu_custom_call.1} parent=43 // pred_region
          _
        $region48: #{tpu_custom_call.1} parent=43 // pred_fallthru
          _
        // Predicated region
        $region49: #{tpu_custom_call.1} parent=43 // pred_check
          %p3543 = pneg %p201
        $region50: #{tpu_custom_call.1} parent=43 // pred_check_branch
          %3545 = sbr.rel (%p3543) target = $region52
        $region51: #{tpu_custom_call.1} parent=43 // pred_region
          %3547 = vsyncadd %s3533, 0
          %s3548 = scalar_lea.hbm %s7, %s26
          %s3550 = sshll.u32 %s3535, 4
          %s3551 = int_to_ptr.vmem [resolvable:$true] %s3550
          %s3552 = sshll.u32 %s3548, 4
          %s3553 = int_to_ptr.hbm [resolvable:$true] %s3552
          %3555 = dma.vmem_to_hbm [thread:$0]  %s3551, 16, %s3553, %s3533
        $region52: #{tpu_custom_call.1} parent=43 // pred_fallthru
          _
        // Predicated region
        $region53: #{tpu_custom_call.1} parent=43 // pred_check
          %p3556 = pneg %p227
        $region54: #{tpu_custom_call.1} parent=43 // pred_check_branch
          %3558 = sbr.rel (%p3556) target = $region56
        $region55: #{tpu_custom_call.1} parent=43 // pred_region
          %3560 = vsyncadd %s3537, 0
          %s3561 = scalar_lea.hbm %s8, %s26
          %s3563 = sshll.u32 %s3539, 4
          %s3564 = int_to_ptr.vmem [resolvable:$true] %s3563
          %s3565 = sshll.u32 %s3561, 4
          %s3566 = int_to_ptr.hbm [resolvable:$true] %s3565
          %3568 = dma.vmem_to_hbm [thread:$0]  %s3564, 16, %s3566, %s3537
        $region56: #{tpu_custom_call.1} parent=43 // pred_fallthru
          _
      $region44: #{tpu_custom_call.1} parent=5 // pred_fallthru
        _
      %p3569 = scmp.le.s32.totalorder 2, %s21
      // Predicated region
      $region57: #{tpu_custom_call.1} parent=5 // pred_check
        %p3570 = pneg %p3569
      $region58: #{tpu_custom_call.1} parent=5 // pred_check_branch
        %3572 = sbr.rel (%p3570) target = $region60
      $region59: #{tpu_custom_call.1} parent=5 // pred_region
        %s3573 = ssub.s32 %s21, 2
        // Predicated region
        $region61: #{tpu_custom_call.1} parent=59 // pred_check
          %p3574 = pneg %p181
        $region62: #{tpu_custom_call.1} parent=59 // pred_check_branch
          %3576 = sbr.rel (%p3574) target = $region64
        $region63: #{tpu_custom_call.1} parent=59 // pred_region
          %p3577 = scmp.lt.s32.totalorder %s27, 1
          %s3578 = scalar_select %p3577, %s27, 1
          %s3579 = smul.addr %s3578, 36
          %s3580 = smul.addr %s3579, 8
          %s3581 = scalar_lea.vmem %s6, %s3580
        $region64: #{tpu_custom_call.1} parent=59 // pred_fallthru
          _
        // Predicated region
        $region65: #{tpu_custom_call.1} parent=59 // pred_check
          %p3582 = pneg %p207
        $region66: #{tpu_custom_call.1} parent=59 // pred_check_branch
          %3584 = sbr.rel (%p3582) target = $region68
        $region67: #{tpu_custom_call.1} parent=59 // pred_region
          %s3585 = sand.u32 %s192, 1
          %s3586 = scalar_lea.sflag [#allocation3], %s3585
          %s3587 = sand.u32 %s192, 1
          %s3588 = scalar_lea.vmem [#allocation2], %s3587
          %3590 = dma.done %s3586, 16
        $region68: #{tpu_custom_call.1} parent=59 // pred_fallthru
          _
        // Predicated region
        $region69: #{tpu_custom_call.1} parent=59 // pred_check
          %p3591 = pneg %p233
        $region70: #{tpu_custom_call.1} parent=59 // pred_check_branch
          %3593 = sbr.rel (%p3591) target = $region72
        $region71: #{tpu_custom_call.1} parent=59 // pred_region
          %s3594 = sand.u32 %s218, 1
          %s3595 = scalar_lea.sflag [#allocation5], %s3594
          %s3596 = sand.u32 %s218, 1
          %s3597 = scalar_lea.vmem [#allocation4], %s3596
          %3599 = dma.done %s3595, 16
        $region72: #{tpu_custom_call.1} parent=59 // pred_fallthru
          _
      $region60: #{tpu_custom_call.1} parent=5 // pred_fallthru
        _
    $region6: #{tpu_custom_call.1} parent=1 // loop_footer
      %s25 = sadd.s32 1, %s21
    $region7: #{tpu_custom_call.1} parent=1 // loop_footer_branch
      %20 = sbr.rel target = $region3
    $region8: #{tpu_custom_call.1} parent=1 // loop_exit
      _
    %3600 = vsyncpa [#allocation3], 1
    %s3601 = scalar_lea.sflag [#allocation3], 1
    %3602 = vsyncpa %s3601, 1
    %3603 = vsyncpa [#allocation5], 1
    %s3604 = scalar_lea.sflag [#allocation5], 1
    %3605 = vsyncpa %s3604, 1

</llo_original>
